<compile_context>
chip_gen: v7x
topology: tpu7x:2x2x1
jax: 0.10.0
libtpu: 0.0.40
codegen_flags: <defaults>
</compile_context>

<pallas_src>
import functools
import math

import jax
import jax.numpy as jnp
from jax.experimental import pallas as pl
from jax.experimental.pallas import tpu as pltpu

RMS_EPS = 1e-6  # TODO(synk): SimpleRMSNorm definition not in source; eps assumed 1e-6.


# ----------------------------------------------------------------------------- helpers
def _erf_f32(z):
    # Abramowitz & Stegun 7.1.26 rational approximation (|err| < 1.5e-7): keeps
    # exact-GELU (PyTorch nn.GELU() default) semantics without relying on an erf
    # primitive lowering inside Mosaic.  Kept (vs. tanh-GELU) for parity with the
    # reference module; the extra VALU ops are negligible next to the matmuls here.
    a1, a2, a3, a4, a5 = 0.254829592, -0.284496736, 1.421413741, -1.453152027, 1.061405429
    p = 0.3275911
    az = jnp.abs(z)
    t = 1.0 / (1.0 + p * az)
    poly = ((((a5 * t + a4) * t + a3) * t + a2) * t + a1) * t
    y = 1.0 - poly * jnp.exp(-az * az)
    return jnp.where(z < 0.0, -y, y)


def _gelu_exact_f32(x):
    return 0.5 * x * (1.0 + _erf_f32(x * 0.7071067811865476))


def _rmsnorm_f32(x, w):
    ms = jnp.mean(x * x, axis=-1, keepdims=True)
    return x * jax.lax.rsqrt(ms + RMS_EPS) * w


# ----------------------------------------------------------------------------- kernel
def stack_kernel(x_ref, n1_ref, wA_ref, bA_ref, wo_ref, bo_ref,
                 n2_ref, wF_ref, bF_ref, w2_ref, b2_ref,
                 fnw_ref, hw_ref, hb_ref,
                 pred_ref, act_ref,
                 *, n_heads, batch, n_codebooks):
    """One grid step == one transformer layer; head fused into the last step."""
    l = pl.program_id(0)
    n_layers = pl.num_programs(0)

    @pl.when(l == 0)
    def _():
        act_ref[...] = x_ref[...]                      # activation becomes VMEM-resident
        pred_ref[...] = jnp.zeros_like(pred_ref)       # init resident output block

    x = act_ref[...]                                   # [R, D] f32, R = B*S
    R, D = x.shape
    H = n_heads
    hd = D // H
    B = batch
    S = R // B
    scale = 1.0 / math.sqrt(hd)

    # ---------------- attention sub-block: norm1 -> MHA -> FiLM1 -> +residual ----------
    xn = _rmsnorm_f32(x, n1_ref[0])
    xn_b = xn.astype(jnp.bfloat16)
    # fused [Q|K|V|FiLM_gamma|FiLM_beta] projection (one [R,D]x[D,5D] MXU matmul)
    proj = jnp.dot(xn_b, wA_ref[0], preferred_element_type=jnp.float32) + bA_ref[0]
    q = proj[:, 0 * D:1 * D] * scale
    k = proj[:, 1 * D:2 * D]
    v = proj[:, 2 * D:3 * D]
    gamma1 = proj[:, 3 * D:4 * D]
    beta1 = proj[:, 4 * D:5 * D]

    def to_heads(t2d):                                 # [S, D] -> [H, S, hd]
        return jnp.transpose(t2d.reshape(S, H, hd), (1, 0, 2))

    # Projections use the full [B*S] M dim; only the SxS attention core is split
    # per batch (static loop), with a head-batched einsum per batch element.
    # TODO(synk): for realistic S, replace with a flash-style KV-tiled online softmax
    # (and move the batch split onto a grid axis) to keep v7x's 64 MiB VMEM happy.
    ctx_rows = []
    for b in range(B):
        r0, r1 = b * S, (b + 1) * S
        qh = to_heads(q[r0:r1]).astype(jnp.bfloat16)
        kh = to_heads(k[r0:r1]).astype(jnp.bfloat16)
        vh = to_heads(v[r0:r1]).astype(jnp.bfloat16)
        sc = jnp.einsum("hqd,hkd->hqk", qh, kh, preferred_element_type=jnp.float32)
        sc = sc - jnp.max(sc, axis=-1, keepdims=True)
        p = jnp.exp(sc)
        # approx reciprocal (EUP slot); tiny deviation from exact softmax is
        # harmless for the argmax-only output of this model.
        p = p * pl.reciprocal(jnp.sum(p, axis=-1, keepdims=True), approx=True)
        ctx = jnp.einsum("hqk,hkd->hqd", p.astype(jnp.bfloat16), vh,
                         preferred_element_type=jnp.float32)
        ctx_rows.append(jnp.transpose(ctx, (1, 0, 2)).reshape(S, D))
    ctx_all = jnp.concatenate(ctx_rows, axis=0)        # [R, D]

    attn = jnp.dot(ctx_all.astype(jnp.bfloat16), wo_ref[0],
                   preferred_element_type=jnp.float32) + bo_ref[0]
    # TODO(synk): SimpleFiLM definition not in source; implemented as gamma(cond)*x+beta(cond).
    x = x + gamma1 * attn + beta1

    # ---------------- FFN sub-block: norm2 -> Linear/GELU/Linear -> FiLM2 -> +residual --
    xn2 = _rmsnorm_f32(x, n2_ref[0])
    xn2_b = xn2.astype(jnp.bfloat16)
    # fused [W1 | FiLM_gamma | FiLM_beta] projection (one [R,D]x[D,6D] MXU matmul)
    proj2 = jnp.dot(xn2_b, wF_ref[0], preferred_element_type=jnp.float32) + bF_ref[0]
    h = _gelu_exact_f32(proj2[:, :4 * D])              # exact GELU, f32 elementwise
    gamma2 = proj2[:, 4 * D:5 * D]
    beta2 = proj2[:, 5 * D:6 * D]
    ff = jnp.dot(h.astype(jnp.bfloat16), w2_ref[0],
                 preferred_element_type=jnp.float32) + b2_ref[0]
    x = x + gamma2 * ff + beta2

    act_ref[...] = x                                   # carry to next layer (stays in VMEM)

    # ---------------- output head (last layer only): norm -> logits -> argmax -----------
    @pl.when(l == n_layers - 1)
    def _():
        xn_f = _rmsnorm_f32(x, fnw_ref[...]).astype(jnp.bfloat16)
        # one matmul for ALL codebooks: [R, D] x [D, NCB*V]
        logits = jnp.dot(xn_f, hw_ref[...], preferred_element_type=jnp.float32) + hb_ref[...]
        V = logits.shape[-1] // n_codebooks
        cols = []
        for c in range(n_codebooks):                   # small static loop over segments
            lg = logits[:, c * V:(c + 1) * V]
            m = jnp.max(lg, axis=-1, keepdims=True)    # argmax comparison kept in f32
            iota = jax.lax.broadcasted_iota(jnp.int32, lg.shape, 1)
            cols.append(jnp.min(jnp.where(lg >= m, iota, V),
                                axis=-1, keepdims=True))        # first-max tie-break
        # TODO(synk): for large R, store predictions lane-dense as [NCB, R] instead of
        # [R, NCB]; at R=16 the 256-byte store layout is irrelevant and the dense
        # [R, NCB] block store is the proven-lowering path.
        pred_ref[...] = jnp.concatenate(cols, axis=1).astype(jnp.int32)


# ----------------------------------------------------------------------------- wrapper
def transformer_stack(x_rows, params, *, n_heads, batch, n_codebooks):
    R, D = x_rows.shape
    L = params["norm1_w"].shape[0]
    NCBV = params["head_w"].shape[1]

    # ---- VMEM budget computed from actual block sizes (review: no fixed 32 MiB) ----
    def nbytes(a, per_layer=False):
        n = math.prod(a.shape) * jnp.dtype(a.dtype).itemsize
        return n // a.shape[0] if per_layer else n

    layer_keys = ("norm1_w", "w_attn", "b_attn", "wo", "bo",
                  "norm2_w", "w_ffn", "b_ffn", "w2", "b2")
    const_keys = ("final_norm_w", "head_w", "head_b")
    block_bytes = (nbytes(x_rows) + R * n_codebooks * 4
                   + sum(nbytes(params[k], per_layer=True) for k in layer_keys)
                   + sum(nbytes(params[k]) for k in const_keys))
    # 2x for double-buffered pipeline blocks + resident activation scratch + temp headroom
    vmem_limit = int(min(100 << 20, 2 * block_bytes + R * D * 4 + (8 << 20)))

    kernel = functools.partial(stack_kernel, n_heads=n_heads, batch=batch,
                               n_codebooks=n_codebooks)

    return pl.pallas_call(
        kernel,
        out_shape=jax.ShapeDtypeStruct((R, n_codebooks), jnp.int32),
        grid=(L,),
        in_specs=[
            pl.BlockSpec((R, D), lambda l: (0, 0)),             # x (read at layer 0)
            pl.BlockSpec((1, 1, D), lambda l: (l, 0, 0)),       # norm1 weight
            pl.BlockSpec((1, D, 5 * D), lambda l: (l, 0, 0)),   # [Wq|Wk|Wv|FiLM1g|FiLM1b] bf16
            pl.BlockSpec((1, 1, 5 * D), lambda l: (l, 0, 0)),   # fused attn bias
            pl.BlockSpec((1, D, D), lambda l: (l, 0, 0)),       # Wo bf16
            pl.BlockSpec((1, 1, D), lambda l: (l, 0, 0)),       # bo
            pl.BlockSpec((1, 1, D), lambda l: (l, 0, 0)),       # norm2 weight
            pl.BlockSpec((1, D, 6 * D), lambda l: (l, 0, 0)),   # [W1|FiLM2g|FiLM2b] bf16
            pl.BlockSpec((1, 1, 6 * D), lambda l: (l, 0, 0)),   # fused ffn bias
            pl.BlockSpec((1, 4 * D, D), lambda l: (l, 0, 0)),   # W2 bf16
            pl.BlockSpec((1, 1, D), lambda l: (l, 0, 0)),       # b2
            pl.BlockSpec((1, D), lambda l: (0, 0)),             # final norm weight
            pl.BlockSpec((D, NCBV), lambda l: (0, 0)),          # head weight (all codebooks)
            pl.BlockSpec((1, NCBV), lambda l: (0, 0)),          # head bias
        ],
        out_specs=pl.BlockSpec((R, n_codebooks), lambda l: (0, 0)),
        scratch_shapes=[pltpu.VMEM((R, D), jnp.float32)],       # resident activation
        compiler_params=pltpu.CompilerParams(
            dimension_semantics=("arbitrary",),                 # layer axis is sequential
            vmem_limit_bytes=vmem_limit),
    )(x_rows, params["norm1_w"], params["w_attn"], params["b_attn"],
      params["wo"], params["bo"], params["norm2_w"], params["w_ffn"],
      params["b_ffn"], params["w2"], params["b2"],
      params["final_norm_w"], params["head_w"], params["head_b"])


# ----------------------------------------------------------------------------- model
def init_params(key, n_codebooks, vocab, d, n_layers):
    def nrm(k, shape, dtype=jnp.bfloat16, scale=0.05):
        return (scale * jax.random.normal(k, shape, jnp.float32)).astype(dtype)

    ks = iter(jax.random.split(key, 3 + 8 * n_layers))

    # TODO(synk): VerySimpleCodebookEmbedding not in source; implemented as summed
    # per-codebook nn.Embedding (standard VampNet scheme).
    emb = nrm(next(ks), (n_codebooks, vocab, d), jnp.float32)
    head_w = nrm(next(ks), (d, n_codebooks * vocab))                    # bf16, all codebooks
    head_b = nrm(next(ks), (1, n_codebooks * vocab), jnp.float32)

    w_attn, b_attn, wo, bo, w_ffn, b_ffn, w2, b2 = ([] for _ in range(8))
    for _ in range(n_layers):
        w_attn.append(nrm(next(ks), (d, 5 * d)))                        # [Wq|Wk|Wv|F1g|F1b]
        b_attn.append(nrm(next(ks), (1, 5 * d), jnp.float32))
        wo.append(nrm(next(ks), (d, d)))
        bo.append(nrm(next(ks), (1, d), jnp.float32))
        w_ffn.append(nrm(next(ks), (d, 6 * d)))                         # [W1|F2g|F2b]
        b_ffn.append(nrm(next(ks), (1, 6 * d), jnp.float32))
        w2.append(nrm(next(ks), (4 * d, d)))
        b2.append(nrm(next(ks), (1, d), jnp.float32))

    return dict(
        emb=emb,
        norm1_w=jnp.ones((n_layers, 1, d), jnp.float32),
        w_attn=jnp.stack(w_attn), b_attn=jnp.stack(b_attn),
        wo=jnp.stack(wo), bo=jnp.stack(bo),
        norm2_w=jnp.ones((n_layers, 1, d), jnp.float32),
        w_ffn=jnp.stack(w_ffn), b_ffn=jnp.stack(b_ffn),
        w2=jnp.stack(w2), b2=jnp.stack(b2),
        final_norm_w=jnp.ones((1, d), jnp.float32),
        head_w=head_w, head_b=head_b,
    )


def mini_vampnet_forward(params, codes, mask, *, n_heads):
    B, NCB, S = codes.shape
    D = params["final_norm_w"].shape[-1]

    # Codebook embedding: summed per-codebook gathers (plain-JAX glue).
    x = jnp.zeros((B, S, D), jnp.float32)
    for c in range(NCB):
        x = x + params["emb"][c][codes[:, c, :]]

    # Entire transformer stack + final norm + output head: ONE fused pallas_call.
    preds = transformer_stack(x.reshape(B * S, D), params,
                              n_heads=n_heads, batch=B, n_codebooks=NCB)   # [B*S, NCB] int32

    preds = jnp.transpose(preds.reshape(B, S, NCB), (0, 2, 1))             # [B, NCB, S]
    return jnp.where(mask.astype(bool), preds, codes)


# ----------------------------------------------------------------------------- main
if __name__ == "__main__":
    B, N_CODEBOOKS, SEQ = 2, 4, 8
    VOCAB, D_MODEL, N_HEADS, N_LAYERS = 256, 128, 4, 2

    key = jax.random.PRNGKey(0)
    k_par, k_codes, k_mask = jax.random.split(key, 3)

    params = init_params(k_par, N_CODEBOOKS, VOCAB, D_MODEL, N_LAYERS)
    codes = jax.random.randint(k_codes, (B, N_CODEBOOKS, SEQ), 0, VOCAB, jnp.int32)
    mask = jax.random.bernoulli(k_mask, 0.5, (B, N_CODEBOOKS, SEQ)).astype(jnp.int32)

    fwd = jax.jit(functools.partial(mini_vampnet_forward, n_heads=N_HEADS))
    out = jax.block_until_ready(fwd(params, codes, mask))

    assert out.shape == (B, N_CODEBOOKS, SEQ)
    assert out.dtype == jnp.int32
    # unmasked positions must pass codes through unchanged
    assert bool(jnp.all(jnp.where(mask == 0, out == codes, True)))
    print("KERNEL_OK")
</pallas_src>

<mosaic_0001>
module attributes {stable_mosaic.version = 11 : i64} {
  func.func @stack_kernel(%arg0: i32, %arg1: memref<16x128xf32, #tpu.memory_space<vmem>>, %arg2: memref<1x1x128xf32, #tpu.memory_space<vmem>>, %arg3: memref<1x128x640xbf16, #tpu.memory_space<vmem>>, %arg4: memref<1x1x640xf32, #tpu.memory_space<vmem>>, %arg5: memref<1x128x128xbf16, #tpu.memory_space<vmem>>, %arg6: memref<1x1x128xf32, #tpu.memory_space<vmem>>, %arg7: memref<1x1x128xf32, #tpu.memory_space<vmem>>, %arg8: memref<1x128x768xbf16, #tpu.memory_space<vmem>>, %arg9: memref<1x1x768xf32, #tpu.memory_space<vmem>>, %arg10: memref<1x512x128xbf16, #tpu.memory_space<vmem>>, %arg11: memref<1x1x128xf32, #tpu.memory_space<vmem>>, %arg12: memref<1x128xf32, #tpu.memory_space<vmem>>, %arg13: memref<128x1024xbf16, #tpu.memory_space<vmem>>, %arg14: memref<1x1024xf32, #tpu.memory_space<vmem>>, %arg15: memref<16x4xi32, #tpu.memory_space<vmem>>, %arg16: memref<16x128xf32, #tpu.memory_space<vmem>>) attributes {dimension_semantics = [#tpu.dimension_semantics<arbitrary>], iteration_bounds = array<i64: 2>, scalar_prefetch = 0 : i64, scratch_operands = 1 : i64, tpu.core_type = #tpu.core_type<tc>, window_params = [{pipeline_mode = #tpu.pipeline_mode<synchronous>, transform_indices = @transform_0, window_bounds = array<i64: 16, 128>}, {transform_indices = @transform_1, window_bounds = array<i64: 1, 1, 128>}, {transform_indices = @transform_2, window_bounds = array<i64: 1, 128, 640>}, {transform_indices = @transform_3, window_bounds = array<i64: 1, 1, 640>}, {transform_indices = @transform_4, window_bounds = array<i64: 1, 128, 128>}, {transform_indices = @transform_5, window_bounds = array<i64: 1, 1, 128>}, {transform_indices = @transform_6, window_bounds = array<i64: 1, 1, 128>}, {transform_indices = @transform_7, window_bounds = array<i64: 1, 128, 768>}, {transform_indices = @transform_8, window_bounds = array<i64: 1, 1, 768>}, {transform_indices = @transform_9, window_bounds = array<i64: 1, 512, 128>}, {transform_indices = @transform_10, window_bounds = array<i64: 1, 1, 128>}, {pipeline_mode = #tpu.pipeline_mode<synchronous>, transform_indices = @transform_11, window_bounds = array<i64: 1, 128>}, {pipeline_mode = #tpu.pipeline_mode<synchronous>, transform_indices = @transform_12, window_bounds = array<i64: 128, 1024>}, {pipeline_mode = #tpu.pipeline_mode<synchronous>, transform_indices = @transform_13, window_bounds = array<i64: 1, 1024>}, {pipeline_mode = #tpu.pipeline_mode<synchronous>, transform_indices = @transform_14, window_bounds = array<i64: 16, 4>}]} {
    %c0_i32 = arith.constant 0 : i32
    %0 = arith.cmpi eq, %arg0, %c0_i32 : i32
    %1 = arith.extui %0 : i1 to i32
    %c0_i32_0 = arith.constant 0 : i32
    %2 = arith.cmpi ne, %1, %c0_i32_0 : i32
    scf.if %2 {
      %c0_68 = arith.constant 0 : index
      %c0_69 = arith.constant 0 : index
      %179 = vector.load %arg1[%c0_68, %c0_69] : memref<16x128xf32, #tpu.memory_space<vmem>>, vector<16x128xf32>
      %c0_70 = arith.constant 0 : index
      %c0_71 = arith.constant 0 : index
      %180 = vector.load %arg16[%c0_70, %c0_71] : memref<16x128xf32, #tpu.memory_space<vmem>>, vector<16x128xf32>
      tpu.vector_store %arg16[%c0_70, %c0_71], %179 {strides = array<i32>} : memref<16x128xf32, #tpu.memory_space<vmem>>, vector<16x128xf32>,
      %c0_i32_72 = arith.constant 0 : i32
      %181 = vector.broadcast %c0_i32_72 : i32 to vector<16x4xi32>
      %c0_73 = arith.constant 0 : index
      %c0_74 = arith.constant 0 : index
      %182 = vector.load %arg15[%c0_73, %c0_74] : memref<16x4xi32, #tpu.memory_space<vmem>>, vector<16x4xi32>
      tpu.vector_store %arg15[%c0_73, %c0_74], %181 {strides = array<i32>} : memref<16x4xi32, #tpu.memory_space<vmem>>, vector<16x4xi32>,
    } else {
    }
    %c0 = arith.constant 0 : index
    %c0_1 = arith.constant 0 : index
    %3 = vector.load %arg16[%c0, %c0_1] : memref<16x128xf32, #tpu.memory_space<vmem>>, vector<16x128xf32>
    %c0_2 = arith.constant 0 : index
    %c0_3 = arith.constant 0 : index
    %c0_4 = arith.constant 0 : index
    %4 = vector.load %arg2[%c0_2, %c0_3, %c0_4] : memref<1x1x128xf32, #tpu.memory_space<vmem>>, vector<1x1x128xf32>
    %5 = vector.shape_cast %4 : vector<1x1x128xf32> to vector<1x128xf32>
    %6 = arith.mulf %3, %3 : vector<16x128xf32>
    %cst = arith.constant dense<0.000000e+00> : vector<16xf32>
    %7 = vector.multi_reduction <add>, %6, %cst [1] : vector<16x128xf32> to vector<16xf32>
    %8 = vector.shape_cast %7 : vector<16xf32> to vector<16x1xf32>
    %cst_5 = arith.constant 1.280000e+02 : f32
    %9 = vector.broadcast %cst_5 : f32 to vector<16x1xf32>
    %10 = arith.divf %8, %9 : vector<16x1xf32>
    %cst_6 = arith.constant 9.99999997E-7 : f32
    %11 = vector.broadcast %cst_6 : f32 to vector<16x1xf32>
    %12 = arith.addf %10, %11 : vector<16x1xf32>
    %13 = math.rsqrt %12 : vector<16x1xf32>
    %14 = vector.broadcast %13 : vector<16x1xf32> to vector<16x128xf32>
    %15 = arith.mulf %3, %14 : vector<16x128xf32>
    %16 = vector.broadcast %5 : vector<1x128xf32> to vector<16x128xf32>
    %17 = arith.mulf %15, %16 : vector<16x128xf32>
    %18 = arith.truncf %17 : vector<16x128xf32> to vector<16x128xbf16>
    %c0_7 = arith.constant 0 : index
    %c0_8 = arith.constant 0 : index
    %c0_9 = arith.constant 0 : index
    %19 = vector.load %arg3[%c0_7, %c0_8, %c0_9] : memref<1x128x640xbf16, #tpu.memory_space<vmem>>, vector<1x128x640xbf16>
    %20 = vector.shape_cast %19 : vector<1x128x640xbf16> to vector<128x640xbf16>
    %cst_10 = arith.constant dense<0.000000e+00> : vector<16x640xf32>
    %21 = tpu.matmul %18, %20, %cst_10 {dimension_numbers = #tpu.dot_dimension_numbers<[1], [0], [0], [1], [0, 0, 1, 1], [], []>} : vector<16x128xbf16>, vector<128x640xbf16>, vector<16x640xf32> -> vector<16x640xf32>
    %c0_11 = arith.constant 0 : index
    %c0_12 = arith.constant 0 : index
    %c0_13 = arith.constant 0 : index
    %22 = vector.load %arg4[%c0_11, %c0_12, %c0_13] : memref<1x1x640xf32, #tpu.memory_space<vmem>>, vector<1x1x640xf32>
    %23 = vector.shape_cast %22 : vector<1x1x640xf32> to vector<1x640xf32>
    %24 = vector.broadcast %23 : vector<1x640xf32> to vector<16x640xf32>
    %25 = arith.addf %21, %24 : vector<16x640xf32>
    %26 = vector.extract_strided_slice %25 {offsets = [0, 0], sizes = [16, 128], strides = [1, 1]} : vector<16x640xf32> to vector<16x128xf32>
    %cst_14 = arith.constant 0.176776692 : f32
    %27 = vector.broadcast %cst_14 : f32 to vector<16x128xf32>
    %28 = arith.mulf %26, %27 : vector<16x128xf32>
    %29 = vector.extract_strided_slice %25 {offsets = [0, 128], sizes = [16, 128], strides = [1, 1]} : vector<16x640xf32> to vector<16x128xf32>
    %30 = vector.extract_strided_slice %25 {offsets = [0, 256], sizes = [16, 128], strides = [1, 1]} : vector<16x640xf32> to vector<16x128xf32>
    %31 = vector.extract_strided_slice %25 {offsets = [0, 384], sizes = [16, 128], strides = [1, 1]} : vector<16x640xf32> to vector<16x128xf32>
    %32 = vector.extract_strided_slice %25 {offsets = [0, 512], sizes = [16, 128], strides = [1, 1]} : vector<16x640xf32> to vector<16x128xf32>
    %33 = vector.extract_strided_slice %28 {offsets = [0, 0], sizes = [8, 128], strides = [1, 1]} : vector<16x128xf32> to vector<8x128xf32>
    %34 = vector.shape_cast %33 : vector<8x128xf32> to vector<8x4x32xf32>
    %35 = tpu.transpose %34, [1, 0, 2] : vector<8x4x32xf32> -> vector<4x8x32xf32>
    %36 = arith.truncf %35 : vector<4x8x32xf32> to vector<4x8x32xbf16>
    %37 = vector.extract_strided_slice %29 {offsets = [0, 0], sizes = [8, 128], strides = [1, 1]} : vector<16x128xf32> to vector<8x128xf32>
    %38 = vector.shape_cast %37 : vector<8x128xf32> to vector<8x4x32xf32>
    %39 = tpu.transpose %38, [1, 0, 2] : vector<8x4x32xf32> -> vector<4x8x32xf32>
    %40 = arith.truncf %39 : vector<4x8x32xf32> to vector<4x8x32xbf16>
    %41 = vector.extract_strided_slice %30 {offsets = [0, 0], sizes = [8, 128], strides = [1, 1]} : vector<16x128xf32> to vector<8x128xf32>
    %42 = vector.shape_cast %41 : vector<8x128xf32> to vector<8x4x32xf32>
    %43 = tpu.transpose %42, [1, 0, 2] : vector<8x4x32xf32> -> vector<4x8x32xf32>
    %44 = arith.truncf %43 : vector<4x8x32xf32> to vector<4x8x32xbf16>
    "tpu.trace_start"() <{level = 10 : i32, message = "hqd,hkd->hqk"}> : () -> ()
    %cst_15 = arith.constant dense<0.000000e+00> : vector<4x8x8xf32>
    %45 = tpu.matmul %36, %40, %cst_15 {dimension_numbers = #tpu.dot_dimension_numbers<[2], [2], [1], [1], [0, 0, 0, 1, 1, 1], [0], [0]>} : vector<4x8x32xbf16>, vector<4x8x32xbf16>, vector<4x8x8xf32> -> vector<4x8x8xf32>
    "tpu.trace_stop"() : () -> ()
    %cst_16 = arith.constant dense<0xFF800000> : vector<4x8xf32>
    %46 = vector.multi_reduction <maximumf>, %45, %cst_16 [2] : vector<4x8x8xf32> to vector<4x8xf32>
    %47 = vector.shape_cast %46 : vector<4x8xf32> to vector<4x8x1xf32>
    %48 = vector.broadcast %47 : vector<4x8x1xf32> to vector<4x8x8xf32>
    %49 = arith.subf %45, %48 : vector<4x8x8xf32>
    %50 = math.exp %49 : vector<4x8x8xf32>
    %cst_17 = arith.constant dense<0.000000e+00> : vector<4x8xf32>
    %51 = vector.multi_reduction <add>, %50, %cst_17 [2] : vector<4x8x8xf32> to vector<4x8xf32>
    %52 = vector.shape_cast %51 : vector<4x8xf32> to vector<4x8x1xf32>
    %53 = tpu.reciprocal %52 {approx = true} : vector<4x8x1xf32> -> vector<4x8x1xf32>
    %54 = vector.broadcast %53 : vector<4x8x1xf32> to vector<4x8x8xf32>
    %55 = arith.mulf %50, %54 : vector<4x8x8xf32>
    %56 = arith.truncf %55 : vector<4x8x8xf32> to vector<4x8x8xbf16>
    "tpu.trace_start"() <{level = 10 : i32, message = "hqk,hkd->hqd"}> : () -> ()
    %cst_18 = arith.constant dense<0.000000e+00> : vector<4x8x32xf32>
    %57 = tpu.matmul %56, %44, %cst_18 {dimension_numbers = #tpu.dot_dimension_numbers<[2], [1], [1], [2], [0, 0, 0, 1, 1, 2], [0], [0]>} : vector<4x8x8xbf16>, vector<4x8x32xbf16>, vector<4x8x32xf32> -> vector<4x8x32xf32>
    "tpu.trace_stop"() : () -> ()
    %58 = tpu.transpose %57, [1, 0, 2] : vector<4x8x32xf32> -> vector<8x4x32xf32>
    %59 = vector.shape_cast %58 : vector<8x4x32xf32> to vector<8x128xf32>
    %60 = vector.extract_strided_slice %28 {offsets = [8, 0], sizes = [8, 128], strides = [1, 1]} : vector<16x128xf32> to vector<8x128xf32>
    %61 = vector.shape_cast %60 : vector<8x128xf32> to vector<8x4x32xf32>
    %62 = tpu.transpose %61, [1, 0, 2] : vector<8x4x32xf32> -> vector<4x8x32xf32>
    %63 = arith.truncf %62 : vector<4x8x32xf32> to vector<4x8x32xbf16>
    %64 = vector.extract_strided_slice %29 {offsets = [8, 0], sizes = [8, 128], strides = [1, 1]} : vector<16x128xf32> to vector<8x128xf32>
    %65 = vector.shape_cast %64 : vector<8x128xf32> to vector<8x4x32xf32>
    %66 = tpu.transpose %65, [1, 0, 2] : vector<8x4x32xf32> -> vector<4x8x32xf32>
    %67 = arith.truncf %66 : vector<4x8x32xf32> to vector<4x8x32xbf16>
    %68 = vector.extract_strided_slice %30 {offsets = [8, 0], sizes = [8, 128], strides = [1, 1]} : vector<16x128xf32> to vector<8x128xf32>
    %69 = vector.shape_cast %68 : vector<8x128xf32> to vector<8x4x32xf32>
    %70 = tpu.transpose %69, [1, 0, 2] : vector<8x4x32xf32> -> vector<4x8x32xf32>
    %71 = arith.truncf %70 : vector<4x8x32xf32> to vector<4x8x32xbf16>
    "tpu.trace_start"() <{level = 10 : i32, message = "hqd,hkd->hqk"}> : () -> ()
    %cst_19 = arith.constant dense<0.000000e+00> : vector<4x8x8xf32>
    %72 = tpu.matmul %63, %67, %cst_19 {dimension_numbers = #tpu.dot_dimension_numbers<[2], [2], [1], [1], [0, 0, 0, 1, 1, 1], [0], [0]>} : vector<4x8x32xbf16>, vector<4x8x32xbf16>, vector<4x8x8xf32> -> vector<4x8x8xf32>
    "tpu.trace_stop"() : () -> ()
    %cst_20 = arith.constant dense<0xFF800000> : vector<4x8xf32>
    %73 = vector.multi_reduction <maximumf>, %72, %cst_20 [2] : vector<4x8x8xf32> to vector<4x8xf32>
    %74 = vector.shape_cast %73 : vector<4x8xf32> to vector<4x8x1xf32>
    %75 = vector.broadcast %74 : vector<4x8x1xf32> to vector<4x8x8xf32>
    %76 = arith.subf %72, %75 : vector<4x8x8xf32>
    %77 = math.exp %76 : vector<4x8x8xf32>
    %cst_21 = arith.constant dense<0.000000e+00> : vector<4x8xf32>
    %78 = vector.multi_reduction <add>, %77, %cst_21 [2] : vector<4x8x8xf32> to vector<4x8xf32>
    %79 = vector.shape_cast %78 : vector<4x8xf32> to vector<4x8x1xf32>
    %80 = tpu.reciprocal %79 {approx = true} : vector<4x8x1xf32> -> vector<4x8x1xf32>
    %81 = vector.broadcast %80 : vector<4x8x1xf32> to vector<4x8x8xf32>
    %82 = arith.mulf %77, %81 : vector<4x8x8xf32>
    %83 = arith.truncf %82 : vector<4x8x8xf32> to vector<4x8x8xbf16>
    "tpu.trace_start"() <{level = 10 : i32, message = "hqk,hkd->hqd"}> : () -> ()
    %cst_22 = arith.constant dense<0.000000e+00> : vector<4x8x32xf32>
    %84 = tpu.matmul %83, %71, %cst_22 {dimension_numbers = #tpu.dot_dimension_numbers<[2], [1], [1], [2], [0, 0, 0, 1, 1, 2], [0], [0]>} : vector<4x8x8xbf16>, vector<4x8x32xbf16>, vector<4x8x32xf32> -> vector<4x8x32xf32>
    "tpu.trace_stop"() : () -> ()
    %85 = tpu.transpose %84, [1, 0, 2] : vector<4x8x32xf32> -> vector<8x4x32xf32>
    %86 = vector.shape_cast %85 : vector<8x4x32xf32> to vector<8x128xf32>
    %87 = tpu.concatenate %59, %86 in 0 : vector<8x128xf32>, vector<8x128xf32> -> vector<16x128xf32>
    %88 = arith.truncf %87 : vector<16x128xf32> to vector<16x128xbf16>
    %c0_23 = arith.constant 0 : index
    %c0_24 = arith.constant 0 : index
    %c0_25 = arith.constant 0 : index
    %89 = vector.load %arg5[%c0_23, %c0_24, %c0_25] : memref<1x128x128xbf16, #tpu.memory_space<vmem>>, vector<1x128x128xbf16>
    %90 = vector.shape_cast %89 : vector<1x128x128xbf16> to vector<128x128xbf16>
    %cst_26 = arith.constant dense<0.000000e+00> : vector<16x128xf32>
    %91 = tpu.matmul %88, %90, %cst_26 {dimension_numbers = #tpu.dot_dimension_numbers<[1], [0], [0], [1], [0, 0, 1, 1], [], []>} : vector<16x128xbf16>, vector<128x128xbf16>, vector<16x128xf32> -> vector<16x128xf32>
    %c0_27 = arith.constant 0 : index
    %c0_28 = arith.constant 0 : index
    %c0_29 = arith.constant 0 : index
    %92 = vector.load %arg6[%c0_27, %c0_28, %c0_29] : memref<1x1x128xf32, #tpu.memory_space<vmem>>, vector<1x1x128xf32>
    %93 = vector.shape_cast %92 : vector<1x1x128xf32> to vector<1x128xf32>
    %94 = vector.broadcast %93 : vector<1x128xf32> to vector<16x128xf32>
    %95 = arith.addf %91, %94 : vector<16x128xf32>
    %96 = arith.mulf %31, %95 : vector<16x128xf32>
    %97 = arith.addf %3, %96 : vector<16x128xf32>
    %98 = arith.addf %97, %32 : vector<16x128xf32>
    %c0_30 = arith.constant 0 : index
    %c0_31 = arith.constant 0 : index
    %c0_32 = arith.constant 0 : index
    %99 = vector.load %arg7[%c0_30, %c0_31, %c0_32] : memref<1x1x128xf32, #tpu.memory_space<vmem>>, vector<1x1x128xf32>
    %100 = vector.shape_cast %99 : vector<1x1x128xf32> to vector<1x128xf32>
    %101 = arith.mulf %98, %98 : vector<16x128xf32>
    %cst_33 = arith.constant dense<0.000000e+00> : vector<16xf32>
    %102 = vector.multi_reduction <add>, %101, %cst_33 [1] : vector<16x128xf32> to vector<16xf32>
    %103 = vector.shape_cast %102 : vector<16xf32> to vector<16x1xf32>
    %cst_34 = arith.constant 1.280000e+02 : f32
    %104 = vector.broadcast %cst_34 : f32 to vector<16x1xf32>
    %105 = arith.divf %103, %104 : vector<16x1xf32>
    %cst_35 = arith.constant 9.99999997E-7 : f32
    %106 = vector.broadcast %cst_35 : f32 to vector<16x1xf32>
    %107 = arith.addf %105, %106 : vector<16x1xf32>
    %108 = math.rsqrt %107 : vector<16x1xf32>
    %109 = vector.broadcast %108 : vector<16x1xf32> to vector<16x128xf32>
    %110 = arith.mulf %98, %109 : vector<16x128xf32>
    %111 = vector.broadcast %100 : vector<1x128xf32> to vector<16x128xf32>
    %112 = arith.mulf %110, %111 : vector<16x128xf32>
    %113 = arith.truncf %112 : vector<16x128xf32> to vector<16x128xbf16>
    %c0_36 = arith.constant 0 : index
    %c0_37 = arith.constant 0 : index
    %c0_38 = arith.constant 0 : index
    %114 = vector.load %arg8[%c0_36, %c0_37, %c0_38] : memref<1x128x768xbf16, #tpu.memory_space<vmem>>, vector<1x128x768xbf16>
    %115 = vector.shape_cast %114 : vector<1x128x768xbf16> to vector<128x768xbf16>
    %cst_39 = arith.constant dense<0.000000e+00> : vector<16x768xf32>
    %116 = tpu.matmul %113, %115, %cst_39 {dimension_numbers = #tpu.dot_dimension_numbers<[1], [0], [0], [1], [0, 0, 1, 1], [], []>} : vector<16x128xbf16>, vector<128x768xbf16>, vector<16x768xf32> -> vector<16x768xf32>
    %c0_40 = arith.constant 0 : index
    %c0_41 = arith.constant 0 : index
    %c0_42 = arith.constant 0 : index
    %117 = vector.load %arg9[%c0_40, %c0_41, %c0_42] : memref<1x1x768xf32, #tpu.memory_space<vmem>>, vector<1x1x768xf32>
    %118 = vector.shape_cast %117 : vector<1x1x768xf32> to vector<1x768xf32>
    %119 = vector.broadcast %118 : vector<1x768xf32> to vector<16x768xf32>
    %120 = arith.addf %116, %119 : vector<16x768xf32>
    %121 = vector.extract_strided_slice %120 {offsets = [0, 0], sizes = [16, 512], strides = [1, 1]} : vector<16x768xf32> to vector<16x512xf32>
    %cst_43 = arith.constant 5.000000e-01 : f32
    %122 = vector.broadcast %cst_43 : f32 to vector<16x512xf32>
    %123 = arith.mulf %122, %121 : vector<16x512xf32>
    %cst_44 = arith.constant 0.707106769 : f32
    %124 = vector.broadcast %cst_44 : f32 to vector<16x512xf32>
    %125 = arith.mulf %121, %124 : vector<16x512xf32>
    %126 = math.absf %125 : vector<16x512xf32>
    %cst_45 = arith.constant 0.327591091 : f32
    %127 = vector.broadcast %cst_45 : f32 to vector<16x512xf32>
    %128 = arith.mulf %127, %126 : vector<16x512xf32>
    %cst_46 = arith.constant 1.000000e+00 : f32
    %129 = vector.broadcast %cst_46 : f32 to vector<16x512xf32>
    %130 = arith.addf %129, %128 : vector<16x512xf32>
    %cst_47 = arith.constant 1.000000e+00 : f32
    %131 = vector.broadcast %cst_47 : f32 to vector<16x512xf32>
    %132 = arith.divf %131, %130 : vector<16x512xf32>
    %cst_48 = arith.constant 1.06140542 : f32
    %133 = vector.broadcast %cst_48 : f32 to vector<16x512xf32>
    %134 = arith.mulf %133, %132 : vector<16x512xf32>
    %cst_49 = arith.constant -1.45315206 : f32
    %135 = vector.broadcast %cst_49 : f32 to vector<16x512xf32>
    %136 = arith.addf %134, %135 : vector<16x512xf32>
    %137 = arith.mulf %136, %132 : vector<16x512xf32>
    %cst_50 = arith.constant 1.42141378 : f32
    %138 = vector.broadcast %cst_50 : f32 to vector<16x512xf32>
    %139 = arith.addf %137, %138 : vector<16x512xf32>
    %140 = arith.mulf %139, %132 : vector<16x512xf32>
    %cst_51 = arith.constant -0.284496725 : f32
    %141 = vector.broadcast %cst_51 : f32 to vector<16x512xf32>
    %142 = arith.addf %140, %141 : vector<16x512xf32>
    %143 = arith.mulf %142, %132 : vector<16x512xf32>
    %cst_52 = arith.constant 0.254829586 : f32
    %144 = vector.broadcast %cst_52 : f32 to vector<16x512xf32>
    %145 = arith.addf %143, %144 : vector<16x512xf32>
    %146 = arith.mulf %145, %132 : vector<16x512xf32>
    %cst_53 = arith.constant 0.000000e+00 : f32
    %147 = vector.broadcast %cst_53 : f32 to vector<16x512xf32>
    %148 = arith.subf %147, %126 : vector<16x512xf32>
    %149 = arith.mulf %148, %126 : vector<16x512xf32>
    %150 = math.exp %149 : vector<16x512xf32>
    %151 = arith.mulf %146, %150 : vector<16x512xf32>
    %cst_54 = arith.constant 1.000000e+00 : f32
    %152 = vector.broadcast %cst_54 : f32 to vector<16x512xf32>
    %153 = arith.subf %152, %151 : vector<16x512xf32>
    %cst_55 = arith.constant 0.000000e+00 : f32
    %154 = vector.broadcast %cst_55 : f32 to vector<16x512xf32>
    %155 = arith.cmpf olt, %125, %154 : vector<16x512xf32>
    %cst_56 = arith.constant 0.000000e+00 : f32
    %156 = vector.broadcast %cst_56 : f32 to vector<16x512xf32>
    %157 = arith.subf %156, %153 : vector<16x512xf32>
    %158 = arith.select %155, %157, %153 : vector<16x512xi1>, vector<16x512xf32>
    %cst_57 = arith.constant 1.000000e+00 : f32
    %159 = vector.broadcast %cst_57 : f32 to vector<16x512xf32>
    %160 = arith.addf %159, %158 : vector<16x512xf32>
    %161 = arith.mulf %123, %160 : vector<16x512xf32>
    %162 = vector.extract_strided_slice %120 {offsets = [0, 512], sizes = [16, 128], strides = [1, 1]} : vector<16x768xf32> to vector<16x128xf32>
    %163 = vector.extract_strided_slice %120 {offsets = [0, 640], sizes = [16, 128], strides = [1, 1]} : vector<16x768xf32> to vector<16x128xf32>
    %164 = arith.truncf %161 : vector<16x512xf32> to vector<16x512xbf16>
    %c0_58 = arith.constant 0 : index
    %c0_59 = arith.constant 0 : index
    %c0_60 = arith.constant 0 : index
    %165 = vector.load %arg10[%c0_58, %c0_59, %c0_60] : memref<1x512x128xbf16, #tpu.memory_space<vmem>>, vector<1x512x128xbf16>
    %166 = vector.shape_cast %165 : vector<1x512x128xbf16> to vector<512x128xbf16>
    %cst_61 = arith.constant dense<0.000000e+00> : vector<16x128xf32>
    %167 = tpu.matmul %164, %166, %cst_61 {dimension_numbers = #tpu.dot_dimension_numbers<[1], [0], [0], [1], [0, 0, 1, 1], [], []>} : vector<16x512xbf16>, vector<512x128xbf16>, vector<16x128xf32> -> vector<16x128xf32>
    %c0_62 = arith.constant 0 : index
    %c0_63 = arith.constant 0 : index
    %c0_64 = arith.constant 0 : index
    %168 = vector.load %arg11[%c0_62, %c0_63, %c0_64] : memref<1x1x128xf32, #tpu.memory_space<vmem>>, vector<1x1x128xf32>
    %169 = vector.shape_cast %168 : vector<1x1x128xf32> to vector<1x128xf32>
    %170 = vector.broadcast %169 : vector<1x128xf32> to vector<16x128xf32>
    %171 = arith.addf %167, %170 : vector<16x128xf32>
    %172 = arith.mulf %162, %171 : vector<16x128xf32>
    %173 = arith.addf %98, %172 : vector<16x128xf32>
    %174 = arith.addf %173, %163 : vector<16x128xf32>
    %c0_65 = arith.constant 0 : index
    %c0_66 = arith.constant 0 : index
    %175 = vector.load %arg16[%c0_65, %c0_66] : memref<16x128xf32, #tpu.memory_space<vmem>>, vector<16x128xf32>
    tpu.vector_store %arg16[%c0_65, %c0_66], %174 {strides = array<i32>} : memref<16x128xf32, #tpu.memory_space<vmem>>, vector<16x128xf32>,
    %c1_i32 = arith.constant 1 : i32
    %176 = arith.cmpi eq, %arg0, %c1_i32 : i32
    %177 = arith.extui %176 : i1 to i32
    %c0_i32_67 = arith.constant 0 : i32
    %178 = arith.cmpi ne, %177, %c0_i32_67 : i32
    scf.if %178 {
      %c0_68 = arith.constant 0 : index
      %c0_69 = arith.constant 0 : index
      %179 = vector.load %arg12[%c0_68, %c0_69] : memref<1x128xf32, #tpu.memory_space<vmem>>, vector<1x128xf32>
      %180 = arith.mulf %174, %174 : vector<16x128xf32>
      %cst_70 = arith.constant dense<0.000000e+00> : vector<16xf32>
      %181 = vector.multi_reduction <add>, %180, %cst_70 [1] : vector<16x128xf32> to vector<16xf32>
      %182 = vector.shape_cast %181 : vector<16xf32> to vector<16x1xf32>
      %cst_71 = arith.constant 1.280000e+02 : f32
      %183 = vector.broadcast %cst_71 : f32 to vector<16x1xf32>
      %184 = arith.divf %182, %183 : vector<16x1xf32>
      %cst_72 = arith.constant 9.99999997E-7 : f32
      %185 = vector.broadcast %cst_72 : f32 to vector<16x1xf32>
      %186 = arith.addf %184, %185 : vector<16x1xf32>
      %187 = math.rsqrt %186 : vector<16x1xf32>
      %188 = vector.broadcast %187 : vector<16x1xf32> to vector<16x128xf32>
      %189 = arith.mulf %174, %188 : vector<16x128xf32>
      %190 = vector.broadcast %179 : vector<1x128xf32> to vector<16x128xf32>
      %191 = arith.mulf %189, %190 : vector<16x128xf32>
      %192 = arith.truncf %191 : vector<16x128xf32> to vector<16x128xbf16>
      %c0_73 = arith.constant 0 : index
      %c0_74 = arith.constant 0 : index
      %193 = vector.load %arg13[%c0_73, %c0_74] : memref<128x1024xbf16, #tpu.memory_space<vmem>>, vector<128x1024xbf16>
      %cst_75 = arith.constant dense<0.000000e+00> : vector<16x1024xf32>
      %194 = tpu.matmul %192, %193, %cst_75 {dimension_numbers = #tpu.dot_dimension_numbers<[1], [0], [0], [1], [0, 0, 1, 1], [], []>} : vector<16x128xbf16>, vector<128x1024xbf16>, vector<16x1024xf32> -> vector<16x1024xf32>
      %c0_76 = arith.constant 0 : index
      %c0_77 = arith.constant 0 : index
      %195 = vector.load %arg14[%c0_76, %c0_77] : memref<1x1024xf32, #tpu.memory_space<vmem>>, vector<1x1024xf32>
      %196 = vector.broadcast %195 : vector<1x1024xf32> to vector<16x1024xf32>
      %197 = arith.addf %194, %196 : vector<16x1024xf32>
      %198 = vector.extract_strided_slice %197 {offsets = [0, 0], sizes = [16, 256], strides = [1, 1]} : vector<16x1024xf32> to vector<16x256xf32>
      %cst_78 = arith.constant dense<0xFF800000> : vector<16xf32>
      %199 = vector.multi_reduction <maximumf>, %198, %cst_78 [1] : vector<16x256xf32> to vector<16xf32>
      %200 = vector.shape_cast %199 : vector<16xf32> to vector<16x1xf32>
      %201 = tpu.iota {dimensions = array<i32: 1>} : vector<16x256xi32>
      %202 = vector.broadcast %200 : vector<16x1xf32> to vector<16x256xf32>
      %203 = arith.cmpf oge, %198, %202 : vector<16x256xf32>
      %c256_i32 = arith.constant 256 : i32
      %204 = vector.broadcast %c256_i32 : i32 to vector<16x256xi32>
      %205 = arith.select %203, %201, %204 : vector<16x256xi1>, vector<16x256xi32>
      %cst_79 = arith.constant dense<2147483647> : vector<16xi32>
      %206 = vector.multi_reduction <minsi>, %205, %cst_79 [1] : vector<16x256xi32> to vector<16xi32>
      %207 = vector.shape_cast %206 : vector<16xi32> to vector<16x1xi32>
      %208 = vector.extract_strided_slice %197 {offsets = [0, 256], sizes = [16, 256], strides = [1, 1]} : vector<16x1024xf32> to vector<16x256xf32>
      %cst_80 = arith.constant dense<0xFF800000> : vector<16xf32>
      %209 = vector.multi_reduction <maximumf>, %208, %cst_80 [1] : vector<16x256xf32> to vector<16xf32>
      %210 = vector.shape_cast %209 : vector<16xf32> to vector<16x1xf32>
      %211 = tpu.iota {dimensions = array<i32: 1>} : vector<16x256xi32>
      %212 = vector.broadcast %210 : vector<16x1xf32> to vector<16x256xf32>
      %213 = arith.cmpf oge, %208, %212 : vector<16x256xf32>
      %c256_i32_81 = arith.constant 256 : i32
      %214 = vector.broadcast %c256_i32_81 : i32 to vector<16x256xi32>
      %215 = arith.select %213, %211, %214 : vector<16x256xi1>, vector<16x256xi32>
      %cst_82 = arith.constant dense<2147483647> : vector<16xi32>
      %216 = vector.multi_reduction <minsi>, %215, %cst_82 [1] : vector<16x256xi32> to vector<16xi32>
      %217 = vector.shape_cast %216 : vector<16xi32> to vector<16x1xi32>
      %218 = vector.extract_strided_slice %197 {offsets = [0, 512], sizes = [16, 256], strides = [1, 1]} : vector<16x1024xf32> to vector<16x256xf32>
      %cst_83 = arith.constant dense<0xFF800000> : vector<16xf32>
      %219 = vector.multi_reduction <maximumf>, %218, %cst_83 [1] : vector<16x256xf32> to vector<16xf32>
      %220 = vector.shape_cast %219 : vector<16xf32> to vector<16x1xf32>
      %221 = tpu.iota {dimensions = array<i32: 1>} : vector<16x256xi32>
      %222 = vector.broadcast %220 : vector<16x1xf32> to vector<16x256xf32>
      %223 = arith.cmpf oge, %218, %222 : vector<16x256xf32>
      %c256_i32_84 = arith.constant 256 : i32
      %224 = vector.broadcast %c256_i32_84 : i32 to vector<16x256xi32>
      %225 = arith.select %223, %221, %224 : vector<16x256xi1>, vector<16x256xi32>
      %cst_85 = arith.constant dense<2147483647> : vector<16xi32>
      %226 = vector.multi_reduction <minsi>, %225, %cst_85 [1] : vector<16x256xi32> to vector<16xi32>
      %227 = vector.shape_cast %226 : vector<16xi32> to vector<16x1xi32>
      %228 = vector.extract_strided_slice %197 {offsets = [0, 768], sizes = [16, 256], strides = [1, 1]} : vector<16x1024xf32> to vector<16x256xf32>
      %cst_86 = arith.constant dense<0xFF800000> : vector<16xf32>
      %229 = vector.multi_reduction <maximumf>, %228, %cst_86 [1] : vector<16x256xf32> to vector<16xf32>
      %230 = vector.shape_cast %229 : vector<16xf32> to vector<16x1xf32>
      %231 = tpu.iota {dimensions = array<i32: 1>} : vector<16x256xi32>
      %232 = vector.broadcast %230 : vector<16x1xf32> to vector<16x256xf32>
      %233 = arith.cmpf oge, %228, %232 : vector<16x256xf32>
      %c256_i32_87 = arith.constant 256 : i32
      %234 = vector.broadcast %c256_i32_87 : i32 to vector<16x256xi32>
      %235 = arith.select %233, %231, %234 : vector<16x256xi1>, vector<16x256xi32>
      %cst_88 = arith.constant dense<2147483647> : vector<16xi32>
      %236 = vector.multi_reduction <minsi>, %235, %cst_88 [1] : vector<16x256xi32> to vector<16xi32>
      %237 = vector.shape_cast %236 : vector<16xi32> to vector<16x1xi32>
      %238 = tpu.concatenate %207, %217, %227, %237 in 1 : vector<16x1xi32>, vector<16x1xi32>, vector<16x1xi32>, vector<16x1xi32> -> vector<16x4xi32>
      %c0_89 = arith.constant 0 : index
      %c0_90 = arith.constant 0 : index
      %239 = vector.load %arg15[%c0_89, %c0_90] : memref<16x4xi32, #tpu.memory_space<vmem>>, vector<16x4xi32>
      tpu.vector_store %arg15[%c0_89, %c0_90], %238 {strides = array<i32>} : memref<16x4xi32, #tpu.memory_space<vmem>>, vector<16x4xi32>,
    } else {
    }
    return
  }
  func.func @transform_0(%arg0: i32) -> (i32, i32) {
    %c0_i32 = arith.constant 0 : i32
    %c0_i32_0 = arith.constant 0 : i32
    %c0_i32_1 = arith.constant 0 : i32
    return %c0_i32, %c0_i32_0 : i32, i32
  }
  func.func @transform_1(%arg0: i32) -> (i32, i32, i32) {
    %c0_i32 = arith.constant 0 : i32
    %c0_i32_0 = arith.constant 0 : i32
    %c0_i32_1 = arith.constant 0 : i32
    return %arg0, %c0_i32, %c0_i32_0 : i32, i32, i32
  }
  func.func @transform_2(%arg0: i32) -> (i32, i32, i32) {
    %c0_i32 = arith.constant 0 : i32
    %c0_i32_0 = arith.constant 0 : i32
    %c0_i32_1 = arith.constant 0 : i32
    return %arg0, %c0_i32, %c0_i32_0 : i32, i32, i32
  }
  func.func @transform_3(%arg0: i32) -> (i32, i32, i32) {
    %c0_i32 = arith.constant 0 : i32
    %c0_i32_0 = arith.constant 0 : i32
    %c0_i32_1 = arith.constant 0 : i32
    return %arg0, %c0_i32, %c0_i32_0 : i32, i32, i32
  }
  func.func @transform_4(%arg0: i32) -> (i32, i32, i32) {
    %c0_i32 = arith.constant 0 : i32
    %c0_i32_0 = arith.constant 0 : i32
    %c0_i32_1 = arith.constant 0 : i32
    return %arg0, %c0_i32, %c0_i32_0 : i32, i32, i32
  }
  func.func @transform_5(%arg0: i32) -> (i32, i32, i32) {
    %c0_i32 = arith.constant 0 : i32
    %c0_i32_0 = arith.constant 0 : i32
    %c0_i32_1 = arith.constant 0 : i32
    return %arg0, %c0_i32, %c0_i32_0 : i32, i32, i32
  }
  func.func @transform_6(%arg0: i32) -> (i32, i32, i32) {
    %c0_i32 = arith.constant 0 : i32
    %c0_i32_0 = arith.constant 0 : i32
    %c0_i32_1 = arith.constant 0 : i32
    return %arg0, %c0_i32, %c0_i32_0 : i32, i32, i32
  }
  func.func @transform_7(%arg0: i32) -> (i32, i32, i32) {
    %c0_i32 = arith.constant 0 : i32
    %c0_i32_0 = arith.constant 0 : i32
    %c0_i32_1 = arith.constant 0 : i32
    return %arg0, %c0_i32, %c0_i32_0 : i32, i32, i32
  }
  func.func @transform_8(%arg0: i32) -> (i32, i32, i32) {
    %c0_i32 = arith.constant 0 : i32
    %c0_i32_0 = arith.constant 0 : i32
    %c0_i32_1 = arith.constant 0 : i32
    return %arg0, %c0_i32, %c0_i32_0 : i32, i32, i32
  }
  func.func @transform_9(%arg0: i32) -> (i32, i32, i32) {
    %c0_i32 = arith.constant 0 : i32
    %c0_i32_0 = arith.constant 0 : i32
    %c0_i32_1 = arith.constant 0 : i32
    return %arg0, %c0_i32, %c0_i32_0 : i32, i32, i32
  }
  func.func @transform_10(%arg0: i32) -> (i32, i32, i32) {
    %c0_i32 = arith.constant 0 : i32
    %c0_i32_0 = arith.constant 0 : i32
    %c0_i32_1 = arith.constant 0 : i32
    return %arg0, %c0_i32, %c0_i32_0 : i32, i32, i32
  }
  func.func @transform_11(%arg0: i32) -> (i32, i32) {
    %c0_i32 = arith.constant 0 : i32
    %c0_i32_0 = arith.constant 0 : i32
    %c0_i32_1 = arith.constant 0 : i32
    return %c0_i32, %c0_i32_0 : i32, i32
  }
  func.func @transform_12(%arg0: i32) -> (i32, i32) {
    %c0_i32 = arith.constant 0 : i32
    %c0_i32_0 = arith.constant 0 : i32
    %c0_i32_1 = arith.constant 0 : i32
    return %c0_i32, %c0_i32_0 : i32, i32
  }
  func.func @transform_13(%arg0: i32) -> (i32, i32) {
    %c0_i32 = arith.constant 0 : i32
    %c0_i32_0 = arith.constant 0 : i32
    %c0_i32_1 = arith.constant 0 : i32
    return %c0_i32, %c0_i32_0 : i32, i32
  }
  func.func @transform_14(%arg0: i32) -> (i32, i32) {
    %c0_i32 = arith.constant 0 : i32
    %c0_i32_0 = arith.constant 0 : i32
    %c0_i32_1 = arith.constant 0 : i32
    return %c0_i32, %c0_i32_0 : i32, i32
  }
}

</mosaic_0001>

<llo_original>
// kernel: mini_vampnet_forward.1
$region0: #{mini_vampnet_forward.1}
  #allocation0 [shape = 'u32[]', space=smem, size = 0x4, offset = 0x4, fixed_abs, tag = 'smem constant byte address 0x4 - core index']
  #allocation1 [shape = 'u32[144,128]{1,0:T(1,128)}', space=vmem, size = 0x12000, scoped, tag = 'internal scratch']
  #allocation2 [shape = 'f32[16,128]{1,0:T(8,128)}', space=vmem, size = 0x2000, scoped, tag = 'scratch operand']
  %s0 = inlined_call_operand.vmem [shape: f32[16,128], index: 0, kind: input, shape index: {}]
  %s1 = inlined_call_operand.vmem [shape: f32[2,1,128], index: 1, kind: input, shape index: {}]
  %s2 = inlined_call_operand.vmem [shape: bf16[2,128,640], index: 2, kind: input, shape index: {}]
  %s3 = inlined_call_operand.vmem [shape: f32[2,1,640], index: 3, kind: input, shape index: {}]
  %s4 = inlined_call_operand.vmem [shape: bf16[2,128,128], index: 4, kind: input, shape index: {}]
  %s5 = inlined_call_operand.vmem [shape: f32[2,1,128], index: 5, kind: input, shape index: {}]
  %s6 = inlined_call_operand.vmem [shape: f32[2,1,128], index: 6, kind: input, shape index: {}]
  %s7 = inlined_call_operand.vmem [shape: bf16[2,128,768], index: 7, kind: input, shape index: {}]
  %s8 = inlined_call_operand.vmem [shape: f32[2,1,768], index: 8, kind: input, shape index: {}]
  %s9 = inlined_call_operand.vmem [shape: bf16[2,512,128], index: 9, kind: input, shape index: {}]
  %s10 = inlined_call_operand.vmem [shape: f32[2,1,128], index: 10, kind: input, shape index: {}]
  %s11 = inlined_call_operand.vmem [shape: f32[1,128], index: 11, kind: input, shape index: {}]
  %s12 = inlined_call_operand.vmem [shape: bf16[128,1024], index: 12, kind: input, shape index: {}]
  %s13 = inlined_call_operand.vmem [shape: f32[1,1024], index: 13, kind: input, shape index: {}]
  %s14 = inlined_call_operand.vmem [shape: s32[16,4], index: 14, kind: output, shape index: {}]
  %s15 = sld [smem:[#allocation0]]
  $region97: #{mini_vampnet_forward.1} parent=0
    _
  %s17 = ssub.s32 1, %s15
  %s18 = scalar_select 0, %s17, %s15
  loop: start=0, step=1, limit=4
  $region2: #{mini_vampnet_forward.1} parent=0 // loop_pre_header
    _
  $region3: #{mini_vampnet_forward.1} parent=0 // loop_header
    %s20 = sphi 0, %s24
    %p21 = scmp.ge.s32.totalorder %s20, 4
    %s28 = sphi 0, %s28
    %s30 = sphi 0, %s28
    %s31 = sphi 0, %s30
    %s45 = sphi 0, %s31
    %s51 = sphi 0, %s53
    %s54 = sphi 0, %s51
    %s55 = sphi 0, %s54
    %s71 = sphi 0, %s55
    %s77 = sphi 0, %s79
    %s80 = sphi 0, %s77
    %s81 = sphi 0, %s80
    %s97 = sphi 0, %s81
    %s103 = sphi 0, %s105
    %s106 = sphi 0, %s103
    %s107 = sphi 0, %s106
    %s123 = sphi 0, %s107
    %s129 = sphi 0, %s131
    %s132 = sphi 0, %s129
    %s133 = sphi 0, %s132
    %s149 = sphi 0, %s133
    %s155 = sphi 0, %s157
    %s158 = sphi 0, %s155
    %s159 = sphi 0, %s158
    %s175 = sphi 0, %s159
    %s181 = sphi 0, %s183
    %s184 = sphi 0, %s181
    %s185 = sphi 0, %s184
    %s201 = sphi 0, %s185
    %s207 = sphi 0, %s209
    %s210 = sphi 0, %s207
    %s211 = sphi 0, %s210
    %s227 = sphi 0, %s211
    %s233 = sphi 0, %s235
    %s236 = sphi 0, %s233
    %s237 = sphi 0, %s236
    %s253 = sphi 0, %s237
    %s259 = sphi 0, %s261
    %s262 = sphi 0, %s259
    %s263 = sphi 0, %s262
    %s279 = sphi 0, %s263
    %s285 = sphi 0, %s287
    %s288 = sphi 0, %s285
    %s289 = sphi 0, %s288
    %s305 = sphi 0, %s289
    %s309 = sphi 0, %s309
    %s311 = sphi 0, %s309
    %s312 = sphi 0, %s311
    %s326 = sphi 0, %s312
    %s330 = sphi 0, %s330
    %s332 = sphi 0, %s330
    %s333 = sphi 0, %s332
    %s347 = sphi 0, %s333
    %s351 = sphi 0, %s351
    %s353 = sphi 0, %s351
    %s354 = sphi 0, %s353
    %s368 = sphi 0, %s354
    %s372 = sphi 0, %s372
    %s374 = sphi 0, %s372
    %s375 = sphi 0, %s374
    %s389 = sphi 0, %s375
  $region4: #{mini_vampnet_forward.1} parent=0 // loop_header_branch
    %23 = sbr.rel (%p21) target = $region8
  $region5: #{mini_vampnet_forward.1} parent=0 // loop_body
    %s25 = ssub.s32 %s20, 1
    %s26 = ssub.s32 %s20, 2
    %s27 = sadd.s32 %s20, 1
    %s29 = sadd.s32 %s28, 1
    %p32 = scmp.eq.s32.totalorder %s20, 1
    %p33 = scmp.ne.s32.totalorder %s28, %s30
    %p34 = scmp.eq.s32.totalorder %s20, 0
    %p35 = por %p33, %p34
    %p36 = scmp.ne.s32.totalorder %s28, %s30
    %p37 = scmp.eq.s32.totalorder %s25, 1
    %p38 = por %p36, %p37
    %p39 = scmp.ne.s32.totalorder %s30, %s31
    %p40 = scmp.eq.s32.totalorder %s25, 0
    %p41 = por %p39, %p40
    %p42 = scmp.ne.s32.totalorder %s30, %s31
    %p43 = scmp.eq.s32.totalorder %s26, 1
    %p44 = por %p42, %p43
    %p46 = scmp.ne.s32.totalorder %s31, %s45
    %p47 = scmp.eq.s32.totalorder %s26, 0
    %p48 = por %p46, %p47
    %s49 = ssub.s32 %s20, %s27
    %p50 = scmp.eq.s32.totalorder %s49, 0
    %s52 = sadd.s32 %s51, 1
    %s53 = scalar_select %p50, %s51, %s52
    %p56 = pneg %p50
    %p57 = scmp.eq.s32.totalorder %s20, 1
    %p58 = por %p56, %p57
    %p59 = scmp.ne.s32.totalorder %s51, %s54
    %p60 = scmp.eq.s32.totalorder %s20, 0
    %p61 = por %p59, %p60
    %p62 = scmp.ne.s32.totalorder %s51, %s54
    %p63 = scmp.eq.s32.totalorder %s25, 1
    %p64 = por %p62, %p63
    %p65 = scmp.ne.s32.totalorder %s54, %s55
    %p66 = scmp.eq.s32.totalorder %s25, 0
    %p67 = por %p65, %p66
    %p68 = scmp.ne.s32.totalorder %s54, %s55
    %p69 = scmp.eq.s32.totalorder %s26, 1
    %p70 = por %p68, %p69
    %p72 = scmp.ne.s32.totalorder %s55, %s71
    %p73 = scmp.eq.s32.totalorder %s26, 0
    %p74 = por %p72, %p73
    %s75 = ssub.s32 %s20, %s27
    %p76 = scmp.eq.s32.totalorder %s75, 0
    %s78 = sadd.s32 %s77, 1
    %s79 = scalar_select %p76, %s77, %s78
    %p82 = pneg %p76
    %p83 = scmp.eq.s32.totalorder %s20, 1
    %p84 = por %p82, %p83
    %p85 = scmp.ne.s32.totalorder %s77, %s80
    %p86 = scmp.eq.s32.totalorder %s20, 0
    %p87 = por %p85, %p86
    %p88 = scmp.ne.s32.totalorder %s77, %s80
    %p89 = scmp.eq.s32.totalorder %s25, 1
    %p90 = por %p88, %p89
    %p91 = scmp.ne.s32.totalorder %s80, %s81
    %p92 = scmp.eq.s32.totalorder %s25, 0
    %p93 = por %p91, %p92
    %p94 = scmp.ne.s32.totalorder %s80, %s81
    %p95 = scmp.eq.s32.totalorder %s26, 1
    %p96 = por %p94, %p95
    %p98 = scmp.ne.s32.totalorder %s81, %s97
    %p99 = scmp.eq.s32.totalorder %s26, 0
    %p100 = por %p98, %p99
    %s101 = ssub.s32 %s20, %s27
    %p102 = scmp.eq.s32.totalorder %s101, 0
    %s104 = sadd.s32 %s103, 1
    %s105 = scalar_select %p102, %s103, %s104
    %p108 = pneg %p102
    %p109 = scmp.eq.s32.totalorder %s20, 1
    %p110 = por %p108, %p109
    %p111 = scmp.ne.s32.totalorder %s103, %s106
    %p112 = scmp.eq.s32.totalorder %s20, 0
    %p113 = por %p111, %p112
    %p114 = scmp.ne.s32.totalorder %s103, %s106
    %p115 = scmp.eq.s32.totalorder %s25, 1
    %p116 = por %p114, %p115
    %p117 = scmp.ne.s32.totalorder %s106, %s107
    %p118 = scmp.eq.s32.totalorder %s25, 0
    %p119 = por %p117, %p118
    %p120 = scmp.ne.s32.totalorder %s106, %s107
    %p121 = scmp.eq.s32.totalorder %s26, 1
    %p122 = por %p120, %p121
    %p124 = scmp.ne.s32.totalorder %s107, %s123
    %p125 = scmp.eq.s32.totalorder %s26, 0
    %p126 = por %p124, %p125
    %s127 = ssub.s32 %s20, %s27
    %p128 = scmp.eq.s32.totalorder %s127, 0
    %s130 = sadd.s32 %s129, 1
    %s131 = scalar_select %p128, %s129, %s130
    %p134 = pneg %p128
    %p135 = scmp.eq.s32.totalorder %s20, 1
    %p136 = por %p134, %p135
    %p137 = scmp.ne.s32.totalorder %s129, %s132
    %p138 = scmp.eq.s32.totalorder %s20, 0
    %p139 = por %p137, %p138
    %p140 = scmp.ne.s32.totalorder %s129, %s132
    %p141 = scmp.eq.s32.totalorder %s25, 1
    %p142 = por %p140, %p141
    %p143 = scmp.ne.s32.totalorder %s132, %s133
    %p144 = scmp.eq.s32.totalorder %s25, 0
    %p145 = por %p143, %p144
    %p146 = scmp.ne.s32.totalorder %s132, %s133
    %p147 = scmp.eq.s32.totalorder %s26, 1
    %p148 = por %p146, %p147
    %p150 = scmp.ne.s32.totalorder %s133, %s149
    %p151 = scmp.eq.s32.totalorder %s26, 0
    %p152 = por %p150, %p151
    %s153 = ssub.s32 %s20, %s27
    %p154 = scmp.eq.s32.totalorder %s153, 0
    %s156 = sadd.s32 %s155, 1
    %s157 = scalar_select %p154, %s155, %s156
    %p160 = pneg %p154
    %p161 = scmp.eq.s32.totalorder %s20, 1
    %p162 = por %p160, %p161
    %p163 = scmp.ne.s32.totalorder %s155, %s158
    %p164 = scmp.eq.s32.totalorder %s20, 0
    %p165 = por %p163, %p164
    %p166 = scmp.ne.s32.totalorder %s155, %s158
    %p167 = scmp.eq.s32.totalorder %s25, 1
    %p168 = por %p166, %p167
    %p169 = scmp.ne.s32.totalorder %s158, %s159
    %p170 = scmp.eq.s32.totalorder %s25, 0
    %p171 = por %p169, %p170
    %p172 = scmp.ne.s32.totalorder %s158, %s159
    %p173 = scmp.eq.s32.totalorder %s26, 1
    %p174 = por %p172, %p173
    %p176 = scmp.ne.s32.totalorder %s159, %s175
    %p177 = scmp.eq.s32.totalorder %s26, 0
    %p178 = por %p176, %p177
    %s179 = ssub.s32 %s20, %s27
    %p180 = scmp.eq.s32.totalorder %s179, 0
    %s182 = sadd.s32 %s181, 1
    %s183 = scalar_select %p180, %s181, %s182
    %p186 = pneg %p180
    %p187 = scmp.eq.s32.totalorder %s20, 1
    %p188 = por %p186, %p187
    %p189 = scmp.ne.s32.totalorder %s181, %s184
    %p190 = scmp.eq.s32.totalorder %s20, 0
    %p191 = por %p189, %p190
    %p192 = scmp.ne.s32.totalorder %s181, %s184
    %p193 = scmp.eq.s32.totalorder %s25, 1
    %p194 = por %p192, %p193
    %p195 = scmp.ne.s32.totalorder %s184, %s185
    %p196 = scmp.eq.s32.totalorder %s25, 0
    %p197 = por %p195, %p196
    %p198 = scmp.ne.s32.totalorder %s184, %s185
    %p199 = scmp.eq.s32.totalorder %s26, 1
    %p200 = por %p198, %p199
    %p202 = scmp.ne.s32.totalorder %s185, %s201
    %p203 = scmp.eq.s32.totalorder %s26, 0
    %p204 = por %p202, %p203
    %s205 = ssub.s32 %s20, %s27
    %p206 = scmp.eq.s32.totalorder %s205, 0
    %s208 = sadd.s32 %s207, 1
    %s209 = scalar_select %p206, %s207, %s208
    %p212 = pneg %p206
    %p213 = scmp.eq.s32.totalorder %s20, 1
    %p214 = por %p212, %p213
    %p215 = scmp.ne.s32.totalorder %s207, %s210
    %p216 = scmp.eq.s32.totalorder %s20, 0
    %p217 = por %p215, %p216
    %p218 = scmp.ne.s32.totalorder %s207, %s210
    %p219 = scmp.eq.s32.totalorder %s25, 1
    %p220 = por %p218, %p219
    %p221 = scmp.ne.s32.totalorder %s210, %s211
    %p222 = scmp.eq.s32.totalorder %s25, 0
    %p223 = por %p221, %p222
    %p224 = scmp.ne.s32.totalorder %s210, %s211
    %p225 = scmp.eq.s32.totalorder %s26, 1
    %p226 = por %p224, %p225
    %p228 = scmp.ne.s32.totalorder %s211, %s227
    %p229 = scmp.eq.s32.totalorder %s26, 0
    %p230 = por %p228, %p229
    %s231 = ssub.s32 %s20, %s27
    %p232 = scmp.eq.s32.totalorder %s231, 0
    %s234 = sadd.s32 %s233, 1
    %s235 = scalar_select %p232, %s233, %s234
    %p238 = pneg %p232
    %p239 = scmp.eq.s32.totalorder %s20, 1
    %p240 = por %p238, %p239
    %p241 = scmp.ne.s32.totalorder %s233, %s236
    %p242 = scmp.eq.s32.totalorder %s20, 0
    %p243 = por %p241, %p242
    %p244 = scmp.ne.s32.totalorder %s233, %s236
    %p245 = scmp.eq.s32.totalorder %s25, 1
    %p246 = por %p244, %p245
    %p247 = scmp.ne.s32.totalorder %s236, %s237
    %p248 = scmp.eq.s32.totalorder %s25, 0
    %p249 = por %p247, %p248
    %p250 = scmp.ne.s32.totalorder %s236, %s237
    %p251 = scmp.eq.s32.totalorder %s26, 1
    %p252 = por %p250, %p251
    %p254 = scmp.ne.s32.totalorder %s237, %s253
    %p255 = scmp.eq.s32.totalorder %s26, 0
    %p256 = por %p254, %p255
    %s257 = ssub.s32 %s20, %s27
    %p258 = scmp.eq.s32.totalorder %s257, 0
    %s260 = sadd.s32 %s259, 1
    %s261 = scalar_select %p258, %s259, %s260
    %p264 = pneg %p258
    %p265 = scmp.eq.s32.totalorder %s20, 1
    %p266 = por %p264, %p265
    %p267 = scmp.ne.s32.totalorder %s259, %s262
    %p268 = scmp.eq.s32.totalorder %s20, 0
    %p269 = por %p267, %p268
    %p270 = scmp.ne.s32.totalorder %s259, %s262
    %p271 = scmp.eq.s32.totalorder %s25, 1
    %p272 = por %p270, %p271
    %p273 = scmp.ne.s32.totalorder %s262, %s263
    %p274 = scmp.eq.s32.totalorder %s25, 0
    %p275 = por %p273, %p274
    %p276 = scmp.ne.s32.totalorder %s262, %s263
    %p277 = scmp.eq.s32.totalorder %s26, 1
    %p278 = por %p276, %p277
    %p280 = scmp.ne.s32.totalorder %s263, %s279
    %p281 = scmp.eq.s32.totalorder %s26, 0
    %p282 = por %p280, %p281
    %s283 = ssub.s32 %s20, %s27
    %p284 = scmp.eq.s32.totalorder %s283, 0
    %s286 = sadd.s32 %s285, 1
    %s287 = scalar_select %p284, %s285, %s286
    %p290 = pneg %p284
    %p291 = scmp.eq.s32.totalorder %s20, 1
    %p292 = por %p290, %p291
    %p293 = scmp.ne.s32.totalorder %s285, %s288
    %p294 = scmp.eq.s32.totalorder %s20, 0
    %p295 = por %p293, %p294
    %p296 = scmp.ne.s32.totalorder %s285, %s288
    %p297 = scmp.eq.s32.totalorder %s25, 1
    %p298 = por %p296, %p297
    %p299 = scmp.ne.s32.totalorder %s288, %s289
    %p300 = scmp.eq.s32.totalorder %s25, 0
    %p301 = por %p299, %p300
    %p302 = scmp.ne.s32.totalorder %s288, %s289
    %p303 = scmp.eq.s32.totalorder %s26, 1
    %p304 = por %p302, %p303
    %p306 = scmp.ne.s32.totalorder %s289, %s305
    %p307 = scmp.eq.s32.totalorder %s26, 0
    %p308 = por %p306, %p307
    %s310 = sadd.s32 %s309, 1
    %p313 = scmp.eq.s32.totalorder %s20, 1
    %p314 = scmp.ne.s32.totalorder %s309, %s311
    %p315 = scmp.eq.s32.totalorder %s20, 0
    %p316 = por %p314, %p315
    %p317 = scmp.ne.s32.totalorder %s309, %s311
    %p318 = scmp.eq.s32.totalorder %s25, 1
    %p319 = por %p317, %p318
    %p320 = scmp.ne.s32.totalorder %s311, %s312
    %p321 = scmp.eq.s32.totalorder %s25, 0
    %p322 = por %p320, %p321
    %p323 = scmp.ne.s32.totalorder %s311, %s312
    %p324 = scmp.eq.s32.totalorder %s26, 1
    %p325 = por %p323, %p324
    %p327 = scmp.ne.s32.totalorder %s312, %s326
    %p328 = scmp.eq.s32.totalorder %s26, 0
    %p329 = por %p327, %p328
    %s331 = sadd.s32 %s330, 1
    %p334 = scmp.eq.s32.totalorder %s20, 1
    %p335 = scmp.ne.s32.totalorder %s330, %s332
    %p336 = scmp.eq.s32.totalorder %s20, 0
    %p337 = por %p335, %p336
    %p338 = scmp.ne.s32.totalorder %s330, %s332
    %p339 = scmp.eq.s32.totalorder %s25, 1
    %p340 = por %p338, %p339
    %p341 = scmp.ne.s32.totalorder %s332, %s333
    %p342 = scmp.eq.s32.totalorder %s25, 0
    %p343 = por %p341, %p342
    %p344 = scmp.ne.s32.totalorder %s332, %s333
    %p345 = scmp.eq.s32.totalorder %s26, 1
    %p346 = por %p344, %p345
    %p348 = scmp.ne.s32.totalorder %s333, %s347
    %p349 = scmp.eq.s32.totalorder %s26, 0
    %p350 = por %p348, %p349
    %s352 = sadd.s32 %s351, 1
    %p355 = scmp.eq.s32.totalorder %s20, 1
    %p356 = scmp.ne.s32.totalorder %s351, %s353
    %p357 = scmp.eq.s32.totalorder %s20, 0
    %p358 = por %p356, %p357
    %p359 = scmp.ne.s32.totalorder %s351, %s353
    %p360 = scmp.eq.s32.totalorder %s25, 1
    %p361 = por %p359, %p360
    %p362 = scmp.ne.s32.totalorder %s353, %s354
    %p363 = scmp.eq.s32.totalorder %s25, 0
    %p364 = por %p362, %p363
    %p365 = scmp.ne.s32.totalorder %s353, %s354
    %p366 = scmp.eq.s32.totalorder %s26, 1
    %p367 = por %p365, %p366
    %p369 = scmp.ne.s32.totalorder %s354, %s368
    %p370 = scmp.eq.s32.totalorder %s26, 0
    %p371 = por %p369, %p370
    %s373 = sadd.s32 %s372, 1
    %p376 = scmp.eq.s32.totalorder %s20, 1
    %p377 = scmp.ne.s32.totalorder %s372, %s374
    %p378 = scmp.eq.s32.totalorder %s20, 0
    %p379 = por %p377, %p378
    %p380 = scmp.ne.s32.totalorder %s372, %s374
    %p381 = scmp.eq.s32.totalorder %s25, 1
    %p382 = por %p380, %p381
    %p383 = scmp.ne.s32.totalorder %s374, %s375
    %p384 = scmp.eq.s32.totalorder %s25, 0
    %p385 = por %p383, %p384
    %p386 = scmp.ne.s32.totalorder %s374, %s375
    %p387 = scmp.eq.s32.totalorder %s26, 1
    %p388 = por %p386, %p387
    %p390 = scmp.ne.s32.totalorder %s375, %s389
    %p391 = scmp.eq.s32.totalorder %s26, 0
    %p392 = por %p390, %p391
    %p393 = scmp.le.s32.totalorder 1, %s20
    %p394 = scmp.lt.s32.totalorder %s20, 3
    %p395 = pnand %p393, %p394
    %p396 = pneg %p395
    // Predicated region
    $region9: #{mini_vampnet_forward.1} parent=5 // pred_check
      _
    $region10: #{mini_vampnet_forward.1} parent=5 // pred_check_branch
      %398 = sbr.rel (%p395) target = $region12
    $region11: #{mini_vampnet_forward.1} parent=5 // pred_region
      %s399 = ssub.s32 %s20, 1
      // Predicated region
      $region13: #{mini_vampnet_forward.1} parent=11 // pred_check
        %p400 = pneg %p41
      $region14: #{mini_vampnet_forward.1} parent=11 // pred_check_branch
        %402 = sbr.rel (%p400) target = $region16
      $region15: #{mini_vampnet_forward.1} parent=11 // pred_region
        _
      $region16: #{mini_vampnet_forward.1} parent=11 // pred_fallthru
        _
      // Predicated region
      $region17: #{mini_vampnet_forward.1} parent=11 // pred_check
        %p403 = pneg %p322
      $region18: #{mini_vampnet_forward.1} parent=11 // pred_check_branch
        %405 = sbr.rel (%p403) target = $region20
      $region19: #{mini_vampnet_forward.1} parent=11 // pred_region
        _
      $region20: #{mini_vampnet_forward.1} parent=11 // pred_fallthru
        _
      // Predicated region
      $region21: #{mini_vampnet_forward.1} parent=11 // pred_check
        %p406 = pneg %p343
      $region22: #{mini_vampnet_forward.1} parent=11 // pred_check_branch
        %408 = sbr.rel (%p406) target = $region24
      $region23: #{mini_vampnet_forward.1} parent=11 // pred_region
        _
      $region24: #{mini_vampnet_forward.1} parent=11 // pred_fallthru
        _
      // Predicated region
      $region25: #{mini_vampnet_forward.1} parent=11 // pred_check
        %p409 = pneg %p364
      $region26: #{mini_vampnet_forward.1} parent=11 // pred_check_branch
        %411 = sbr.rel (%p409) target = $region28
      $region27: #{mini_vampnet_forward.1} parent=11 // pred_region
        _
      $region28: #{mini_vampnet_forward.1} parent=11 // pred_fallthru
        _
    $region12: #{mini_vampnet_forward.1} parent=5 // pred_fallthru
      _
    %p412 = scmp.lt.s32.totalorder %s20, 2
    // Predicated region
    $region29: #{mini_vampnet_forward.1} parent=5 // pred_check
      %p413 = pneg %p412
    $region30: #{mini_vampnet_forward.1} parent=5 // pred_check_branch
      %415 = sbr.rel (%p413) target = $region32
    $region31: #{mini_vampnet_forward.1} parent=5 // pred_region
      // Predicated region
      $region33: #{mini_vampnet_forward.1} parent=31 // pred_check
        %p416 = pneg %p61
      $region34: #{mini_vampnet_forward.1} parent=31 // pred_check_branch
        %418 = sbr.rel (%p416) target = $region36
      $region35: #{mini_vampnet_forward.1} parent=31 // pred_region
        %p419 = scmp.lt.s32.totalorder %s20, 1
        %s420 = scalar_select %p419, %s20, 1
        %s421 = scalar_lea.vmem %s1, %s420
      $region36: #{mini_vampnet_forward.1} parent=31 // pred_fallthru
        _
      // Predicated region
      $region37: #{mini_vampnet_forward.1} parent=31 // pred_check
        %p422 = pneg %p87
      $region38: #{mini_vampnet_forward.1} parent=31 // pred_check_branch
        %424 = sbr.rel (%p422) target = $region40
      $region39: #{mini_vampnet_forward.1} parent=31 // pred_region
        %p425 = scmp.lt.s32.totalorder %s20, 1
        %s426 = scalar_select %p425, %s20, 1
        %s427 = smul.addr %s426, 80
        %s428 = smul.addr %s427, 4
        %s429 = scalar_lea.vmem %s2, %s428
      $region40: #{mini_vampnet_forward.1} parent=31 // pred_fallthru
        _
      // Predicated region
      $region41: #{mini_vampnet_forward.1} parent=31 // pred_check
        %p430 = pneg %p113
      $region42: #{mini_vampnet_forward.1} parent=31 // pred_check_branch
        %432 = sbr.rel (%p430) target = $region44
      $region43: #{mini_vampnet_forward.1} parent=31 // pred_region
        %p433 = scmp.lt.s32.totalorder %s20, 1
        %s434 = scalar_select %p433, %s20, 1
        %s435 = smul.addr %s434, 5
        %s436 = scalar_lea.vmem %s3, %s435
      $region44: #{mini_vampnet_forward.1} parent=31 // pred_fallthru
        _
      // Predicated region
      $region45: #{mini_vampnet_forward.1} parent=31 // pred_check
        %p437 = pneg %p139
      $region46: #{mini_vampnet_forward.1} parent=31 // pred_check_branch
        %439 = sbr.rel (%p437) target = $region48
      $region47: #{mini_vampnet_forward.1} parent=31 // pred_region
        %p440 = scmp.lt.s32.totalorder %s20, 1
        %s441 = scalar_select %p440, %s20, 1
        %s442 = smul.addr %s441, 16
        %s443 = smul.addr %s442, 4
        %s444 = scalar_lea.vmem %s4, %s443
      $region48: #{mini_vampnet_forward.1} parent=31 // pred_fallthru
        _
      // Predicated region
      $region49: #{mini_vampnet_forward.1} parent=31 // pred_check
        %p445 = pneg %p165
      $region50: #{mini_vampnet_forward.1} parent=31 // pred_check_branch
        %447 = sbr.rel (%p445) target = $region52
      $region51: #{mini_vampnet_forward.1} parent=31 // pred_region
        %p448 = scmp.lt.s32.totalorder %s20, 1
        %s449 = scalar_select %p448, %s20, 1
        %s450 = scalar_lea.vmem %s5, %s449
      $region52: #{mini_vampnet_forward.1} parent=31 // pred_fallthru
        _
      // Predicated region
      $region53: #{mini_vampnet_forward.1} parent=31 // pred_check
        %p451 = pneg %p191
      $region54: #{mini_vampnet_forward.1} parent=31 // pred_check_branch
        %453 = sbr.rel (%p451) target = $region56
      $region55: #{mini_vampnet_forward.1} parent=31 // pred_region
        %p454 = scmp.lt.s32.totalorder %s20, 1
        %s455 = scalar_select %p454, %s20, 1
        %s456 = scalar_lea.vmem %s6, %s455
      $region56: #{mini_vampnet_forward.1} parent=31 // pred_fallthru
        _
      // Predicated region
      $region57: #{mini_vampnet_forward.1} parent=31 // pred_check
        %p457 = pneg %p217
      $region58: #{mini_vampnet_forward.1} parent=31 // pred_check_branch
        %459 = sbr.rel (%p457) target = $region60
      $region59: #{mini_vampnet_forward.1} parent=31 // pred_region
        %p460 = scmp.lt.s32.totalorder %s20, 1
        %s461 = scalar_select %p460, %s20, 1
        %s462 = smul.addr %s461, 96
        %s463 = smul.addr %s462, 4
        %s464 = scalar_lea.vmem %s7, %s463
      $region60: #{mini_vampnet_forward.1} parent=31 // pred_fallthru
        _
      // Predicated region
      $region61: #{mini_vampnet_forward.1} parent=31 // pred_check
        %p465 = pneg %p243
      $region62: #{mini_vampnet_forward.1} parent=31 // pred_check_branch
        %467 = sbr.rel (%p465) target = $region64
      $region63: #{mini_vampnet_forward.1} parent=31 // pred_region
        %p468 = scmp.lt.s32.totalorder %s20, 1
        %s469 = scalar_select %p468, %s20, 1
        %s470 = smul.addr %s469, 6
        %s471 = scalar_lea.vmem %s8, %s470
      $region64: #{mini_vampnet_forward.1} parent=31 // pred_fallthru
        _
      // Predicated region
      $region65: #{mini_vampnet_forward.1} parent=31 // pred_check
        %p472 = pneg %p269
      $region66: #{mini_vampnet_forward.1} parent=31 // pred_check_branch
        %474 = sbr.rel (%p472) target = $region68
      $region67: #{mini_vampnet_forward.1} parent=31 // pred_region
        %p475 = scmp.lt.s32.totalorder %s20, 1
        %s476 = scalar_select %p475, %s20, 1
        %s477 = smul.addr %s476, 64
        %s478 = smul.addr %s477, 4
        %s479 = scalar_lea.vmem %s9, %s478
      $region68: #{mini_vampnet_forward.1} parent=31 // pred_fallthru
        _
      // Predicated region
      $region69: #{mini_vampnet_forward.1} parent=31 // pred_check
        %p480 = pneg %p295
      $region70: #{mini_vampnet_forward.1} parent=31 // pred_check_branch
        %482 = sbr.rel (%p480) target = $region72
      $region71: #{mini_vampnet_forward.1} parent=31 // pred_region
        %p483 = scmp.lt.s32.totalorder %s20, 1
        %s484 = scalar_select %p483, %s20, 1
        %s485 = scalar_lea.vmem %s10, %s484
      $region72: #{mini_vampnet_forward.1} parent=31 // pred_fallthru
        _
    $region32: #{mini_vampnet_forward.1} parent=5 // pred_fallthru
      _
    %p486 = scmp.le.s32.totalorder 1, %s20
    %p487 = scmp.lt.s32.totalorder %s20, 3
    %p488 = pnand %p486, %p487
    %p489 = pneg %p488
    // Predicated region
    $region73: #{mini_vampnet_forward.1} parent=5 // pred_check
      _
    $region74: #{mini_vampnet_forward.1} parent=5 // pred_check_branch
      %491 = sbr.rel (%p488) target = $region76
    $region75: #{mini_vampnet_forward.1} parent=5 // pred_region
      %s492 = ssub.s32 %s20, 1
      %p493 = pneg %p41
      %p494 = pneg %p38
      %p495 = scmp.lt.s32.totalorder %s25, 1
      %s496 = scalar_select %p495, %s25, 1
      %s497 = scalar_lea.vmem %s1, %s496
      %p498 = pneg %p67
      %p499 = pneg %p64
      %p500 = scmp.lt.s32.totalorder %s25, 1
      %s501 = scalar_select %p500, %s25, 1
      %s502 = smul.addr %s501, 80
      %s503 = smul.addr %s502, 4
      %s504 = scalar_lea.vmem %s2, %s503
      %p505 = pneg %p93
      %p506 = pneg %p90
      %p507 = scmp.lt.s32.totalorder %s25, 1
      %s508 = scalar_select %p507, %s25, 1
      %s509 = smul.addr %s508, 5
      %s510 = scalar_lea.vmem %s3, %s509
      %p511 = pneg %p119
      %p512 = pneg %p116
      %p513 = scmp.lt.s32.totalorder %s25, 1
      %s514 = scalar_select %p513, %s25, 1
      %s515 = smul.addr %s514, 16
      %s516 = smul.addr %s515, 4
      %s517 = scalar_lea.vmem %s4, %s516
      %p518 = pneg %p145
      %p519 = pneg %p142
      %p520 = scmp.lt.s32.totalorder %s25, 1
      %s521 = scalar_select %p520, %s25, 1
      %s522 = scalar_lea.vmem %s5, %s521
      %p523 = pneg %p171
      %p524 = pneg %p168
      %p525 = scmp.lt.s32.totalorder %s25, 1
      %s526 = scalar_select %p525, %s25, 1
      %s527 = scalar_lea.vmem %s6, %s526
      %p528 = pneg %p197
      %p529 = pneg %p194
      %p530 = scmp.lt.s32.totalorder %s25, 1
      %s531 = scalar_select %p530, %s25, 1
      %s532 = smul.addr %s531, 96
      %s533 = smul.addr %s532, 4
      %s534 = scalar_lea.vmem %s7, %s533
      %p535 = pneg %p223
      %p536 = pneg %p220
      %p537 = scmp.lt.s32.totalorder %s25, 1
      %s538 = scalar_select %p537, %s25, 1
      %s539 = smul.addr %s538, 6
      %s540 = scalar_lea.vmem %s8, %s539
      %p541 = pneg %p249
      %p542 = pneg %p246
      %p543 = scmp.lt.s32.totalorder %s25, 1
      %s544 = scalar_select %p543, %s25, 1
      %s545 = smul.addr %s544, 64
      %s546 = smul.addr %s545, 4
      %s547 = scalar_lea.vmem %s9, %s546
      %p548 = pneg %p275
      %p549 = pneg %p272
      %p550 = scmp.lt.s32.totalorder %s25, 1
      %s551 = scalar_select %p550, %s25, 1
      %s552 = scalar_lea.vmem %s10, %s551
      %p553 = pneg %p301
      %p554 = pneg %p298
      %p555 = pneg %p322
      %p556 = pneg %p319
      %p557 = pneg %p343
      %p558 = pneg %p340
      %p559 = pneg %p364
      %p560 = pneg %p361
      %p561 = pneg %p385
      %p562 = pneg %p382
      %p563 = scmp.lt.s32.totalorder %s25, 1
      %s564 = scalar_select %p563, %s25, 1
      %s565 = scalar_lea.vmem %s1, %s564
      %p566 = scmp.lt.s32.totalorder %s25, 1
      %s567 = scalar_select %p566, %s25, 1
      %s568 = smul.addr %s567, 80
      %s569 = smul.addr %s568, 4
      %s570 = scalar_lea.vmem %s2, %s569
      %p571 = scmp.lt.s32.totalorder %s25, 1
      %s572 = scalar_select %p571, %s25, 1
      %s573 = smul.addr %s572, 5
      %s574 = scalar_lea.vmem %s3, %s573
      %p575 = scmp.lt.s32.totalorder %s25, 1
      %s576 = scalar_select %p575, %s25, 1
      %s577 = smul.addr %s576, 16
      %s578 = smul.addr %s577, 4
      %s579 = scalar_lea.vmem %s4, %s578
      %p580 = scmp.lt.s32.totalorder %s25, 1
      %s581 = scalar_select %p580, %s25, 1
      %s582 = scalar_lea.vmem %s5, %s581
      %p583 = scmp.lt.s32.totalorder %s25, 1
      %s584 = scalar_select %p583, %s25, 1
      %s585 = scalar_lea.vmem %s6, %s584
      %p586 = scmp.lt.s32.totalorder %s25, 1
      %s587 = scalar_select %p586, %s25, 1
      %s588 = smul.addr %s587, 96
      %s589 = smul.addr %s588, 4
      %s590 = scalar_lea.vmem %s7, %s589
      %p591 = scmp.lt.s32.totalorder %s25, 1
      %s592 = scalar_select %p591, %s25, 1
      %s593 = smul.addr %s592, 6
      %s594 = scalar_lea.vmem %s8, %s593
      %p595 = scmp.lt.s32.totalorder %s25, 1
      %s596 = scalar_select %p595, %s25, 1
      %s597 = smul.addr %s596, 64
      %s598 = smul.addr %s597, 4
      %s599 = scalar_lea.vmem %s9, %s598
      %p600 = scmp.lt.s32.totalorder %s25, 1
      %s601 = scalar_select %p600, %s25, 1
      %s602 = scalar_lea.vmem %s10, %s601
      %p604 = scmp.eq.s32.totalorder %s25, 0
      // Predicated region
      $region77: #{mini_vampnet_forward.1} parent=75 // pred_check
        %p605 = pneg %p604
      $region78: #{mini_vampnet_forward.1} parent=75 // pred_check_branch
        %607 = sbr.rel (%p605) target = $region80
      $region79: #{mini_vampnet_forward.1} parent=75 // pred_region
        %v608 = vld [vmem:[%s0] sm:$0xff]
        %v609 = vld [vmem:[%s0 + $0x8] sm:$0xff]
        %610 = vst [vmem:[#allocation2] sm:$0xff] %v608
        %611 = vst [vmem:[#allocation2 + $0x8] sm:$0xff] %v609
        %vm612 = vcmask 31744
        %613 = vst.msk [vmem:[%s14] sm:$0xff] %vm612, 0
        %614 = vst.msk [vmem:[%s14 + $0x8] sm:$0xff] %vm612, 0
      $region80: #{mini_vampnet_forward.1} parent=75 // pred_fallthru
        _
      %v615 = vld [vmem:[#allocation2] sm:$0xff]
      %v616 = vld [vmem:[#allocation2 + $0x8] sm:$0xff]
      %v617 = vld [vmem:[%s565] sm:$0x1]
      %v618 = vmul.f32 %v615, %v615
      %v619 = vmul.f32 %v616, %v616
      %620 = vadd.xlane.f32.xlu0 %v618
      %v621 = vpop.xlane.xlu0 %620
      %622 = vadd.xlane.f32.xlu0 %v619
      %v623 = vpop.xlane.xlu0 %622
      %v624 = vrcp.pop 128.0
      %v625 = vmul.f32 %v621, %v624
      %v626 = vmul.f32 %v623, %v624
      %v627 = vadd.f32 %v625, 1e-06
      %v628 = vadd.f32 %v626, 1e-06
      %v629 = vrsqrt.pop %v627
      %v630 = vrsqrt.pop %v628
      %v631 = vmul.f32 %v615, %v629
      %v632 = vmul.f32 %v616, %v630
      %v634 = vlaneseq
      %v635 = vshrl.u32 %v634, 7
      %v636 = vsub.s32 0, %v635
      %v637 = vrot.slane %v617, %v636
      %v639 = vmul.f32 %v631, %v637
      %v640 = vmul.f32 %v632, %v637
      %v641 = vpack.c.bf16 %v640, %v639
      %v642 = vld [vmem:[%s570] sm:$0xff]
      %v643 = vld [vmem:[%s570 + $0x8] sm:$0xff]
      %v644 = vld [vmem:[%s570 + $0x10] sm:$0xf]
      %v645 = vld [vmem:[%s570 + $0x14] sm:$0xff]
      %v646 = vld [vmem:[%s570 + $0x1c] sm:$0xff]
      %v647 = vld [vmem:[%s570 + $0x24] sm:$0xf]
      %v648 = vld [vmem:[%s570 + $0x28] sm:$0xff]
      %v649 = vld [vmem:[%s570 + $0x30] sm:$0xff]
      %v650 = vld [vmem:[%s570 + $0x38] sm:$0xf]
      %v651 = vld [vmem:[%s570 + $0x3c] sm:$0xff]
      %v652 = vld [vmem:[%s570 + $0x44] sm:$0xff]
      %v653 = vld [vmem:[%s570 + $0x4c] sm:$0xf]
      %v654 = vld [vmem:[%s570 + $0x50] sm:$0xff]
      %v655 = vld [vmem:[%s570 + $0x58] sm:$0xff]
      %v656 = vld [vmem:[%s570 + $0x60] sm:$0xf]
      %v657 = vld [vmem:[%s570 + $0x64] sm:$0xff]
      %v658 = vld [vmem:[%s570 + $0x6c] sm:$0xff]
      %v659 = vld [vmem:[%s570 + $0x74] sm:$0xf]
      %v660 = vld [vmem:[%s570 + $0x78] sm:$0xff]
      %v661 = vld [vmem:[%s570 + $0x80] sm:$0xff]
      %v662 = vld [vmem:[%s570 + $0x88] sm:$0xf]
      %v663 = vld [vmem:[%s570 + $0x8c] sm:$0xff]
      %v664 = vld [vmem:[%s570 + $0x94] sm:$0xff]
      %v665 = vld [vmem:[%s570 + $0x9c] sm:$0xf]
      %v666 = vld [vmem:[%s570 + $0xa0] sm:$0xff]
      %v667 = vld [vmem:[%s570 + $0xa8] sm:$0xff]
      %v668 = vld [vmem:[%s570 + $0xb0] sm:$0xf]
      %v669 = vld [vmem:[%s570 + $0xb4] sm:$0xff]
      %v670 = vld [vmem:[%s570 + $0xbc] sm:$0xff]
      %v671 = vld [vmem:[%s570 + $0xc4] sm:$0xf]
      %v672 = vld [vmem:[%s570 + $0xc8] sm:$0xff]
      %v673 = vld [vmem:[%s570 + $0xd0] sm:$0xff]
      %v674 = vld [vmem:[%s570 + $0xd8] sm:$0xf]
      %v675 = vld [vmem:[%s570 + $0xdc] sm:$0xff]
      %v676 = vld [vmem:[%s570 + $0xe4] sm:$0xff]
      %v677 = vld [vmem:[%s570 + $0xec] sm:$0xf]
      %v678 = vld [vmem:[%s570 + $0xf0] sm:$0xff]
      %v679 = vld [vmem:[%s570 + $0xf8] sm:$0xff]
      %v680 = vld [vmem:[%s570 + $0x100] sm:$0xf]
      %v681 = vld [vmem:[%s570 + $0x104] sm:$0xff]
      %v682 = vld [vmem:[%s570 + $0x10c] sm:$0xff]
      %v683 = vld [vmem:[%s570 + $0x114] sm:$0xf]
      %v684 = vld [vmem:[%s570 + $0x118] sm:$0xff]
      %v685 = vld [vmem:[%s570 + $0x120] sm:$0xff]
      %v686 = vld [vmem:[%s570 + $0x128] sm:$0xf]
      %v687 = vld [vmem:[%s570 + $0x12c] sm:$0xff]
      %v688 = vld [vmem:[%s570 + $0x134] sm:$0xff]
      %v689 = vld [vmem:[%s570 + $0x13c] sm:$0xf]
      %v690 = vld [vmem:[%s574] sm:$0x1f]
      %v692 = vlaneseq
      %v693 = vshrl.u32 %v692, 7
      %v694 = vsub.s32 0, %v693
      %v695 = vrot.slane %v690, %v694
      %v696 = vlaneseq
      %v697 = vshrl.u32 %v696, 7
      %v698 = vsub.s32 1, %v697
      %v699 = vrot.slane %v690, %v698
      %v700 = vlaneseq
      %v701 = vshrl.u32 %v700, 7
      %v702 = vsub.s32 2, %v701
      %v703 = vrot.slane %v690, %v702
      %v704 = vlaneseq
      %v705 = vshrl.u32 %v704, 7
      %v706 = vsub.s32 3, %v705
      %v707 = vrot.slane %v690, %v706
      %v708 = vlaneseq
      %v709 = vshrl.u32 %v708, 7
      %v710 = vsub.s32 4, %v709
      %v711 = vrot.slane %v690, %v710
      %v765 = vunpack.c.l.b16 %v642
      %v766 = vunpack.c.h.b16 %v642
      %v767 = vunpack.c.l.b16 %v643
      %v768 = vunpack.c.h.b16 %v643
      %v769 = vunpack.c.l.b16 %v644
      %v770 = vunpack.c.l.b16 %v645
      %v771 = vunpack.c.h.b16 %v645
      %v772 = vunpack.c.l.b16 %v646
      %v773 = vunpack.c.h.b16 %v646
      %v774 = vunpack.c.l.b16 %v647
      %v775 = vunpack.c.l.b16 %v648
      %v776 = vunpack.c.h.b16 %v648
      %v777 = vunpack.c.l.b16 %v649
      %v778 = vunpack.c.h.b16 %v649
      %v779 = vunpack.c.l.b16 %v650
      %v780 = vunpack.c.l.b16 %v651
      %v781 = vunpack.c.h.b16 %v651
      %v782 = vunpack.c.l.b16 %v652
      %v783 = vunpack.c.h.b16 %v652
      %v784 = vunpack.c.l.b16 %v653
      %v785 = vunpack.c.l.b16 %v654
      %v786 = vunpack.c.h.b16 %v654
      %v787 = vunpack.c.l.b16 %v655
      %v788 = vunpack.c.h.b16 %v655
      %v789 = vunpack.c.l.b16 %v656
      %v790 = vunpack.c.l.b16 %v657
      %v791 = vunpack.c.h.b16 %v657
      %v792 = vunpack.c.l.b16 %v658
      %v793 = vunpack.c.h.b16 %v658
      %v794 = vunpack.c.l.b16 %v659
      %v795 = vunpack.c.l.b16 %v660
      %v796 = vunpack.c.h.b16 %v660
      %v797 = vunpack.c.l.b16 %v661
      %v798 = vunpack.c.h.b16 %v661
      %v799 = vunpack.c.l.b16 %v662
      %v800 = vunpack.c.l.b16 %v663
      %v801 = vunpack.c.h.b16 %v663
      %v802 = vunpack.c.l.b16 %v664
      %v803 = vunpack.c.h.b16 %v664
      %v804 = vunpack.c.l.b16 %v665
      %v805 = vunpack.c.l.b16 %v666
      %v806 = vunpack.c.h.b16 %v666
      %v807 = vunpack.c.l.b16 %v667
      %v808 = vunpack.c.h.b16 %v667
      %v809 = vunpack.c.l.b16 %v668
      %v810 = vunpack.c.l.b16 %v669
      %v811 = vunpack.c.h.b16 %v669
      %v812 = vunpack.c.l.b16 %v670
      %v813 = vunpack.c.h.b16 %v670
      %v814 = vunpack.c.l.b16 %v671
      %v815 = vunpack.c.l.b16 %v672
      %v816 = vunpack.c.h.b16 %v672
      %v817 = vunpack.c.l.b16 %v673
      %v818 = vunpack.c.h.b16 %v673
      %v819 = vunpack.c.l.b16 %v674
      %v820 = vunpack.c.l.b16 %v675
      %v821 = vunpack.c.h.b16 %v675
      %v822 = vunpack.c.l.b16 %v676
      %v823 = vunpack.c.h.b16 %v676
      %v824 = vunpack.c.l.b16 %v677
      %v825 = vunpack.c.l.b16 %v678
      %v826 = vunpack.c.h.b16 %v678
      %v827 = vunpack.c.l.b16 %v679
      %v828 = vunpack.c.h.b16 %v679
      %v829 = vunpack.c.l.b16 %v680
      %v830 = vunpack.c.l.b16 %v681
      %v831 = vunpack.c.h.b16 %v681
      %v832 = vunpack.c.l.b16 %v682
      %v833 = vunpack.c.h.b16 %v682
      %v834 = vunpack.c.l.b16 %v683
      %v835 = vunpack.c.l.b16 %v684
      %v836 = vunpack.c.h.b16 %v684
      %v837 = vunpack.c.l.b16 %v685
      %v838 = vunpack.c.h.b16 %v685
      %v839 = vunpack.c.l.b16 %v686
      %v840 = vunpack.c.l.b16 %v687
      %v841 = vunpack.c.h.b16 %v687
      %v842 = vunpack.c.l.b16 %v688
      %v843 = vunpack.c.h.b16 %v688
      %v844 = vunpack.c.l.b16 %v689
      %v845 = vpack.c.b16 %v770, %v765
      %v846 = vpack.c.b16 %v771, %v766
      %v847 = vpack.c.b16 %v772, %v767
      %v848 = vpack.c.b16 %v773, %v768
      %v849 = vpack.c.b16 %v774, %v769
      %v850 = vpack.c.b16 %v780, %v775
      %v851 = vpack.c.b16 %v781, %v776
      %v852 = vpack.c.b16 %v782, %v777
      %v853 = vpack.c.b16 %v783, %v778
      %v854 = vpack.c.b16 %v784, %v779
      %v855 = vpack.c.b16 %v790, %v785
      %v856 = vpack.c.b16 %v791, %v786
      %v857 = vpack.c.b16 %v792, %v787
      %v858 = vpack.c.b16 %v793, %v788
      %v859 = vpack.c.b16 %v794, %v789
      %v860 = vpack.c.b16 %v800, %v795
      %v861 = vpack.c.b16 %v801, %v796
      %v862 = vpack.c.b16 %v802, %v797
      %v863 = vpack.c.b16 %v803, %v798
      %v864 = vpack.c.b16 %v804, %v799
      %v865 = vpack.c.b16 %v810, %v805
      %v866 = vpack.c.b16 %v811, %v806
      %v867 = vpack.c.b16 %v812, %v807
      %v868 = vpack.c.b16 %v813, %v808
      %v869 = vpack.c.b16 %v814, %v809
      %v870 = vpack.c.b16 %v820, %v815
      %v871 = vpack.c.b16 %v821, %v816
      %v872 = vpack.c.b16 %v822, %v817
      %v873 = vpack.c.b16 %v823, %v818
      %v874 = vpack.c.b16 %v824, %v819
      %v875 = vpack.c.b16 %v830, %v825
      %v876 = vpack.c.b16 %v831, %v826
      %v877 = vpack.c.b16 %v832, %v827
      %v878 = vpack.c.b16 %v833, %v828
      %v879 = vpack.c.b16 %v834, %v829
      %v880 = vpack.c.b16 %v840, %v835
      %v881 = vpack.c.b16 %v841, %v836
      %v882 = vpack.c.b16 %v842, %v837
      %v883 = vpack.c.b16 %v843, %v838
      %v884 = vpack.c.b16 %v844, %v839
      %925 = vmatprep.subr.bf16.mxu0 %v846
      %926 = vmatpush1.bf16.msra.mxu0 %v845
      %927 = vmatprep.subr.bf16.mxu0 %v851
      %928 = vmatpush1.bf16.msra.mxu0 %v850
      %929 = vmatprep.subr.bf16.mxu0 %v856
      %930 = vmatpush1.bf16.msra.mxu0 %v855
      %931 = vmatprep.subr.bf16.mxu0 %v861
      %932 = vmatpush1.bf16.msra.mxu0 %v860
      %933 = vmatprep.subr.bf16.mxu0 %v866
      %934 = vmatpush1.bf16.msra.mxu0 %v865
      %935 = vmatprep.subr.bf16.mxu0 %v871
      %936 = vmatpush1.bf16.msra.mxu0 %v870
      %937 = vmatprep.subr.bf16.mxu0 %v876
      %938 = vmatpush1.bf16.msra.mxu0 %v875
      %939 = vmatprep.subr.bf16.mxu0 %v881
      %940 = vmatpush1.bf16.msra.mxu0 %v880
      %941 = vmatprep.subr.bf16.mxu0 0
      %942 = vmatpush1.bf16.msra.mxu0 0
      %943 = vmatprep.subr.bf16.mxu0 0
      %944 = vmatpush1.bf16.msra.mxu0 0
      %945 = vmatprep.subr.bf16.mxu0 0
      %946 = vmatpush1.bf16.msra.mxu0 0
      %947 = vmatprep.subr.bf16.mxu0 0
      %948 = vmatpush1.bf16.msra.mxu0 0
      %949 = vmatprep.subr.bf16.mxu0 0
      %950 = vmatpush1.bf16.msra.mxu0 0
      %951 = vmatprep.subr.bf16.mxu0 0
      %952 = vmatpush1.bf16.msra.mxu0 0
      %953 = vmatprep.subr.bf16.mxu0 0
      %954 = vmatpush1.bf16.msra.mxu0 0
      %955 = vmatprep.subr.bf16.mxu0 0
      %956 = vmatpush1.bf16.msra.mxu0 0
      %957 = vmatprep.mubr.bf16.mxu0 0
      %958 = vmatmul.mubr.bf16.gmra.mrb[0].mxu0 %v641
      %v959 = vpop.f32.mrb[0].mxu0
      %v960 = vadd.f32 %v695, %v959
      %v961 = vpop.f32.mrb[0].mxu0
      %v962 = vadd.f32 %v699, %v961
      %v963 = vpop.f32.mrb[0].mxu0
      %v964 = vadd.f32 %v695, %v963
      %v965 = vpop.f32.mrb[0].mxu0
      %v966 = vadd.f32 %v699, %v965
      %967 = vdwg.mxu0
      %968 = vmatprep.subr.bf16.mxu0 %v848
      %969 = vmatpush1.bf16.msra.mxu0 %v847
      %970 = vmatprep.subr.bf16.mxu0 %v853
      %971 = vmatpush1.bf16.msra.mxu0 %v852
      %972 = vmatprep.subr.bf16.mxu0 %v858
      %973 = vmatpush1.bf16.msra.mxu0 %v857
      %974 = vmatprep.subr.bf16.mxu0 %v863
      %975 = vmatpush1.bf16.msra.mxu0 %v862
      %976 = vmatprep.subr.bf16.mxu0 %v868
      %977 = vmatpush1.bf16.msra.mxu0 %v867
      %978 = vmatprep.subr.bf16.mxu0 %v873
      %979 = vmatpush1.bf16.msra.mxu0 %v872
      %980 = vmatprep.subr.bf16.mxu0 %v878
      %981 = vmatpush1.bf16.msra.mxu0 %v877
      %982 = vmatprep.subr.bf16.mxu0 %v883
      %983 = vmatpush1.bf16.msra.mxu0 %v882
      %984 = vmatprep.subr.bf16.mxu0 0
      %985 = vmatpush1.bf16.msra.mxu0 0
      %986 = vmatprep.subr.bf16.mxu0 0
      %987 = vmatpush1.bf16.msra.mxu0 0
      %988 = vmatprep.subr.bf16.mxu0 0
      %989 = vmatpush1.bf16.msra.mxu0 0
      %990 = vmatprep.subr.bf16.mxu0 0
      %991 = vmatpush1.bf16.msra.mxu0 0
      %992 = vmatprep.subr.bf16.mxu0 0
      %993 = vmatpush1.bf16.msra.mxu0 0
      %994 = vmatprep.subr.bf16.mxu0 0
      %995 = vmatpush1.bf16.msra.mxu0 0
      %996 = vmatprep.subr.bf16.mxu0 0
      %997 = vmatpush1.bf16.msra.mxu0 0
      %998 = vmatprep.subr.bf16.mxu0 0
      %999 = vmatpush1.bf16.msra.mxu0 0
      %1000 = vmatprep.mubr.bf16.mxu0 0
      %1001 = vmatmul.mubr.bf16.gmra.mrb[0].mxu0 %v641
      %v1002 = vpop.f32.mrb[0].mxu0
      %v1003 = vadd.f32 %v703, %v1002
      %v1004 = vpop.f32.mrb[0].mxu0
      %v1005 = vadd.f32 %v707, %v1004
      %v1006 = vpop.f32.mrb[0].mxu0
      %v1007 = vadd.f32 %v703, %v1006
      %v1008 = vpop.f32.mrb[0].mxu0
      %v1009 = vadd.f32 %v707, %v1008
      %1010 = vdwg.mxu0
      %1011 = vmatprep.subr.bf16.mxu0 0
      %1012 = vmatpush1.bf16.msra.mxu0 %v849
      %1013 = vmatprep.subr.bf16.mxu0 0
      %1014 = vmatpush1.bf16.msra.mxu0 %v854
      %1015 = vmatprep.subr.bf16.mxu0 0
      %1016 = vmatpush1.bf16.msra.mxu0 %v859
      %1017 = vmatprep.subr.bf16.mxu0 0
      %1018 = vmatpush1.bf16.msra.mxu0 %v864
      %1019 = vmatprep.subr.bf16.mxu0 0
      %1020 = vmatpush1.bf16.msra.mxu0 %v869
      %1021 = vmatprep.subr.bf16.mxu0 0
      %1022 = vmatpush1.bf16.msra.mxu0 %v874
      %1023 = vmatprep.subr.bf16.mxu0 0
      %1024 = vmatpush1.bf16.msra.mxu0 %v879
      %1025 = vmatprep.subr.bf16.mxu0 0
      %1026 = vmatpush1.bf16.msra.mxu0 %v884
      %1027 = vmatprep.subr.bf16.mxu0 0
      %1028 = vmatpush1.bf16.msra.mxu0 0
      %1029 = vmatprep.subr.bf16.mxu0 0
      %1030 = vmatpush1.bf16.msra.mxu0 0
      %1031 = vmatprep.subr.bf16.mxu0 0
      %1032 = vmatpush1.bf16.msra.mxu0 0
      %1033 = vmatprep.subr.bf16.mxu0 0
      %1034 = vmatpush1.bf16.msra.mxu0 0
      %1035 = vmatprep.subr.bf16.mxu0 0
      %1036 = vmatpush1.bf16.msra.mxu0 0
      %1037 = vmatprep.subr.bf16.mxu0 0
      %1038 = vmatpush1.bf16.msra.mxu0 0
      %1039 = vmatprep.subr.bf16.mxu0 0
      %1040 = vmatpush1.bf16.msra.mxu0 0
      %1041 = vmatprep.subr.bf16.mxu0 0
      %1042 = vmatpush1.bf16.msra.mxu0 0
      %1043 = vmatprep.mubr.bf16.mxu0 0
      %1044 = vmatmul.mubr.bf16.gmra.mrb[0].mxu0 %v641
      %v1045 = vpop.f32.mrb[0].mxu0
      %v1046 = vadd.f32 %v711, %v1045
      %v1047 = vpop.f32.mrb[0].mxu0
      %v1048 = vpop.f32.mrb[0].mxu0
      %v1049 = vadd.f32 %v711, %v1048
      %v1050 = vpop.f32.mrb[0].mxu0
      %1051 = vdwg.mxu0
      %v1052 = vmul.f32 %v960, 0.17677669
      %v1053 = vmul.f32 %v964, 0.17677669
      %1055 = vrot.lane.b32.xlu0 %v1052, 96
      %v1056 = vpop.permute.xlu0 %1055
      %1058 = vrot.lane.b32.xlu0 %v1052, 64
      %v1059 = vpop.permute.xlu0 %1058
      %1061 = vrot.lane.b32.xlu0 %v1052, 32
      %v1062 = vpop.permute.xlu0 %1061
      %v1064 = vcombine.low %v1052, %v1059
      %v1065 = vcombine.high %v1052, %v1059
      %v1067 = vunpack.c.l.s4 1983009808
      %v1068 = vunpack.c.0.s8 %v1067
      %v1069 = vlaneseq
      %v1070 = vshrl.u32 %v1069, 7
      %v1071 = vsub.s32 %v1068, %v1070
      %v1072 = vrot.slane %v1064, %v1071
      %v1074 = vunpack.c.l.s4 1983009808
      %v1075 = vunpack.c.0.s8 %v1074
      %v1076 = vlaneseq
      %v1077 = vshrl.u32 %v1076, 7
      %v1078 = vsub.s32 %v1075, %v1077
      %v1079 = vrot.slane %v1065, %v1078
      %v1080 = vcombine.low %v1056, %v1062
      %v1081 = vcombine.high %v1056, %v1062
      %v1083 = vunpack.c.l.s4 1983009808
      %v1084 = vunpack.c.0.s8 %v1083
      %v1085 = vlaneseq
      %v1086 = vshrl.u32 %v1085, 7
      %v1087 = vsub.s32 %v1084, %v1086
      %v1088 = vrot.slane %v1080, %v1087
      %v1090 = vunpack.c.l.s4 1983009808
      %v1091 = vunpack.c.0.s8 %v1090
      %v1092 = vlaneseq
      %v1093 = vshrl.u32 %v1092, 7
      %v1094 = vsub.s32 %v1091, %v1093
      %v1095 = vrot.slane %v1081, %v1094
      %v1096 = vcombine.low %v1072, %v1088
      %v1097 = vcombine.high %v1072, %v1088
      %v1099 = vunpack.c.l.s4 1934713408
      %v1100 = vunpack.c.0.s8 %v1099
      %v1101 = vlaneseq
      %v1102 = vshrl.u32 %v1101, 7
      %v1103 = vsub.s32 %v1100, %v1102
      %v1104 = vrot.slane %v1096, %v1103
      %v1106 = vunpack.c.l.s4 1934713408
      %v1107 = vunpack.c.0.s8 %v1106
      %v1108 = vlaneseq
      %v1109 = vshrl.u32 %v1108, 7
      %v1110 = vsub.s32 %v1107, %v1109
      %v1111 = vrot.slane %v1097, %v1110
      %v1112 = vcombine.low %v1079, %v1095
      %v1113 = vcombine.high %v1079, %v1095
      %v1115 = vunpack.c.l.s4 1934713408
      %v1116 = vunpack.c.0.s8 %v1115
      %v1117 = vlaneseq
      %v1118 = vshrl.u32 %v1117, 7
      %v1119 = vsub.s32 %v1116, %v1118
      %v1120 = vrot.slane %v1112, %v1119
      %v1122 = vunpack.c.l.s4 1934713408
      %v1123 = vunpack.c.0.s8 %v1122
      %v1124 = vlaneseq
      %v1125 = vshrl.u32 %v1124, 7
      %v1126 = vsub.s32 %v1123, %v1125
      %v1127 = vrot.slane %v1113, %v1126
      %v1128 = vcombine.high %v1104, 0.0
      %v1129 = vcombine.high %v1111, 0.0
      %v1130 = vcombine.high %v1120, 0.0
      %v1131 = vcombine.high %v1127, 0.0
      %v1132 = vcombine.low %v1104, %v1111
      %v1134 = vunpack.c.l.s4 1983009808
      %v1135 = vunpack.c.0.s8 %v1134
      %v1136 = vlaneseq
      %v1137 = vshrl.u32 %v1136, 7
      %v1138 = vsub.s32 %v1135, %v1137
      %v1139 = vrot.slane %v1132, %v1138
      %v1140 = vcombine.low %v1128, %v1129
      %v1142 = vunpack.c.l.s4 1983009808
      %v1143 = vunpack.c.0.s8 %v1142
      %v1144 = vlaneseq
      %v1145 = vshrl.u32 %v1144, 7
      %v1146 = vsub.s32 %v1143, %v1145
      %v1147 = vrot.slane %v1140, %v1146
      %v1148 = vcombine.low %v1120, %v1127
      %v1150 = vunpack.c.l.s4 1983009808
      %v1151 = vunpack.c.0.s8 %v1150
      %v1152 = vlaneseq
      %v1153 = vshrl.u32 %v1152, 7
      %v1154 = vsub.s32 %v1151, %v1153
      %v1155 = vrot.slane %v1148, %v1154
      %v1156 = vcombine.low %v1130, %v1131
      %v1158 = vunpack.c.l.s4 1983009808
      %v1159 = vunpack.c.0.s8 %v1158
      %v1160 = vlaneseq
      %v1161 = vshrl.u32 %v1160, 7
      %v1162 = vsub.s32 %v1159, %v1161
      %v1163 = vrot.slane %v1156, %v1162
      %v1164 = vcombine.low %v1139, %v1147
      %v1165 = vcombine.high %v1139, %v1147
      %v1167 = vunpack.c.l.s4 1934713408
      %v1168 = vunpack.c.0.s8 %v1167
      %v1169 = vlaneseq
      %v1170 = vshrl.u32 %v1169, 7
      %v1171 = vsub.s32 %v1168, %v1170
      %v1172 = vrot.slane %v1164, %v1171
      %v1174 = vunpack.c.l.s4 1934713408
      %v1175 = vunpack.c.0.s8 %v1174
      %v1176 = vlaneseq
      %v1177 = vshrl.u32 %v1176, 7
      %v1178 = vsub.s32 %v1175, %v1177
      %v1179 = vrot.slane %v1165, %v1178
      %v1180 = vcombine.low %v1155, %v1163
      %v1181 = vcombine.high %v1155, %v1163
      %v1183 = vunpack.c.l.s4 1934713408
      %v1184 = vunpack.c.0.s8 %v1183
      %v1185 = vlaneseq
      %v1186 = vshrl.u32 %v1185, 7
      %v1187 = vsub.s32 %v1184, %v1186
      %v1188 = vrot.slane %v1180, %v1187
      %v1190 = vunpack.c.l.s4 1934713408
      %v1191 = vunpack.c.0.s8 %v1190
      %v1192 = vlaneseq
      %v1193 = vshrl.u32 %v1192, 7
      %v1194 = vsub.s32 %v1191, %v1193
      %v1195 = vrot.slane %v1181, %v1194
      %v1196 = vcombine.low %v1172, %v1188
      %v1197 = vcombine.high %v1172, %v1188
      %v1198 = vcombine.low %v1179, %v1195
      %v1199 = vcombine.high %v1179, %v1195
      %v1200 = vpack.c.bf16 %v1196, %v1196
      %v1201 = vpack.c.bf16 %v1197, %v1197
      %v1202 = vpack.c.bf16 %v1198, %v1198
      %v1203 = vpack.c.bf16 %v1199, %v1199
      %1205 = vrot.lane.b32.xlu0 %v962, 96
      %v1206 = vpop.permute.xlu0 %1205
      %1208 = vrot.lane.b32.xlu0 %v962, 64
      %v1209 = vpop.permute.xlu0 %1208
      %1211 = vrot.lane.b32.xlu0 %v962, 32
      %v1212 = vpop.permute.xlu0 %1211
      %v1214 = vcombine.low %v962, %v1209
      %v1215 = vcombine.high %v962, %v1209
      %v1217 = vunpack.c.l.s4 1983009808
      %v1218 = vunpack.c.0.s8 %v1217
      %v1219 = vlaneseq
      %v1220 = vshrl.u32 %v1219, 7
      %v1221 = vsub.s32 %v1218, %v1220
      %v1222 = vrot.slane %v1214, %v1221
      %v1224 = vunpack.c.l.s4 1983009808
      %v1225 = vunpack.c.0.s8 %v1224
      %v1226 = vlaneseq
      %v1227 = vshrl.u32 %v1226, 7
      %v1228 = vsub.s32 %v1225, %v1227
      %v1229 = vrot.slane %v1215, %v1228
      %v1230 = vcombine.low %v1206, %v1212
      %v1231 = vcombine.high %v1206, %v1212
      %v1233 = vunpack.c.l.s4 1983009808
      %v1234 = vunpack.c.0.s8 %v1233
      %v1235 = vlaneseq
      %v1236 = vshrl.u32 %v1235, 7
      %v1237 = vsub.s32 %v1234, %v1236
      %v1238 = vrot.slane %v1230, %v1237
      %v1240 = vunpack.c.l.s4 1983009808
      %v1241 = vunpack.c.0.s8 %v1240
      %v1242 = vlaneseq
      %v1243 = vshrl.u32 %v1242, 7
      %v1244 = vsub.s32 %v1241, %v1243
      %v1245 = vrot.slane %v1231, %v1244
      %v1246 = vcombine.low %v1222, %v1238
      %v1247 = vcombine.high %v1222, %v1238
      %v1249 = vunpack.c.l.s4 1934713408
      %v1250 = vunpack.c.0.s8 %v1249
      %v1251 = vlaneseq
      %v1252 = vshrl.u32 %v1251, 7
      %v1253 = vsub.s32 %v1250, %v1252
      %v1254 = vrot.slane %v1246, %v1253
      %v1256 = vunpack.c.l.s4 1934713408
      %v1257 = vunpack.c.0.s8 %v1256
      %v1258 = vlaneseq
      %v1259 = vshrl.u32 %v1258, 7
      %v1260 = vsub.s32 %v1257, %v1259
      %v1261 = vrot.slane %v1247, %v1260
      %v1262 = vcombine.low %v1229, %v1245
      %v1263 = vcombine.high %v1229, %v1245
      %v1265 = vunpack.c.l.s4 1934713408
      %v1266 = vunpack.c.0.s8 %v1265
      %v1267 = vlaneseq
      %v1268 = vshrl.u32 %v1267, 7
      %v1269 = vsub.s32 %v1266, %v1268
      %v1270 = vrot.slane %v1262, %v1269
      %v1272 = vunpack.c.l.s4 1934713408
      %v1273 = vunpack.c.0.s8 %v1272
      %v1274 = vlaneseq
      %v1275 = vshrl.u32 %v1274, 7
      %v1276 = vsub.s32 %v1273, %v1275
      %v1277 = vrot.slane %v1263, %v1276
      %v1278 = vcombine.high %v1254, 0.0
      %v1279 = vcombine.high %v1261, 0.0
      %v1280 = vcombine.high %v1270, 0.0
      %v1281 = vcombine.high %v1277, 0.0
      %v1282 = vcombine.low %v1254, %v1261
      %v1284 = vunpack.c.l.s4 1983009808
      %v1285 = vunpack.c.0.s8 %v1284
      %v1286 = vlaneseq
      %v1287 = vshrl.u32 %v1286, 7
      %v1288 = vsub.s32 %v1285, %v1287
      %v1289 = vrot.slane %v1282, %v1288
      %v1290 = vcombine.low %v1278, %v1279
      %v1292 = vunpack.c.l.s4 1983009808
      %v1293 = vunpack.c.0.s8 %v1292
      %v1294 = vlaneseq
      %v1295 = vshrl.u32 %v1294, 7
      %v1296 = vsub.s32 %v1293, %v1295
      %v1297 = vrot.slane %v1290, %v1296
      %v1298 = vcombine.low %v1270, %v1277
      %v1300 = vunpack.c.l.s4 1983009808
      %v1301 = vunpack.c.0.s8 %v1300
      %v1302 = vlaneseq
      %v1303 = vshrl.u32 %v1302, 7
      %v1304 = vsub.s32 %v1301, %v1303
      %v1305 = vrot.slane %v1298, %v1304
      %v1306 = vcombine.low %v1280, %v1281
      %v1308 = vunpack.c.l.s4 1983009808
      %v1309 = vunpack.c.0.s8 %v1308
      %v1310 = vlaneseq
      %v1311 = vshrl.u32 %v1310, 7
      %v1312 = vsub.s32 %v1309, %v1311
      %v1313 = vrot.slane %v1306, %v1312
      %v1314 = vcombine.low %v1289, %v1297
      %v1315 = vcombine.high %v1289, %v1297
      %v1317 = vunpack.c.l.s4 1934713408
      %v1318 = vunpack.c.0.s8 %v1317
      %v1319 = vlaneseq
      %v1320 = vshrl.u32 %v1319, 7
      %v1321 = vsub.s32 %v1318, %v1320
      %v1322 = vrot.slane %v1314, %v1321
      %v1324 = vunpack.c.l.s4 1934713408
      %v1325 = vunpack.c.0.s8 %v1324
      %v1326 = vlaneseq
      %v1327 = vshrl.u32 %v1326, 7
      %v1328 = vsub.s32 %v1325, %v1327
      %v1329 = vrot.slane %v1315, %v1328
      %v1330 = vcombine.low %v1305, %v1313
      %v1331 = vcombine.high %v1305, %v1313
      %v1333 = vunpack.c.l.s4 1934713408
      %v1334 = vunpack.c.0.s8 %v1333
      %v1335 = vlaneseq
      %v1336 = vshrl.u32 %v1335, 7
      %v1337 = vsub.s32 %v1334, %v1336
      %v1338 = vrot.slane %v1330, %v1337
      %v1340 = vunpack.c.l.s4 1934713408
      %v1341 = vunpack.c.0.s8 %v1340
      %v1342 = vlaneseq
      %v1343 = vshrl.u32 %v1342, 7
      %v1344 = vsub.s32 %v1341, %v1343
      %v1345 = vrot.slane %v1331, %v1344
      %v1346 = vcombine.low %v1322, %v1338
      %v1347 = vcombine.high %v1322, %v1338
      %v1348 = vcombine.low %v1329, %v1345
      %v1349 = vcombine.high %v1329, %v1345
      %v1350 = vpack.c.bf16 %v1346, %v1346
      %v1351 = vpack.c.bf16 %v1347, %v1347
      %v1352 = vpack.c.bf16 %v1348, %v1348
      %v1353 = vpack.c.bf16 %v1349, %v1349
      %1355 = vrot.lane.b32.xlu0 %v1003, 96
      %v1356 = vpop.permute.xlu0 %1355
      %1358 = vrot.lane.b32.xlu0 %v1003, 64
      %v1359 = vpop.permute.xlu0 %1358
      %1361 = vrot.lane.b32.xlu0 %v1003, 32
      %v1362 = vpop.permute.xlu0 %1361
      %v1364 = vcombine.low %v1003, %v1359
      %v1365 = vcombine.high %v1003, %v1359
      %v1367 = vunpack.c.l.s4 1983009808
      %v1368 = vunpack.c.0.s8 %v1367
      %v1369 = vlaneseq
      %v1370 = vshrl.u32 %v1369, 7
      %v1371 = vsub.s32 %v1368, %v1370
      %v1372 = vrot.slane %v1364, %v1371
      %v1374 = vunpack.c.l.s4 1983009808
      %v1375 = vunpack.c.0.s8 %v1374
      %v1376 = vlaneseq
      %v1377 = vshrl.u32 %v1376, 7
      %v1378 = vsub.s32 %v1375, %v1377
      %v1379 = vrot.slane %v1365, %v1378
      %v1380 = vcombine.low %v1356, %v1362
      %v1381 = vcombine.high %v1356, %v1362
      %v1383 = vunpack.c.l.s4 1983009808
      %v1384 = vunpack.c.0.s8 %v1383
      %v1385 = vlaneseq
      %v1386 = vshrl.u32 %v1385, 7
      %v1387 = vsub.s32 %v1384, %v1386
      %v1388 = vrot.slane %v1380, %v1387
      %v1390 = vunpack.c.l.s4 1983009808
      %v1391 = vunpack.c.0.s8 %v1390
      %v1392 = vlaneseq
      %v1393 = vshrl.u32 %v1392, 7
      %v1394 = vsub.s32 %v1391, %v1393
      %v1395 = vrot.slane %v1381, %v1394
      %v1396 = vcombine.low %v1372, %v1388
      %v1397 = vcombine.high %v1372, %v1388
      %v1399 = vunpack.c.l.s4 1934713408
      %v1400 = vunpack.c.0.s8 %v1399
      %v1401 = vlaneseq
      %v1402 = vshrl.u32 %v1401, 7
      %v1403 = vsub.s32 %v1400, %v1402
      %v1404 = vrot.slane %v1396, %v1403
      %v1406 = vunpack.c.l.s4 1934713408
      %v1407 = vunpack.c.0.s8 %v1406
      %v1408 = vlaneseq
      %v1409 = vshrl.u32 %v1408, 7
      %v1410 = vsub.s32 %v1407, %v1409
      %v1411 = vrot.slane %v1397, %v1410
      %v1412 = vcombine.low %v1379, %v1395
      %v1413 = vcombine.high %v1379, %v1395
      %v1415 = vunpack.c.l.s4 1934713408
      %v1416 = vunpack.c.0.s8 %v1415
      %v1417 = vlaneseq
      %v1418 = vshrl.u32 %v1417, 7
      %v1419 = vsub.s32 %v1416, %v1418
      %v1420 = vrot.slane %v1412, %v1419
      %v1422 = vunpack.c.l.s4 1934713408
      %v1423 = vunpack.c.0.s8 %v1422
      %v1424 = vlaneseq
      %v1425 = vshrl.u32 %v1424, 7
      %v1426 = vsub.s32 %v1423, %v1425
      %v1427 = vrot.slane %v1413, %v1426
      %v1428 = vcombine.high %v1404, 0.0
      %v1429 = vcombine.high %v1411, 0.0
      %v1430 = vcombine.high %v1420, 0.0
      %v1431 = vcombine.high %v1427, 0.0
      %v1432 = vcombine.low %v1404, %v1411
      %v1434 = vunpack.c.l.s4 1983009808
      %v1435 = vunpack.c.0.s8 %v1434
      %v1436 = vlaneseq
      %v1437 = vshrl.u32 %v1436, 7
      %v1438 = vsub.s32 %v1435, %v1437
      %v1439 = vrot.slane %v1432, %v1438
      %v1440 = vcombine.low %v1428, %v1429
      %v1442 = vunpack.c.l.s4 1983009808
      %v1443 = vunpack.c.0.s8 %v1442
      %v1444 = vlaneseq
      %v1445 = vshrl.u32 %v1444, 7
      %v1446 = vsub.s32 %v1443, %v1445
      %v1447 = vrot.slane %v1440, %v1446
      %v1448 = vcombine.low %v1420, %v1427
      %v1450 = vunpack.c.l.s4 1983009808
      %v1451 = vunpack.c.0.s8 %v1450
      %v1452 = vlaneseq
      %v1453 = vshrl.u32 %v1452, 7
      %v1454 = vsub.s32 %v1451, %v1453
      %v1455 = vrot.slane %v1448, %v1454
      %v1456 = vcombine.low %v1430, %v1431
      %v1458 = vunpack.c.l.s4 1983009808
      %v1459 = vunpack.c.0.s8 %v1458
      %v1460 = vlaneseq
      %v1461 = vshrl.u32 %v1460, 7
      %v1462 = vsub.s32 %v1459, %v1461
      %v1463 = vrot.slane %v1456, %v1462
      %v1464 = vcombine.low %v1439, %v1447
      %v1465 = vcombine.high %v1439, %v1447
      %v1467 = vunpack.c.l.s4 1934713408
      %v1468 = vunpack.c.0.s8 %v1467
      %v1469 = vlaneseq
      %v1470 = vshrl.u32 %v1469, 7
      %v1471 = vsub.s32 %v1468, %v1470
      %v1472 = vrot.slane %v1464, %v1471
      %v1474 = vunpack.c.l.s4 1934713408
      %v1475 = vunpack.c.0.s8 %v1474
      %v1476 = vlaneseq
      %v1477 = vshrl.u32 %v1476, 7
      %v1478 = vsub.s32 %v1475, %v1477
      %v1479 = vrot.slane %v1465, %v1478
      %v1480 = vcombine.low %v1455, %v1463
      %v1481 = vcombine.high %v1455, %v1463
      %v1483 = vunpack.c.l.s4 1934713408
      %v1484 = vunpack.c.0.s8 %v1483
      %v1485 = vlaneseq
      %v1486 = vshrl.u32 %v1485, 7
      %v1487 = vsub.s32 %v1484, %v1486
      %v1488 = vrot.slane %v1480, %v1487
      %v1490 = vunpack.c.l.s4 1934713408
      %v1491 = vunpack.c.0.s8 %v1490
      %v1492 = vlaneseq
      %v1493 = vshrl.u32 %v1492, 7
      %v1494 = vsub.s32 %v1491, %v1493
      %v1495 = vrot.slane %v1481, %v1494
      %v1496 = vcombine.low %v1472, %v1488
      %v1497 = vcombine.high %v1472, %v1488
      %v1498 = vcombine.low %v1479, %v1495
      %v1499 = vcombine.high %v1479, %v1495
      %v1500 = vpack.c.bf16 %v1496, %v1496
      %v1501 = vpack.c.bf16 %v1497, %v1497
      %v1502 = vpack.c.bf16 %v1498, %v1498
      %v1503 = vpack.c.bf16 %v1499, %v1499
      %vm1504 = vcmask 261120
      %v1506 = vsel %vm1504, %v1200, 0
      %v1509 = vsel %vm1504, %v1350, 0
      %1511 = vmatprep.subr.bf16.mxu0 0
      %1512 = vmatpush1.bf16.xpose.msra.mxu0 %v1509
      %1513 = vmatprep.subr.bf16.mxu0 0
      %1514 = vmatpush1.bf16.xpose.msra.mxu0 0
      %1515 = vmatprep.subr.bf16.mxu0 0
      %1516 = vmatpush1.bf16.xpose.msra.mxu0 0
      %1517 = vmatprep.subr.bf16.mxu0 0
      %1518 = vmatpush1.bf16.xpose.msra.mxu0 0
      %1519 = vmatprep.subr.bf16.mxu0 0
      %1520 = vmatpush1.bf16.xpose.msra.mxu0 0
      %1521 = vmatprep.subr.bf16.mxu0 0
      %1522 = vmatpush1.bf16.xpose.msra.mxu0 0
      %1523 = vmatprep.subr.bf16.mxu0 0
      %1524 = vmatpush1.bf16.xpose.msra.mxu0 0
      %1525 = vmatprep.subr.bf16.mxu0 0
      %1526 = vmatpush1.bf16.xpose.msra.mxu0 0
      %1527 = vmatprep.subr.bf16.mxu0 0
      %1528 = vmatpush1.bf16.xpose.msra.mxu0 0
      %1529 = vmatprep.subr.bf16.mxu0 0
      %1530 = vmatpush1.bf16.xpose.msra.mxu0 0
      %1531 = vmatprep.subr.bf16.mxu0 0
      %1532 = vmatpush1.bf16.xpose.msra.mxu0 0
      %1533 = vmatprep.subr.bf16.mxu0 0
      %1534 = vmatpush1.bf16.xpose.msra.mxu0 0
      %1535 = vmatprep.subr.bf16.mxu0 0
      %1536 = vmatpush1.bf16.xpose.msra.mxu0 0
      %1537 = vmatprep.subr.bf16.mxu0 0
      %1538 = vmatpush1.bf16.xpose.msra.mxu0 0
      %1539 = vmatprep.subr.bf16.mxu0 0
      %1540 = vmatpush1.bf16.xpose.msra.mxu0 0
      %1541 = vmatprep.subr.bf16.mxu0 0
      %1542 = vmatpush1.bf16.xpose.msra.mxu0 0
      %1543 = vmatprep.mubr.bf16.mxu0 0
      %1544 = vmatmul.mubr.bf16.gmra.mrb[0].mxu0 %v1506
      %v1545 = vpop.f32.mrb[0].mxu0
      %v1546 = vadd.f32 0.0, %v1545
      %v1547 = vpop.f32.mrb[0].mxu0
      %v1548 = vpop.f32.mrb[0].mxu0
      %v1549 = vpop.f32.mrb[0].mxu0
      %1550 = vdwg.mxu0
      %v1552 = vsel %vm1504, %v1201, 0
      %v1555 = vsel %vm1504, %v1351, 0
      %1557 = vmatprep.subr.bf16.mxu0 0
      %1558 = vmatpush1.bf16.xpose.msra.mxu0 %v1555
      %1559 = vmatprep.subr.bf16.mxu0 0
      %1560 = vmatpush1.bf16.xpose.msra.mxu0 0
      %1561 = vmatprep.subr.bf16.mxu0 0
      %1562 = vmatpush1.bf16.xpose.msra.mxu0 0
      %1563 = vmatprep.subr.bf16.mxu0 0
      %1564 = vmatpush1.bf16.xpose.msra.mxu0 0
      %1565 = vmatprep.subr.bf16.mxu0 0
      %1566 = vmatpush1.bf16.xpose.msra.mxu0 0
      %1567 = vmatprep.subr.bf16.mxu0 0
      %1568 = vmatpush1.bf16.xpose.msra.mxu0 0
      %1569 = vmatprep.subr.bf16.mxu0 0
      %1570 = vmatpush1.bf16.xpose.msra.mxu0 0
      %1571 = vmatprep.subr.bf16.mxu0 0
      %1572 = vmatpush1.bf16.xpose.msra.mxu0 0
      %1573 = vmatprep.subr.bf16.mxu0 0
      %1574 = vmatpush1.bf16.xpose.msra.mxu0 0
      %1575 = vmatprep.subr.bf16.mxu0 0
      %1576 = vmatpush1.bf16.xpose.msra.mxu0 0
      %1577 = vmatprep.subr.bf16.mxu0 0
      %1578 = vmatpush1.bf16.xpose.msra.mxu0 0
      %1579 = vmatprep.subr.bf16.mxu0 0
      %1580 = vmatpush1.bf16.xpose.msra.mxu0 0
      %1581 = vmatprep.subr.bf16.mxu0 0
      %1582 = vmatpush1.bf16.xpose.msra.mxu0 0
      %1583 = vmatprep.subr.bf16.mxu0 0
      %1584 = vmatpush1.bf16.xpose.msra.mxu0 0
      %1585 = vmatprep.subr.bf16.mxu0 0
      %1586 = vmatpush1.bf16.xpose.msra.mxu0 0
      %1587 = vmatprep.subr.bf16.mxu0 0
      %1588 = vmatpush1.bf16.xpose.msra.mxu0 0
      %1589 = vmatprep.mubr.bf16.mxu0 0
      %1590 = vmatmul.mubr.bf16.gmra.mrb[0].mxu0 %v1552
      %v1591 = vpop.f32.mrb[0].mxu0
      %v1592 = vadd.f32 0.0, %v1591
      %v1593 = vpop.f32.mrb[0].mxu0
      %v1594 = vpop.f32.mrb[0].mxu0
      %v1595 = vpop.f32.mrb[0].mxu0
      %1596 = vdwg.mxu0
      %v1598 = vsel %vm1504, %v1202, 0
      %v1601 = vsel %vm1504, %v1352, 0
      %1603 = vmatprep.subr.bf16.mxu0 0
      %1604 = vmatpush1.bf16.xpose.msra.mxu0 %v1601
      %1605 = vmatprep.subr.bf16.mxu0 0
      %1606 = vmatpush1.bf16.xpose.msra.mxu0 0
      %1607 = vmatprep.subr.bf16.mxu0 0
      %1608 = vmatpush1.bf16.xpose.msra.mxu0 0
      %1609 = vmatprep.subr.bf16.mxu0 0
      %1610 = vmatpush1.bf16.xpose.msra.mxu0 0
      %1611 = vmatprep.subr.bf16.mxu0 0
      %1612 = vmatpush1.bf16.xpose.msra.mxu0 0
      %1613 = vmatprep.subr.bf16.mxu0 0
      %1614 = vmatpush1.bf16.xpose.msra.mxu0 0
      %1615 = vmatprep.subr.bf16.mxu0 0
      %1616 = vmatpush1.bf16.xpose.msra.mxu0 0
      %1617 = vmatprep.subr.bf16.mxu0 0
      %1618 = vmatpush1.bf16.xpose.msra.mxu0 0
      %1619 = vmatprep.subr.bf16.mxu0 0
      %1620 = vmatpush1.bf16.xpose.msra.mxu0 0
      %1621 = vmatprep.subr.bf16.mxu0 0
      %1622 = vmatpush1.bf16.xpose.msra.mxu0 0
      %1623 = vmatprep.subr.bf16.mxu0 0
      %1624 = vmatpush1.bf16.xpose.msra.mxu0 0
      %1625 = vmatprep.subr.bf16.mxu0 0
      %1626 = vmatpush1.bf16.xpose.msra.mxu0 0
      %1627 = vmatprep.subr.bf16.mxu0 0
      %1628 = vmatpush1.bf16.xpose.msra.mxu0 0
      %1629 = vmatprep.subr.bf16.mxu0 0
      %1630 = vmatpush1.bf16.xpose.msra.mxu0 0
      %1631 = vmatprep.subr.bf16.mxu0 0
      %1632 = vmatpush1.bf16.xpose.msra.mxu0 0
      %1633 = vmatprep.subr.bf16.mxu0 0
      %1634 = vmatpush1.bf16.xpose.msra.mxu0 0
      %1635 = vmatprep.mubr.bf16.mxu0 0
      %1636 = vmatmul.mubr.bf16.gmra.mrb[0].mxu0 %v1598
      %v1637 = vpop.f32.mrb[0].mxu0
      %v1638 = vadd.f32 0.0, %v1637
      %v1639 = vpop.f32.mrb[0].mxu0
      %v1640 = vpop.f32.mrb[0].mxu0
      %v1641 = vpop.f32.mrb[0].mxu0
      %1642 = vdwg.mxu0
      %v1644 = vsel %vm1504, %v1203, 0
      %v1647 = vsel %vm1504, %v1353, 0
      %1649 = vmatprep.subr.bf16.mxu0 0
      %1650 = vmatpush1.bf16.xpose.msra.mxu0 %v1647
      %1651 = vmatprep.subr.bf16.mxu0 0
      %1652 = vmatpush1.bf16.xpose.msra.mxu0 0
      %1653 = vmatprep.subr.bf16.mxu0 0
      %1654 = vmatpush1.bf16.xpose.msra.mxu0 0
      %1655 = vmatprep.subr.bf16.mxu0 0
      %1656 = vmatpush1.bf16.xpose.msra.mxu0 0
      %1657 = vmatprep.subr.bf16.mxu0 0
      %1658 = vmatpush1.bf16.xpose.msra.mxu0 0
      %1659 = vmatprep.subr.bf16.mxu0 0
      %1660 = vmatpush1.bf16.xpose.msra.mxu0 0
      %1661 = vmatprep.subr.bf16.mxu0 0
      %1662 = vmatpush1.bf16.xpose.msra.mxu0 0
      %1663 = vmatprep.subr.bf16.mxu0 0
      %1664 = vmatpush1.bf16.xpose.msra.mxu0 0
      %1665 = vmatprep.subr.bf16.mxu0 0
      %1666 = vmatpush1.bf16.xpose.msra.mxu0 0
      %1667 = vmatprep.subr.bf16.mxu0 0
      %1668 = vmatpush1.bf16.xpose.msra.mxu0 0
      %1669 = vmatprep.subr.bf16.mxu0 0
      %1670 = vmatpush1.bf16.xpose.msra.mxu0 0
      %1671 = vmatprep.subr.bf16.mxu0 0
      %1672 = vmatpush1.bf16.xpose.msra.mxu0 0
      %1673 = vmatprep.subr.bf16.mxu0 0
      %1674 = vmatpush1.bf16.xpose.msra.mxu0 0
      %1675 = vmatprep.subr.bf16.mxu0 0
      %1676 = vmatpush1.bf16.xpose.msra.mxu0 0
      %1677 = vmatprep.subr.bf16.mxu0 0
      %1678 = vmatpush1.bf16.xpose.msra.mxu0 0
      %1679 = vmatprep.subr.bf16.mxu0 0
      %1680 = vmatpush1.bf16.xpose.msra.mxu0 0
      %1681 = vmatprep.mubr.bf16.mxu0 0
      %1682 = vmatmul.mubr.bf16.gmra.mrb[0].mxu0 %v1644
      %v1683 = vpop.f32.mrb[0].mxu0
      %v1684 = vadd.f32 0.0, %v1683
      %v1685 = vpop.f32.mrb[0].mxu0
      %v1686 = vpop.f32.mrb[0].mxu0
      %v1687 = vpop.f32.mrb[0].mxu0
      %1688 = vdwg.mxu0
      %vm1689 = vcmask 64512
      %v1690 = vsel %vm1689, %v1546, -inf
      %1691 = vmax.xlane.f32.xlu0 %v1690
      %v1692 = vpop.xlane.xlu0 %1691
      %v1693 = vsel %vm1689, %v1592, -inf
      %1694 = vmax.xlane.f32.xlu0 %v1693
      %v1695 = vpop.xlane.xlu0 %1694
      %v1696 = vsel %vm1689, %v1638, -inf
      %1697 = vmax.xlane.f32.xlu0 %v1696
      %v1698 = vpop.xlane.xlu0 %1697
      %v1699 = vsel %vm1689, %v1684, -inf
      %1700 = vmax.xlane.f32.xlu0 %v1699
      %v1701 = vpop.xlane.xlu0 %1700
      %v1702 = vsub.f32 %v1546, %v1692
      %v1703 = vsub.f32 %v1592, %v1695
      %v1704 = vsub.f32 %v1638, %v1698
      %v1705 = vsub.f32 %v1684, %v1701
      %v1706 = vmul.f32 %v1702, 1.442695
      %v1707 = vpow.pop %v1706
      %v1708 = vmul.f32 %v1703, 1.442695
      %v1709 = vpow.pop %v1708
      %v1710 = vmul.f32 %v1704, 1.442695
      %v1711 = vpow.pop %v1710
      %v1712 = vmul.f32 %v1705, 1.442695
      %v1713 = vpow.pop %v1712
      %v1714 = vsel %vm1689, %v1707, 0.0
      %1715 = vadd.xlane.f32.xlu0 %v1714
      %v1716 = vpop.xlane.xlu0 %1715
      %v1717 = vsel %vm1689, %v1709, 0.0
      %1718 = vadd.xlane.f32.xlu0 %v1717
      %v1719 = vpop.xlane.xlu0 %1718
      %v1720 = vsel %vm1689, %v1711, 0.0
      %1721 = vadd.xlane.f32.xlu0 %v1720
      %v1722 = vpop.xlane.xlu0 %1721
      %v1723 = vsel %vm1689, %v1713, 0.0
      %1724 = vadd.xlane.f32.xlu0 %v1723
      %v1725 = vpop.xlane.xlu0 %1724
      %v1726 = vrcp.pop %v1716
      %v1727 = vrcp.pop %v1719
      %v1728 = vrcp.pop %v1722
      %v1729 = vrcp.pop %v1725
      %v1730 = vmul.f32 %v1707, %v1726
      %v1731 = vmul.f32 %v1709, %v1727
      %v1732 = vmul.f32 %v1711, %v1728
      %v1733 = vmul.f32 %v1713, %v1729
      %v1734 = vpack.c.bf16 %v1730, %v1730
      %v1735 = vpack.c.bf16 %v1731, %v1731
      %v1736 = vpack.c.bf16 %v1732, %v1732
      %v1737 = vpack.c.bf16 %v1733, %v1733
      %v1739 = vsel %vm1689, %v1734, 0
      %vm1741 = vcmask 1043456
      %v1743 = vsel %vm1741, %v1500, 0
      %1745 = vmatprep.subr.bf16.mxu0 0
      %1746 = vmatpush1.bf16.msra.mxu0 %v1743
      %1747 = vmatprep.subr.bf16.mxu0 0
      %1748 = vmatpush1.bf16.msra.mxu0 0
      %1749 = vmatprep.subr.bf16.mxu0 0
      %1750 = vmatpush1.bf16.msra.mxu0 0
      %1751 = vmatprep.subr.bf16.mxu0 0
      %1752 = vmatpush1.bf16.msra.mxu0 0
      %1753 = vmatprep.subr.bf16.mxu0 0
      %1754 = vmatpush1.bf16.msra.mxu0 0
      %1755 = vmatprep.subr.bf16.mxu0 0
      %1756 = vmatpush1.bf16.msra.mxu0 0
      %1757 = vmatprep.subr.bf16.mxu0 0
      %1758 = vmatpush1.bf16.msra.mxu0 0
      %1759 = vmatprep.subr.bf16.mxu0 0
      %1760 = vmatpush1.bf16.msra.mxu0 0
      %1761 = vmatprep.subr.bf16.mxu0 0
      %1762 = vmatpush1.bf16.msra.mxu0 0
      %1763 = vmatprep.subr.bf16.mxu0 0
      %1764 = vmatpush1.bf16.msra.mxu0 0
      %1765 = vmatprep.subr.bf16.mxu0 0
      %1766 = vmatpush1.bf16.msra.mxu0 0
      %1767 = vmatprep.subr.bf16.mxu0 0
      %1768 = vmatpush1.bf16.msra.mxu0 0
      %1769 = vmatprep.subr.bf16.mxu0 0
      %1770 = vmatpush1.bf16.msra.mxu0 0
      %1771 = vmatprep.subr.bf16.mxu0 0
      %1772 = vmatpush1.bf16.msra.mxu0 0
      %1773 = vmatprep.subr.bf16.mxu0 0
      %1774 = vmatpush1.bf16.msra.mxu0 0
      %1775 = vmatprep.subr.bf16.mxu0 0
      %1776 = vmatpush1.bf16.msra.mxu0 0
      %1777 = vmatprep.mubr.bf16.mxu0 0
      %1778 = vmatmul.mubr.bf16.gmra.mrb[0].mxu0 %v1739
      %v1779 = vpop.f32.mrb[0].mxu0
      %v1780 = vadd.f32 0.0, %v1779
      %v1781 = vpop.f32.mrb[0].mxu0
      %v1782 = vpop.f32.mrb[0].mxu0
      %v1783 = vpop.f32.mrb[0].mxu0
      %1784 = vdwg.mxu0
      %v1786 = vsel %vm1689, %v1735, 0
      %v1789 = vsel %vm1741, %v1501, 0
      %1791 = vmatprep.subr.bf16.mxu0 0
      %1792 = vmatpush1.bf16.msra.mxu0 %v1789
      %1793 = vmatprep.subr.bf16.mxu0 0
      %1794 = vmatpush1.bf16.msra.mxu0 0
      %1795 = vmatprep.subr.bf16.mxu0 0
      %1796 = vmatpush1.bf16.msra.mxu0 0
      %1797 = vmatprep.subr.bf16.mxu0 0
      %1798 = vmatpush1.bf16.msra.mxu0 0
      %1799 = vmatprep.subr.bf16.mxu0 0
      %1800 = vmatpush1.bf16.msra.mxu0 0
      %1801 = vmatprep.subr.bf16.mxu0 0
      %1802 = vmatpush1.bf16.msra.mxu0 0
      %1803 = vmatprep.subr.bf16.mxu0 0
      %1804 = vmatpush1.bf16.msra.mxu0 0
      %1805 = vmatprep.subr.bf16.mxu0 0
      %1806 = vmatpush1.bf16.msra.mxu0 0
      %1807 = vmatprep.subr.bf16.mxu0 0
      %1808 = vmatpush1.bf16.msra.mxu0 0
      %1809 = vmatprep.subr.bf16.mxu0 0
      %1810 = vmatpush1.bf16.msra.mxu0 0
      %1811 = vmatprep.subr.bf16.mxu0 0
      %1812 = vmatpush1.bf16.msra.mxu0 0
      %1813 = vmatprep.subr.bf16.mxu0 0
      %1814 = vmatpush1.bf16.msra.mxu0 0
      %1815 = vmatprep.subr.bf16.mxu0 0
      %1816 = vmatpush1.bf16.msra.mxu0 0
      %1817 = vmatprep.subr.bf16.mxu0 0
      %1818 = vmatpush1.bf16.msra.mxu0 0
      %1819 = vmatprep.subr.bf16.mxu0 0
      %1820 = vmatpush1.bf16.msra.mxu0 0
      %1821 = vmatprep.subr.bf16.mxu0 0
      %1822 = vmatpush1.bf16.msra.mxu0 0
      %1823 = vmatprep.mubr.bf16.mxu0 0
      %1824 = vmatmul.mubr.bf16.gmra.mrb[0].mxu0 %v1786
      %v1825 = vpop.f32.mrb[0].mxu0
      %v1826 = vadd.f32 0.0, %v1825
      %v1827 = vpop.f32.mrb[0].mxu0
      %v1828 = vpop.f32.mrb[0].mxu0
      %v1829 = vpop.f32.mrb[0].mxu0
      %1830 = vdwg.mxu0
      %v1832 = vsel %vm1689, %v1736, 0
      %v1835 = vsel %vm1741, %v1502, 0
      %1837 = vmatprep.subr.bf16.mxu0 0
      %1838 = vmatpush1.bf16.msra.mxu0 %v1835
      %1839 = vmatprep.subr.bf16.mxu0 0
      %1840 = vmatpush1.bf16.msra.mxu0 0
      %1841 = vmatprep.subr.bf16.mxu0 0
      %1842 = vmatpush1.bf16.msra.mxu0 0
      %1843 = vmatprep.subr.bf16.mxu0 0
      %1844 = vmatpush1.bf16.msra.mxu0 0
      %1845 = vmatprep.subr.bf16.mxu0 0
      %1846 = vmatpush1.bf16.msra.mxu0 0
      %1847 = vmatprep.subr.bf16.mxu0 0
      %1848 = vmatpush1.bf16.msra.mxu0 0
      %1849 = vmatprep.subr.bf16.mxu0 0
      %1850 = vmatpush1.bf16.msra.mxu0 0
      %1851 = vmatprep.subr.bf16.mxu0 0
      %1852 = vmatpush1.bf16.msra.mxu0 0
      %1853 = vmatprep.subr.bf16.mxu0 0
      %1854 = vmatpush1.bf16.msra.mxu0 0
      %1855 = vmatprep.subr.bf16.mxu0 0
      %1856 = vmatpush1.bf16.msra.mxu0 0
      %1857 = vmatprep.subr.bf16.mxu0 0
      %1858 = vmatpush1.bf16.msra.mxu0 0
      %1859 = vmatprep.subr.bf16.mxu0 0
      %1860 = vmatpush1.bf16.msra.mxu0 0
      %1861 = vmatprep.subr.bf16.mxu0 0
      %1862 = vmatpush1.bf16.msra.mxu0 0
      %1863 = vmatprep.subr.bf16.mxu0 0
      %1864 = vmatpush1.bf16.msra.mxu0 0
      %1865 = vmatprep.subr.bf16.mxu0 0
      %1866 = vmatpush1.bf16.msra.mxu0 0
      %1867 = vmatprep.subr.bf16.mxu0 0
      %1868 = vmatpush1.bf16.msra.mxu0 0
      %1869 = vmatprep.mubr.bf16.mxu0 0
      %1870 = vmatmul.mubr.bf16.gmra.mrb[0].mxu0 %v1832
      %v1871 = vpop.f32.mrb[0].mxu0
      %v1872 = vadd.f32 0.0, %v1871
      %v1873 = vpop.f32.mrb[0].mxu0
      %v1874 = vpop.f32.mrb[0].mxu0
      %v1875 = vpop.f32.mrb[0].mxu0
      %1876 = vdwg.mxu0
      %v1878 = vsel %vm1689, %v1737, 0
      %v1881 = vsel %vm1741, %v1503, 0
      %1883 = vmatprep.subr.bf16.mxu0 0
      %1884 = vmatpush1.bf16.msra.mxu0 %v1881
      %1885 = vmatprep.subr.bf16.mxu0 0
      %1886 = vmatpush1.bf16.msra.mxu0 0
      %1887 = vmatprep.subr.bf16.mxu0 0
      %1888 = vmatpush1.bf16.msra.mxu0 0
      %1889 = vmatprep.subr.bf16.mxu0 0
      %1890 = vmatpush1.bf16.msra.mxu0 0
      %1891 = vmatprep.subr.bf16.mxu0 0
      %1892 = vmatpush1.bf16.msra.mxu0 0
      %1893 = vmatprep.subr.bf16.mxu0 0
      %1894 = vmatpush1.bf16.msra.mxu0 0
      %1895 = vmatprep.subr.bf16.mxu0 0
      %1896 = vmatpush1.bf16.msra.mxu0 0
      %1897 = vmatprep.subr.bf16.mxu0 0
      %1898 = vmatpush1.bf16.msra.mxu0 0
      %1899 = vmatprep.subr.bf16.mxu0 0
      %1900 = vmatpush1.bf16.msra.mxu0 0
      %1901 = vmatprep.subr.bf16.mxu0 0
      %1902 = vmatpush1.bf16.msra.mxu0 0
      %1903 = vmatprep.subr.bf16.mxu0 0
      %1904 = vmatpush1.bf16.msra.mxu0 0
      %1905 = vmatprep.subr.bf16.mxu0 0
      %1906 = vmatpush1.bf16.msra.mxu0 0
      %1907 = vmatprep.subr.bf16.mxu0 0
      %1908 = vmatpush1.bf16.msra.mxu0 0
      %1909 = vmatprep.subr.bf16.mxu0 0
      %1910 = vmatpush1.bf16.msra.mxu0 0
      %1911 = vmatprep.subr.bf16.mxu0 0
      %1912 = vmatpush1.bf16.msra.mxu0 0
      %1913 = vmatprep.subr.bf16.mxu0 0
      %1914 = vmatpush1.bf16.msra.mxu0 0
      %1915 = vmatprep.mubr.bf16.mxu0 0
      %1916 = vmatmul.mubr.bf16.gmra.mrb[0].mxu0 %v1878
      %v1917 = vpop.f32.mrb[0].mxu0
      %v1918 = vadd.f32 0.0, %v1917
      %v1919 = vpop.f32.mrb[0].mxu0
      %v1920 = vpop.f32.mrb[0].mxu0
      %v1921 = vpop.f32.mrb[0].mxu0
      %1922 = vdwg.mxu0
      %v1923 = vcombine.low %v1780, %v1872
      %v1924 = vcombine.high %v1780, %v1872
      %v1926 = vunpack.c.l.s4 1983009808
      %v1927 = vunpack.c.0.s8 %v1926
      %v1928 = vlaneseq
      %v1929 = vshrl.u32 %v1928, 7
      %v1930 = vsub.s32 %v1927, %v1929
      %v1931 = vrot.slane %v1923, %v1930
      %v1933 = vunpack.c.l.s4 1983009808
      %v1934 = vunpack.c.0.s8 %v1933
      %v1935 = vlaneseq
      %v1936 = vshrl.u32 %v1935, 7
      %v1937 = vsub.s32 %v1934, %v1936
      %v1938 = vrot.slane %v1924, %v1937
      %v1939 = vcombine.low %v1826, %v1918
      %v1940 = vcombine.high %v1826, %v1918
      %v1942 = vunpack.c.l.s4 1983009808
      %v1943 = vunpack.c.0.s8 %v1942
      %v1944 = vlaneseq
      %v1945 = vshrl.u32 %v1944, 7
      %v1946 = vsub.s32 %v1943, %v1945
      %v1947 = vrot.slane %v1939, %v1946
      %v1949 = vunpack.c.l.s4 1983009808
      %v1950 = vunpack.c.0.s8 %v1949
      %v1951 = vlaneseq
      %v1952 = vshrl.u32 %v1951, 7
      %v1953 = vsub.s32 %v1950, %v1952
      %v1954 = vrot.slane %v1940, %v1953
      %v1955 = vcombine.low %v1931, %v1947
      %v1956 = vcombine.high %v1931, %v1947
      %v1958 = vunpack.c.l.s4 1934713408
      %v1959 = vunpack.c.0.s8 %v1958
      %v1960 = vlaneseq
      %v1961 = vshrl.u32 %v1960, 7
      %v1962 = vsub.s32 %v1959, %v1961
      %v1963 = vrot.slane %v1955, %v1962
      %v1965 = vunpack.c.l.s4 1934713408
      %v1966 = vunpack.c.0.s8 %v1965
      %v1967 = vlaneseq
      %v1968 = vshrl.u32 %v1967, 7
      %v1969 = vsub.s32 %v1966, %v1968
      %v1970 = vrot.slane %v1956, %v1969
      %v1971 = vcombine.low %v1938, %v1954
      %v1972 = vcombine.high %v1938, %v1954
      %v1974 = vunpack.c.l.s4 1934713408
      %v1975 = vunpack.c.0.s8 %v1974
      %v1976 = vlaneseq
      %v1977 = vshrl.u32 %v1976, 7
      %v1978 = vsub.s32 %v1975, %v1977
      %v1979 = vrot.slane %v1971, %v1978
      %v1981 = vunpack.c.l.s4 1934713408
      %v1982 = vunpack.c.0.s8 %v1981
      %v1983 = vlaneseq
      %v1984 = vshrl.u32 %v1983, 7
      %v1985 = vsub.s32 %v1982, %v1984
      %v1986 = vrot.slane %v1972, %v1985
      %v1987 = vcombine.high %v1963, 0.0
      %v1988 = vcombine.high %v1970, 0.0
      %v1989 = vcombine.high %v1979, 0.0
      %v1990 = vcombine.high %v1986, 0.0
      %v1991 = vcombine.low %v1963, %v1970
      %v1993 = vunpack.c.l.s4 1983009808
      %v1994 = vunpack.c.0.s8 %v1993
      %v1995 = vlaneseq
      %v1996 = vshrl.u32 %v1995, 7
      %v1997 = vsub.s32 %v1994, %v1996
      %v1998 = vrot.slane %v1991, %v1997
      %v1999 = vcombine.low %v1987, %v1988
      %v2001 = vunpack.c.l.s4 1983009808
      %v2002 = vunpack.c.0.s8 %v2001
      %v2003 = vlaneseq
      %v2004 = vshrl.u32 %v2003, 7
      %v2005 = vsub.s32 %v2002, %v2004
      %v2006 = vrot.slane %v1999, %v2005
      %v2007 = vcombine.low %v1979, %v1986
      %v2009 = vunpack.c.l.s4 1983009808
      %v2010 = vunpack.c.0.s8 %v2009
      %v2011 = vlaneseq
      %v2012 = vshrl.u32 %v2011, 7
      %v2013 = vsub.s32 %v2010, %v2012
      %v2014 = vrot.slane %v2007, %v2013
      %v2015 = vcombine.low %v1989, %v1990
      %v2017 = vunpack.c.l.s4 1983009808
      %v2018 = vunpack.c.0.s8 %v2017
      %v2019 = vlaneseq
      %v2020 = vshrl.u32 %v2019, 7
      %v2021 = vsub.s32 %v2018, %v2020
      %v2022 = vrot.slane %v2015, %v2021
      %v2023 = vcombine.low %v1998, %v2006
      %v2024 = vcombine.high %v1998, %v2006
      %v2026 = vunpack.c.l.s4 1934713408
      %v2027 = vunpack.c.0.s8 %v2026
      %v2028 = vlaneseq
      %v2029 = vshrl.u32 %v2028, 7
      %v2030 = vsub.s32 %v2027, %v2029
      %v2031 = vrot.slane %v2023, %v2030
      %v2033 = vunpack.c.l.s4 1934713408
      %v2034 = vunpack.c.0.s8 %v2033
      %v2035 = vlaneseq
      %v2036 = vshrl.u32 %v2035, 7
      %v2037 = vsub.s32 %v2034, %v2036
      %v2038 = vrot.slane %v2024, %v2037
      %v2039 = vcombine.low %v2014, %v2022
      %v2040 = vcombine.high %v2014, %v2022
      %v2042 = vunpack.c.l.s4 1934713408
      %v2043 = vunpack.c.0.s8 %v2042
      %v2044 = vlaneseq
      %v2045 = vshrl.u32 %v2044, 7
      %v2046 = vsub.s32 %v2043, %v2045
      %v2047 = vrot.slane %v2039, %v2046
      %v2049 = vunpack.c.l.s4 1934713408
      %v2050 = vunpack.c.0.s8 %v2049
      %v2051 = vlaneseq
      %v2052 = vshrl.u32 %v2051, 7
      %v2053 = vsub.s32 %v2050, %v2052
      %v2054 = vrot.slane %v2040, %v2053
      %v2055 = vcombine.low %v2031, %v2047
      %v2056 = vcombine.high %v2031, %v2047
      %v2057 = vcombine.low %v2038, %v2054
      %v2058 = vcombine.high %v2038, %v2054
      %2060 = vrot.lane.b32.xlu0 %v2056, 32
      %v2061 = vpop.permute.xlu0 %2060
      %2064 = vrot.lane.b32.xlu0 %v2057, 64
      %v2065 = vpop.permute.xlu0 %2064
      %2068 = vrot.lane.b32.xlu0 %v2058, 96
      %v2069 = vpop.permute.xlu0 %2068
      %v2071 = vsel %vm1504, %v2055, %v2061
      %vm2072 = vcmask 523264
      %v2073 = vsel %vm2072, %v2071, %v2065
      %vm2074 = vcmask 785408
      %v2075 = vsel %vm2074, %v2073, %v2069
      %2077 = vrot.lane.b32.xlu0 %v1053, 96
      %v2078 = vpop.permute.xlu0 %2077
      %2080 = vrot.lane.b32.xlu0 %v1053, 64
      %v2081 = vpop.permute.xlu0 %2080
      %2083 = vrot.lane.b32.xlu0 %v1053, 32
      %v2084 = vpop.permute.xlu0 %2083
      %v2086 = vcombine.low %v1053, %v2081
      %v2087 = vcombine.high %v1053, %v2081
      %v2089 = vunpack.c.l.s4 1983009808
      %v2090 = vunpack.c.0.s8 %v2089
      %v2091 = vlaneseq
      %v2092 = vshrl.u32 %v2091, 7
      %v2093 = vsub.s32 %v2090, %v2092
      %v2094 = vrot.slane %v2086, %v2093
      %v2096 = vunpack.c.l.s4 1983009808
      %v2097 = vunpack.c.0.s8 %v2096
      %v2098 = vlaneseq
      %v2099 = vshrl.u32 %v2098, 7
      %v2100 = vsub.s32 %v2097, %v2099
      %v2101 = vrot.slane %v2087, %v2100
      %v2102 = vcombine.low %v2078, %v2084
      %v2103 = vcombine.high %v2078, %v2084
      %v2105 = vunpack.c.l.s4 1983009808
      %v2106 = vunpack.c.0.s8 %v2105
      %v2107 = vlaneseq
      %v2108 = vshrl.u32 %v2107, 7
      %v2109 = vsub.s32 %v2106, %v2108
      %v2110 = vrot.slane %v2102, %v2109
      %v2112 = vunpack.c.l.s4 1983009808
      %v2113 = vunpack.c.0.s8 %v2112
      %v2114 = vlaneseq
      %v2115 = vshrl.u32 %v2114, 7
      %v2116 = vsub.s32 %v2113, %v2115
      %v2117 = vrot.slane %v2103, %v2116
      %v2118 = vcombine.low %v2094, %v2110
      %v2119 = vcombine.high %v2094, %v2110
      %v2121 = vunpack.c.l.s4 1934713408
      %v2122 = vunpack.c.0.s8 %v2121
      %v2123 = vlaneseq
      %v2124 = vshrl.u32 %v2123, 7
      %v2125 = vsub.s32 %v2122, %v2124
      %v2126 = vrot.slane %v2118, %v2125
      %v2128 = vunpack.c.l.s4 1934713408
      %v2129 = vunpack.c.0.s8 %v2128
      %v2130 = vlaneseq
      %v2131 = vshrl.u32 %v2130, 7
      %v2132 = vsub.s32 %v2129, %v2131
      %v2133 = vrot.slane %v2119, %v2132
      %v2134 = vcombine.low %v2101, %v2117
      %v2135 = vcombine.high %v2101, %v2117
      %v2137 = vunpack.c.l.s4 1934713408
      %v2138 = vunpack.c.0.s8 %v2137
      %v2139 = vlaneseq
      %v2140 = vshrl.u32 %v2139, 7
      %v2141 = vsub.s32 %v2138, %v2140
      %v2142 = vrot.slane %v2134, %v2141
      %v2144 = vunpack.c.l.s4 1934713408
      %v2145 = vunpack.c.0.s8 %v2144
      %v2146 = vlaneseq
      %v2147 = vshrl.u32 %v2146, 7
      %v2148 = vsub.s32 %v2145, %v2147
      %v2149 = vrot.slane %v2135, %v2148
      %v2150 = vcombine.high %v2126, 0.0
      %v2151 = vcombine.high %v2133, 0.0
      %v2152 = vcombine.high %v2142, 0.0
      %v2153 = vcombine.high %v2149, 0.0
      %v2154 = vcombine.low %v2126, %v2133
      %v2156 = vunpack.c.l.s4 1983009808
      %v2157 = vunpack.c.0.s8 %v2156
      %v2158 = vlaneseq
      %v2159 = vshrl.u32 %v2158, 7
      %v2160 = vsub.s32 %v2157, %v2159
      %v2161 = vrot.slane %v2154, %v2160
      %v2162 = vcombine.low %v2150, %v2151
      %v2164 = vunpack.c.l.s4 1983009808
      %v2165 = vunpack.c.0.s8 %v2164
      %v2166 = vlaneseq
      %v2167 = vshrl.u32 %v2166, 7
      %v2168 = vsub.s32 %v2165, %v2167
      %v2169 = vrot.slane %v2162, %v2168
      %v2170 = vcombine.low %v2142, %v2149
      %v2172 = vunpack.c.l.s4 1983009808
      %v2173 = vunpack.c.0.s8 %v2172
      %v2174 = vlaneseq
      %v2175 = vshrl.u32 %v2174, 7
      %v2176 = vsub.s32 %v2173, %v2175
      %v2177 = vrot.slane %v2170, %v2176
      %v2178 = vcombine.low %v2152, %v2153
      %v2180 = vunpack.c.l.s4 1983009808
      %v2181 = vunpack.c.0.s8 %v2180
      %v2182 = vlaneseq
      %v2183 = vshrl.u32 %v2182, 7
      %v2184 = vsub.s32 %v2181, %v2183
      %v2185 = vrot.slane %v2178, %v2184
      %v2186 = vcombine.low %v2161, %v2169
      %v2187 = vcombine.high %v2161, %v2169
      %v2189 = vunpack.c.l.s4 1934713408
      %v2190 = vunpack.c.0.s8 %v2189
      %v2191 = vlaneseq
      %v2192 = vshrl.u32 %v2191, 7
      %v2193 = vsub.s32 %v2190, %v2192
      %v2194 = vrot.slane %v2186, %v2193
      %v2196 = vunpack.c.l.s4 1934713408
      %v2197 = vunpack.c.0.s8 %v2196
      %v2198 = vlaneseq
      %v2199 = vshrl.u32 %v2198, 7
      %v2200 = vsub.s32 %v2197, %v2199
      %v2201 = vrot.slane %v2187, %v2200
      %v2202 = vcombine.low %v2177, %v2185
      %v2203 = vcombine.high %v2177, %v2185
      %v2205 = vunpack.c.l.s4 1934713408
      %v2206 = vunpack.c.0.s8 %v2205
      %v2207 = vlaneseq
      %v2208 = vshrl.u32 %v2207, 7
      %v2209 = vsub.s32 %v2206, %v2208
      %v2210 = vrot.slane %v2202, %v2209
      %v2212 = vunpack.c.l.s4 1934713408
      %v2213 = vunpack.c.0.s8 %v2212
      %v2214 = vlaneseq
      %v2215 = vshrl.u32 %v2214, 7
      %v2216 = vsub.s32 %v2213, %v2215
      %v2217 = vrot.slane %v2203, %v2216
      %v2218 = vcombine.low %v2194, %v2210
      %v2219 = vcombine.high %v2194, %v2210
      %v2220 = vcombine.low %v2201, %v2217
      %v2221 = vcombine.high %v2201, %v2217
      %v2222 = vpack.c.bf16 %v2218, %v2218
      %v2223 = vpack.c.bf16 %v2219, %v2219
      %v2224 = vpack.c.bf16 %v2220, %v2220
      %v2225 = vpack.c.bf16 %v2221, %v2221
      %2227 = vrot.lane.b32.xlu0 %v966, 96
      %v2228 = vpop.permute.xlu0 %2227
      %2230 = vrot.lane.b32.xlu0 %v966, 64
      %v2231 = vpop.permute.xlu0 %2230
      %2233 = vrot.lane.b32.xlu0 %v966, 32
      %v2234 = vpop.permute.xlu0 %2233
      %v2236 = vcombine.low %v966, %v2231
      %v2237 = vcombine.high %v966, %v2231
      %v2239 = vunpack.c.l.s4 1983009808
      %v2240 = vunpack.c.0.s8 %v2239
      %v2241 = vlaneseq
      %v2242 = vshrl.u32 %v2241, 7
      %v2243 = vsub.s32 %v2240, %v2242
      %v2244 = vrot.slane %v2236, %v2243
      %v2246 = vunpack.c.l.s4 1983009808
      %v2247 = vunpack.c.0.s8 %v2246
      %v2248 = vlaneseq
      %v2249 = vshrl.u32 %v2248, 7
      %v2250 = vsub.s32 %v2247, %v2249
      %v2251 = vrot.slane %v2237, %v2250
      %v2252 = vcombine.low %v2228, %v2234
      %v2253 = vcombine.high %v2228, %v2234
      %v2255 = vunpack.c.l.s4 1983009808
      %v2256 = vunpack.c.0.s8 %v2255
      %v2257 = vlaneseq
      %v2258 = vshrl.u32 %v2257, 7
      %v2259 = vsub.s32 %v2256, %v2258
      %v2260 = vrot.slane %v2252, %v2259
      %v2262 = vunpack.c.l.s4 1983009808
      %v2263 = vunpack.c.0.s8 %v2262
      %v2264 = vlaneseq
      %v2265 = vshrl.u32 %v2264, 7
      %v2266 = vsub.s32 %v2263, %v2265
      %v2267 = vrot.slane %v2253, %v2266
      %v2268 = vcombine.low %v2244, %v2260
      %v2269 = vcombine.high %v2244, %v2260
      %v2271 = vunpack.c.l.s4 1934713408
      %v2272 = vunpack.c.0.s8 %v2271
      %v2273 = vlaneseq
      %v2274 = vshrl.u32 %v2273, 7
      %v2275 = vsub.s32 %v2272, %v2274
      %v2276 = vrot.slane %v2268, %v2275
      %v2278 = vunpack.c.l.s4 1934713408
      %v2279 = vunpack.c.0.s8 %v2278
      %v2280 = vlaneseq
      %v2281 = vshrl.u32 %v2280, 7
      %v2282 = vsub.s32 %v2279, %v2281
      %v2283 = vrot.slane %v2269, %v2282
      %v2284 = vcombine.low %v2251, %v2267
      %v2285 = vcombine.high %v2251, %v2267
      %v2287 = vunpack.c.l.s4 1934713408
      %v2288 = vunpack.c.0.s8 %v2287
      %v2289 = vlaneseq
      %v2290 = vshrl.u32 %v2289, 7
      %v2291 = vsub.s32 %v2288, %v2290
      %v2292 = vrot.slane %v2284, %v2291
      %v2294 = vunpack.c.l.s4 1934713408
      %v2295 = vunpack.c.0.s8 %v2294
      %v2296 = vlaneseq
      %v2297 = vshrl.u32 %v2296, 7
      %v2298 = vsub.s32 %v2295, %v2297
      %v2299 = vrot.slane %v2285, %v2298
      %v2300 = vcombine.high %v2276, 0.0
      %v2301 = vcombine.high %v2283, 0.0
      %v2302 = vcombine.high %v2292, 0.0
      %v2303 = vcombine.high %v2299, 0.0
      %v2304 = vcombine.low %v2276, %v2283
      %v2306 = vunpack.c.l.s4 1983009808
      %v2307 = vunpack.c.0.s8 %v2306
      %v2308 = vlaneseq
      %v2309 = vshrl.u32 %v2308, 7
      %v2310 = vsub.s32 %v2307, %v2309
      %v2311 = vrot.slane %v2304, %v2310
      %v2312 = vcombine.low %v2300, %v2301
      %v2314 = vunpack.c.l.s4 1983009808
      %v2315 = vunpack.c.0.s8 %v2314
      %v2316 = vlaneseq
      %v2317 = vshrl.u32 %v2316, 7
      %v2318 = vsub.s32 %v2315, %v2317
      %v2319 = vrot.slane %v2312, %v2318
      %v2320 = vcombine.low %v2292, %v2299
      %v2322 = vunpack.c.l.s4 1983009808
      %v2323 = vunpack.c.0.s8 %v2322
      %v2324 = vlaneseq
      %v2325 = vshrl.u32 %v2324, 7
      %v2326 = vsub.s32 %v2323, %v2325
      %v2327 = vrot.slane %v2320, %v2326
      %v2328 = vcombine.low %v2302, %v2303
      %v2330 = vunpack.c.l.s4 1983009808
      %v2331 = vunpack.c.0.s8 %v2330
      %v2332 = vlaneseq
      %v2333 = vshrl.u32 %v2332, 7
      %v2334 = vsub.s32 %v2331, %v2333
      %v2335 = vrot.slane %v2328, %v2334
      %v2336 = vcombine.low %v2311, %v2319
      %v2337 = vcombine.high %v2311, %v2319
      %v2339 = vunpack.c.l.s4 1934713408
      %v2340 = vunpack.c.0.s8 %v2339
      %v2341 = vlaneseq
      %v2342 = vshrl.u32 %v2341, 7
      %v2343 = vsub.s32 %v2340, %v2342
      %v2344 = vrot.slane %v2336, %v2343
      %v2346 = vunpack.c.l.s4 1934713408
      %v2347 = vunpack.c.0.s8 %v2346
      %v2348 = vlaneseq
      %v2349 = vshrl.u32 %v2348, 7
      %v2350 = vsub.s32 %v2347, %v2349
      %v2351 = vrot.slane %v2337, %v2350
      %v2352 = vcombine.low %v2327, %v2335
      %v2353 = vcombine.high %v2327, %v2335
      %v2355 = vunpack.c.l.s4 1934713408
      %v2356 = vunpack.c.0.s8 %v2355
      %v2357 = vlaneseq
      %v2358 = vshrl.u32 %v2357, 7
      %v2359 = vsub.s32 %v2356, %v2358
      %v2360 = vrot.slane %v2352, %v2359
      %v2362 = vunpack.c.l.s4 1934713408
      %v2363 = vunpack.c.0.s8 %v2362
      %v2364 = vlaneseq
      %v2365 = vshrl.u32 %v2364, 7
      %v2366 = vsub.s32 %v2363, %v2365
      %v2367 = vrot.slane %v2353, %v2366
      %v2368 = vcombine.low %v2344, %v2360
      %v2369 = vcombine.high %v2344, %v2360
      %v2370 = vcombine.low %v2351, %v2367
      %v2371 = vcombine.high %v2351, %v2367
      %v2372 = vpack.c.bf16 %v2368, %v2368
      %v2373 = vpack.c.bf16 %v2369, %v2369
      %v2374 = vpack.c.bf16 %v2370, %v2370
      %v2375 = vpack.c.bf16 %v2371, %v2371
      %2377 = vrot.lane.b32.xlu0 %v1007, 96
      %v2378 = vpop.permute.xlu0 %2377
      %2380 = vrot.lane.b32.xlu0 %v1007, 64
      %v2381 = vpop.permute.xlu0 %2380
      %2383 = vrot.lane.b32.xlu0 %v1007, 32
      %v2384 = vpop.permute.xlu0 %2383
      %v2386 = vcombine.low %v1007, %v2381
      %v2387 = vcombine.high %v1007, %v2381
      %v2389 = vunpack.c.l.s4 1983009808
      %v2390 = vunpack.c.0.s8 %v2389
      %v2391 = vlaneseq
      %v2392 = vshrl.u32 %v2391, 7
      %v2393 = vsub.s32 %v2390, %v2392
      %v2394 = vrot.slane %v2386, %v2393
      %v2396 = vunpack.c.l.s4 1983009808
      %v2397 = vunpack.c.0.s8 %v2396
      %v2398 = vlaneseq
      %v2399 = vshrl.u32 %v2398, 7
      %v2400 = vsub.s32 %v2397, %v2399
      %v2401 = vrot.slane %v2387, %v2400
      %v2402 = vcombine.low %v2378, %v2384
      %v2403 = vcombine.high %v2378, %v2384
      %v2405 = vunpack.c.l.s4 1983009808
      %v2406 = vunpack.c.0.s8 %v2405
      %v2407 = vlaneseq
      %v2408 = vshrl.u32 %v2407, 7
      %v2409 = vsub.s32 %v2406, %v2408
      %v2410 = vrot.slane %v2402, %v2409
      %v2412 = vunpack.c.l.s4 1983009808
      %v2413 = vunpack.c.0.s8 %v2412
      %v2414 = vlaneseq
      %v2415 = vshrl.u32 %v2414, 7
      %v2416 = vsub.s32 %v2413, %v2415
      %v2417 = vrot.slane %v2403, %v2416
      %v2418 = vcombine.low %v2394, %v2410
      %v2419 = vcombine.high %v2394, %v2410
      %v2421 = vunpack.c.l.s4 1934713408
      %v2422 = vunpack.c.0.s8 %v2421
      %v2423 = vlaneseq
      %v2424 = vshrl.u32 %v2423, 7
      %v2425 = vsub.s32 %v2422, %v2424
      %v2426 = vrot.slane %v2418, %v2425
      %v2428 = vunpack.c.l.s4 1934713408
      %v2429 = vunpack.c.0.s8 %v2428
      %v2430 = vlaneseq
      %v2431 = vshrl.u32 %v2430, 7
      %v2432 = vsub.s32 %v2429, %v2431
      %v2433 = vrot.slane %v2419, %v2432
      %v2434 = vcombine.low %v2401, %v2417
      %v2435 = vcombine.high %v2401, %v2417
      %v2437 = vunpack.c.l.s4 1934713408
      %v2438 = vunpack.c.0.s8 %v2437
      %v2439 = vlaneseq
      %v2440 = vshrl.u32 %v2439, 7
      %v2441 = vsub.s32 %v2438, %v2440
      %v2442 = vrot.slane %v2434, %v2441
      %v2444 = vunpack.c.l.s4 1934713408
      %v2445 = vunpack.c.0.s8 %v2444
      %v2446 = vlaneseq
      %v2447 = vshrl.u32 %v2446, 7
      %v2448 = vsub.s32 %v2445, %v2447
      %v2449 = vrot.slane %v2435, %v2448
      %v2450 = vcombine.high %v2426, 0.0
      %v2451 = vcombine.high %v2433, 0.0
      %v2452 = vcombine.high %v2442, 0.0
      %v2453 = vcombine.high %v2449, 0.0
      %v2454 = vcombine.low %v2426, %v2433
      %v2456 = vunpack.c.l.s4 1983009808
      %v2457 = vunpack.c.0.s8 %v2456
      %v2458 = vlaneseq
      %v2459 = vshrl.u32 %v2458, 7
      %v2460 = vsub.s32 %v2457, %v2459
      %v2461 = vrot.slane %v2454, %v2460
      %v2462 = vcombine.low %v2450, %v2451
      %v2464 = vunpack.c.l.s4 1983009808
      %v2465 = vunpack.c.0.s8 %v2464
      %v2466 = vlaneseq
      %v2467 = vshrl.u32 %v2466, 7
      %v2468 = vsub.s32 %v2465, %v2467
      %v2469 = vrot.slane %v2462, %v2468
      %v2470 = vcombine.low %v2442, %v2449
      %v2472 = vunpack.c.l.s4 1983009808
      %v2473 = vunpack.c.0.s8 %v2472
      %v2474 = vlaneseq
      %v2475 = vshrl.u32 %v2474, 7
      %v2476 = vsub.s32 %v2473, %v2475
      %v2477 = vrot.slane %v2470, %v2476
      %v2478 = vcombine.low %v2452, %v2453
      %v2480 = vunpack.c.l.s4 1983009808
      %v2481 = vunpack.c.0.s8 %v2480
      %v2482 = vlaneseq
      %v2483 = vshrl.u32 %v2482, 7
      %v2484 = vsub.s32 %v2481, %v2483
      %v2485 = vrot.slane %v2478, %v2484
      %v2486 = vcombine.low %v2461, %v2469
      %v2487 = vcombine.high %v2461, %v2469
      %v2489 = vunpack.c.l.s4 1934713408
      %v2490 = vunpack.c.0.s8 %v2489
      %v2491 = vlaneseq
      %v2492 = vshrl.u32 %v2491, 7
      %v2493 = vsub.s32 %v2490, %v2492
      %v2494 = vrot.slane %v2486, %v2493
      %v2496 = vunpack.c.l.s4 1934713408
      %v2497 = vunpack.c.0.s8 %v2496
      %v2498 = vlaneseq
      %v2499 = vshrl.u32 %v2498, 7
      %v2500 = vsub.s32 %v2497, %v2499
      %v2501 = vrot.slane %v2487, %v2500
      %v2502 = vcombine.low %v2477, %v2485
      %v2503 = vcombine.high %v2477, %v2485
      %v2505 = vunpack.c.l.s4 1934713408
      %v2506 = vunpack.c.0.s8 %v2505
      %v2507 = vlaneseq
      %v2508 = vshrl.u32 %v2507, 7
      %v2509 = vsub.s32 %v2506, %v2508
      %v2510 = vrot.slane %v2502, %v2509
      %v2512 = vunpack.c.l.s4 1934713408
      %v2513 = vunpack.c.0.s8 %v2512
      %v2514 = vlaneseq
      %v2515 = vshrl.u32 %v2514, 7
      %v2516 = vsub.s32 %v2513, %v2515
      %v2517 = vrot.slane %v2503, %v2516
      %v2518 = vcombine.low %v2494, %v2510
      %v2519 = vcombine.high %v2494, %v2510
      %v2520 = vcombine.low %v2501, %v2517
      %v2521 = vcombine.high %v2501, %v2517
      %v2522 = vpack.c.bf16 %v2518, %v2518
      %v2523 = vpack.c.bf16 %v2519, %v2519
      %v2524 = vpack.c.bf16 %v2520, %v2520
      %v2525 = vpack.c.bf16 %v2521, %v2521
      %v2527 = vsel %vm1504, %v2222, 0
      %v2530 = vsel %vm1504, %v2372, 0
      %2532 = vmatprep.subr.bf16.mxu0 0
      %2533 = vmatpush1.bf16.xpose.msra.mxu0 %v2530
      %2534 = vmatprep.subr.bf16.mxu0 0
      %2535 = vmatpush1.bf16.xpose.msra.mxu0 0
      %2536 = vmatprep.subr.bf16.mxu0 0
      %2537 = vmatpush1.bf16.xpose.msra.mxu0 0
      %2538 = vmatprep.subr.bf16.mxu0 0
      %2539 = vmatpush1.bf16.xpose.msra.mxu0 0
      %2540 = vmatprep.subr.bf16.mxu0 0
      %2541 = vmatpush1.bf16.xpose.msra.mxu0 0
      %2542 = vmatprep.subr.bf16.mxu0 0
      %2543 = vmatpush1.bf16.xpose.msra.mxu0 0
      %2544 = vmatprep.subr.bf16.mxu0 0
      %2545 = vmatpush1.bf16.xpose.msra.mxu0 0
      %2546 = vmatprep.subr.bf16.mxu0 0
      %2547 = vmatpush1.bf16.xpose.msra.mxu0 0
      %2548 = vmatprep.subr.bf16.mxu0 0
      %2549 = vmatpush1.bf16.xpose.msra.mxu0 0
      %2550 = vmatprep.subr.bf16.mxu0 0
      %2551 = vmatpush1.bf16.xpose.msra.mxu0 0
      %2552 = vmatprep.subr.bf16.mxu0 0
      %2553 = vmatpush1.bf16.xpose.msra.mxu0 0
      %2554 = vmatprep.subr.bf16.mxu0 0
      %2555 = vmatpush1.bf16.xpose.msra.mxu0 0
      %2556 = vmatprep.subr.bf16.mxu0 0
      %2557 = vmatpush1.bf16.xpose.msra.mxu0 0
      %2558 = vmatprep.subr.bf16.mxu0 0
      %2559 = vmatpush1.bf16.xpose.msra.mxu0 0
      %2560 = vmatprep.subr.bf16.mxu0 0
      %2561 = vmatpush1.bf16.xpose.msra.mxu0 0
      %2562 = vmatprep.subr.bf16.mxu0 0
      %2563 = vmatpush1.bf16.xpose.msra.mxu0 0
      %2564 = vmatprep.mubr.bf16.mxu0 0
      %2565 = vmatmul.mubr.bf16.gmra.mrb[0].mxu0 %v2527
      %v2566 = vpop.f32.mrb[0].mxu0
      %v2567 = vadd.f32 0.0, %v2566
      %v2568 = vpop.f32.mrb[0].mxu0
      %v2569 = vpop.f32.mrb[0].mxu0
      %v2570 = vpop.f32.mrb[0].mxu0
      %2571 = vdwg.mxu0
      %v2573 = vsel %vm1504, %v2223, 0
      %v2576 = vsel %vm1504, %v2373, 0
      %2578 = vmatprep.subr.bf16.mxu0 0
      %2579 = vmatpush1.bf16.xpose.msra.mxu0 %v2576
      %2580 = vmatprep.subr.bf16.mxu0 0
      %2581 = vmatpush1.bf16.xpose.msra.mxu0 0
      %2582 = vmatprep.subr.bf16.mxu0 0
      %2583 = vmatpush1.bf16.xpose.msra.mxu0 0
      %2584 = vmatprep.subr.bf16.mxu0 0
      %2585 = vmatpush1.bf16.xpose.msra.mxu0 0
      %2586 = vmatprep.subr.bf16.mxu0 0
      %2587 = vmatpush1.bf16.xpose.msra.mxu0 0
      %2588 = vmatprep.subr.bf16.mxu0 0
      %2589 = vmatpush1.bf16.xpose.msra.mxu0 0
      %2590 = vmatprep.subr.bf16.mxu0 0
      %2591 = vmatpush1.bf16.xpose.msra.mxu0 0
      %2592 = vmatprep.subr.bf16.mxu0 0
      %2593 = vmatpush1.bf16.xpose.msra.mxu0 0
      %2594 = vmatprep.subr.bf16.mxu0 0
      %2595 = vmatpush1.bf16.xpose.msra.mxu0 0
      %2596 = vmatprep.subr.bf16.mxu0 0
      %2597 = vmatpush1.bf16.xpose.msra.mxu0 0
      %2598 = vmatprep.subr.bf16.mxu0 0
      %2599 = vmatpush1.bf16.xpose.msra.mxu0 0
      %2600 = vmatprep.subr.bf16.mxu0 0
      %2601 = vmatpush1.bf16.xpose.msra.mxu0 0
      %2602 = vmatprep.subr.bf16.mxu0 0
      %2603 = vmatpush1.bf16.xpose.msra.mxu0 0
      %2604 = vmatprep.subr.bf16.mxu0 0
      %2605 = vmatpush1.bf16.xpose.msra.mxu0 0
      %2606 = vmatprep.subr.bf16.mxu0 0
      %2607 = vmatpush1.bf16.xpose.msra.mxu0 0
      %2608 = vmatprep.subr.bf16.mxu0 0
      %2609 = vmatpush1.bf16.xpose.msra.mxu0 0
      %2610 = vmatprep.mubr.bf16.mxu0 0
      %2611 = vmatmul.mubr.bf16.gmra.mrb[0].mxu0 %v2573
      %v2612 = vpop.f32.mrb[0].mxu0
      %v2613 = vadd.f32 0.0, %v2612
      %v2614 = vpop.f32.mrb[0].mxu0
      %v2615 = vpop.f32.mrb[0].mxu0
      %v2616 = vpop.f32.mrb[0].mxu0
      %2617 = vdwg.mxu0
      %v2619 = vsel %vm1504, %v2224, 0
      %v2622 = vsel %vm1504, %v2374, 0
      %2624 = vmatprep.subr.bf16.mxu0 0
      %2625 = vmatpush1.bf16.xpose.msra.mxu0 %v2622
      %2626 = vmatprep.subr.bf16.mxu0 0
      %2627 = vmatpush1.bf16.xpose.msra.mxu0 0
      %2628 = vmatprep.subr.bf16.mxu0 0
      %2629 = vmatpush1.bf16.xpose.msra.mxu0 0
      %2630 = vmatprep.subr.bf16.mxu0 0
      %2631 = vmatpush1.bf16.xpose.msra.mxu0 0
      %2632 = vmatprep.subr.bf16.mxu0 0
      %2633 = vmatpush1.bf16.xpose.msra.mxu0 0
      %2634 = vmatprep.subr.bf16.mxu0 0
      %2635 = vmatpush1.bf16.xpose.msra.mxu0 0
      %2636 = vmatprep.subr.bf16.mxu0 0
      %2637 = vmatpush1.bf16.xpose.msra.mxu0 0
      %2638 = vmatprep.subr.bf16.mxu0 0
      %2639 = vmatpush1.bf16.xpose.msra.mxu0 0
      %2640 = vmatprep.subr.bf16.mxu0 0
      %2641 = vmatpush1.bf16.xpose.msra.mxu0 0
      %2642 = vmatprep.subr.bf16.mxu0 0
      %2643 = vmatpush1.bf16.xpose.msra.mxu0 0
      %2644 = vmatprep.subr.bf16.mxu0 0
      %2645 = vmatpush1.bf16.xpose.msra.mxu0 0
      %2646 = vmatprep.subr.bf16.mxu0 0
      %2647 = vmatpush1.bf16.xpose.msra.mxu0 0
      %2648 = vmatprep.subr.bf16.mxu0 0
      %2649 = vmatpush1.bf16.xpose.msra.mxu0 0
      %2650 = vmatprep.subr.bf16.mxu0 0
      %2651 = vmatpush1.bf16.xpose.msra.mxu0 0
      %2652 = vmatprep.subr.bf16.mxu0 0
      %2653 = vmatpush1.bf16.xpose.msra.mxu0 0
      %2654 = vmatprep.subr.bf16.mxu0 0
      %2655 = vmatpush1.bf16.xpose.msra.mxu0 0
      %2656 = vmatprep.mubr.bf16.mxu0 0
      %2657 = vmatmul.mubr.bf16.gmra.mrb[0].mxu0 %v2619
      %v2658 = vpop.f32.mrb[0].mxu0
      %v2659 = vadd.f32 0.0, %v2658
      %v2660 = vpop.f32.mrb[0].mxu0
      %v2661 = vpop.f32.mrb[0].mxu0
      %v2662 = vpop.f32.mrb[0].mxu0
      %2663 = vdwg.mxu0
      %v2665 = vsel %vm1504, %v2225, 0
      %v2668 = vsel %vm1504, %v2375, 0
      %2670 = vmatprep.subr.bf16.mxu0 0
      %2671 = vmatpush1.bf16.xpose.msra.mxu0 %v2668
      %2672 = vmatprep.subr.bf16.mxu0 0
      %2673 = vmatpush1.bf16.xpose.msra.mxu0 0
      %2674 = vmatprep.subr.bf16.mxu0 0
      %2675 = vmatpush1.bf16.xpose.msra.mxu0 0
      %2676 = vmatprep.subr.bf16.mxu0 0
      %2677 = vmatpush1.bf16.xpose.msra.mxu0 0
      %2678 = vmatprep.subr.bf16.mxu0 0
      %2679 = vmatpush1.bf16.xpose.msra.mxu0 0
      %2680 = vmatprep.subr.bf16.mxu0 0
      %2681 = vmatpush1.bf16.xpose.msra.mxu0 0
      %2682 = vmatprep.subr.bf16.mxu0 0
      %2683 = vmatpush1.bf16.xpose.msra.mxu0 0
      %2684 = vmatprep.subr.bf16.mxu0 0
      %2685 = vmatpush1.bf16.xpose.msra.mxu0 0
      %2686 = vmatprep.subr.bf16.mxu0 0
      %2687 = vmatpush1.bf16.xpose.msra.mxu0 0
      %2688 = vmatprep.subr.bf16.mxu0 0
      %2689 = vmatpush1.bf16.xpose.msra.mxu0 0
      %2690 = vmatprep.subr.bf16.mxu0 0
      %2691 = vmatpush1.bf16.xpose.msra.mxu0 0
      %2692 = vmatprep.subr.bf16.mxu0 0
      %2693 = vmatpush1.bf16.xpose.msra.mxu0 0
      %2694 = vmatprep.subr.bf16.mxu0 0
      %2695 = vmatpush1.bf16.xpose.msra.mxu0 0
      %2696 = vmatprep.subr.bf16.mxu0 0
      %2697 = vmatpush1.bf16.xpose.msra.mxu0 0
      %2698 = vmatprep.subr.bf16.mxu0 0
      %2699 = vmatpush1.bf16.xpose.msra.mxu0 0
      %2700 = vmatprep.subr.bf16.mxu0 0
      %2701 = vmatpush1.bf16.xpose.msra.mxu0 0
      %2702 = vmatprep.mubr.bf16.mxu0 0
      %2703 = vmatmul.mubr.bf16.gmra.mrb[0].mxu0 %v2665
      %v2704 = vpop.f32.mrb[0].mxu0
      %v2705 = vadd.f32 0.0, %v2704
      %v2706 = vpop.f32.mrb[0].mxu0
      %v2707 = vpop.f32.mrb[0].mxu0
      %v2708 = vpop.f32.mrb[0].mxu0
      %2709 = vdwg.mxu0
      %v2710 = vsel %vm1689, %v2567, -inf
      %2711 = vmax.xlane.f32.xlu0 %v2710
      %v2712 = vpop.xlane.xlu0 %2711
      %v2713 = vsel %vm1689, %v2613, -inf
      %2714 = vmax.xlane.f32.xlu0 %v2713
      %v2715 = vpop.xlane.xlu0 %2714
      %v2716 = vsel %vm1689, %v2659, -inf
      %2717 = vmax.xlane.f32.xlu0 %v2716
      %v2718 = vpop.xlane.xlu0 %2717
      %v2719 = vsel %vm1689, %v2705, -inf
      %2720 = vmax.xlane.f32.xlu0 %v2719
      %v2721 = vpop.xlane.xlu0 %2720
      %v2722 = vsub.f32 %v2567, %v2712
      %v2723 = vsub.f32 %v2613, %v2715
      %v2724 = vsub.f32 %v2659, %v2718
      %v2725 = vsub.f32 %v2705, %v2721
      %v2726 = vmul.f32 %v2722, 1.442695
      %v2727 = vpow.pop %v2726
      %v2728 = vmul.f32 %v2723, 1.442695
      %v2729 = vpow.pop %v2728
      %v2730 = vmul.f32 %v2724, 1.442695
      %v2731 = vpow.pop %v2730
      %v2732 = vmul.f32 %v2725, 1.442695
      %v2733 = vpow.pop %v2732
      %v2734 = vsel %vm1689, %v2727, 0.0
      %2735 = vadd.xlane.f32.xlu0 %v2734
      %v2736 = vpop.xlane.xlu0 %2735
      %v2737 = vsel %vm1689, %v2729, 0.0
      %2738 = vadd.xlane.f32.xlu0 %v2737
      %v2739 = vpop.xlane.xlu0 %2738
      %v2740 = vsel %vm1689, %v2731, 0.0
      %2741 = vadd.xlane.f32.xlu0 %v2740
      %v2742 = vpop.xlane.xlu0 %2741
      %v2743 = vsel %vm1689, %v2733, 0.0
      %2744 = vadd.xlane.f32.xlu0 %v2743
      %v2745 = vpop.xlane.xlu0 %2744
      %v2746 = vrcp.pop %v2736
      %v2747 = vrcp.pop %v2739
      %v2748 = vrcp.pop %v2742
      %v2749 = vrcp.pop %v2745
      %v2750 = vmul.f32 %v2727, %v2746
      %v2751 = vmul.f32 %v2729, %v2747
      %v2752 = vmul.f32 %v2731, %v2748
      %v2753 = vmul.f32 %v2733, %v2749
      %v2754 = vpack.c.bf16 %v2750, %v2750
      %v2755 = vpack.c.bf16 %v2751, %v2751
      %v2756 = vpack.c.bf16 %v2752, %v2752
      %v2757 = vpack.c.bf16 %v2753, %v2753
      %v2759 = vsel %vm1689, %v2754, 0
      %v2762 = vsel %vm1741, %v2522, 0
      %2764 = vmatprep.subr.bf16.mxu0 0
      %2765 = vmatpush1.bf16.msra.mxu0 %v2762
      %2766 = vmatprep.subr.bf16.mxu0 0
      %2767 = vmatpush1.bf16.msra.mxu0 0
      %2768 = vmatprep.subr.bf16.mxu0 0
      %2769 = vmatpush1.bf16.msra.mxu0 0
      %2770 = vmatprep.subr.bf16.mxu0 0
      %2771 = vmatpush1.bf16.msra.mxu0 0
      %2772 = vmatprep.subr.bf16.mxu0 0
      %2773 = vmatpush1.bf16.msra.mxu0 0
      %2774 = vmatprep.subr.bf16.mxu0 0
      %2775 = vmatpush1.bf16.msra.mxu0 0
      %2776 = vmatprep.subr.bf16.mxu0 0
      %2777 = vmatpush1.bf16.msra.mxu0 0
      %2778 = vmatprep.subr.bf16.mxu0 0
      %2779 = vmatpush1.bf16.msra.mxu0 0
      %2780 = vmatprep.subr.bf16.mxu0 0
      %2781 = vmatpush1.bf16.msra.mxu0 0
      %2782 = vmatprep.subr.bf16.mxu0 0
      %2783 = vmatpush1.bf16.msra.mxu0 0
      %2784 = vmatprep.subr.bf16.mxu0 0
      %2785 = vmatpush1.bf16.msra.mxu0 0
      %2786 = vmatprep.subr.bf16.mxu0 0
      %2787 = vmatpush1.bf16.msra.mxu0 0
      %2788 = vmatprep.subr.bf16.mxu0 0
      %2789 = vmatpush1.bf16.msra.mxu0 0
      %2790 = vmatprep.subr.bf16.mxu0 0
      %2791 = vmatpush1.bf16.msra.mxu0 0
      %2792 = vmatprep.subr.bf16.mxu0 0
      %2793 = vmatpush1.bf16.msra.mxu0 0
      %2794 = vmatprep.subr.bf16.mxu0 0
      %2795 = vmatpush1.bf16.msra.mxu0 0
      %2796 = vmatprep.mubr.bf16.mxu0 0
      %2797 = vmatmul.mubr.bf16.gmra.mrb[0].mxu0 %v2759
      %v2798 = vpop.f32.mrb[0].mxu0
      %v2799 = vadd.f32 0.0, %v2798
      %v2800 = vpop.f32.mrb[0].mxu0
      %v2801 = vpop.f32.mrb[0].mxu0
      %v2802 = vpop.f32.mrb[0].mxu0
      %2803 = vdwg.mxu0
      %v2805 = vsel %vm1689, %v2755, 0
      %v2808 = vsel %vm1741, %v2523, 0
      %2810 = vmatprep.subr.bf16.mxu0 0
      %2811 = vmatpush1.bf16.msra.mxu0 %v2808
      %2812 = vmatprep.subr.bf16.mxu0 0
      %2813 = vmatpush1.bf16.msra.mxu0 0
      %2814 = vmatprep.subr.bf16.mxu0 0
      %2815 = vmatpush1.bf16.msra.mxu0 0
      %2816 = vmatprep.subr.bf16.mxu0 0
      %2817 = vmatpush1.bf16.msra.mxu0 0
      %2818 = vmatprep.subr.bf16.mxu0 0
      %2819 = vmatpush1.bf16.msra.mxu0 0
      %2820 = vmatprep.subr.bf16.mxu0 0
      %2821 = vmatpush1.bf16.msra.mxu0 0
      %2822 = vmatprep.subr.bf16.mxu0 0
      %2823 = vmatpush1.bf16.msra.mxu0 0
      %2824 = vmatprep.subr.bf16.mxu0 0
      %2825 = vmatpush1.bf16.msra.mxu0 0
      %2826 = vmatprep.subr.bf16.mxu0 0
      %2827 = vmatpush1.bf16.msra.mxu0 0
      %2828 = vmatprep.subr.bf16.mxu0 0
      %2829 = vmatpush1.bf16.msra.mxu0 0
      %2830 = vmatprep.subr.bf16.mxu0 0
      %2831 = vmatpush1.bf16.msra.mxu0 0
      %2832 = vmatprep.subr.bf16.mxu0 0
      %2833 = vmatpush1.bf16.msra.mxu0 0
      %2834 = vmatprep.subr.bf16.mxu0 0
      %2835 = vmatpush1.bf16.msra.mxu0 0
      %2836 = vmatprep.subr.bf16.mxu0 0
      %2837 = vmatpush1.bf16.msra.mxu0 0
      %2838 = vmatprep.subr.bf16.mxu0 0
      %2839 = vmatpush1.bf16.msra.mxu0 0
      %2840 = vmatprep.subr.bf16.mxu0 0
      %2841 = vmatpush1.bf16.msra.mxu0 0
      %2842 = vmatprep.mubr.bf16.mxu0 0
      %2843 = vmatmul.mubr.bf16.gmra.mrb[0].mxu0 %v2805
      %v2844 = vpop.f32.mrb[0].mxu0
      %v2845 = vadd.f32 0.0, %v2844
      %v2846 = vpop.f32.mrb[0].mxu0
      %v2847 = vpop.f32.mrb[0].mxu0
      %v2848 = vpop.f32.mrb[0].mxu0
      %2849 = vdwg.mxu0
      %v2851 = vsel %vm1689, %v2756, 0
      %v2854 = vsel %vm1741, %v2524, 0
      %2856 = vmatprep.subr.bf16.mxu0 0
      %2857 = vmatpush1.bf16.msra.mxu0 %v2854
      %2858 = vmatprep.subr.bf16.mxu0 0
      %2859 = vmatpush1.bf16.msra.mxu0 0
      %2860 = vmatprep.subr.bf16.mxu0 0
      %2861 = vmatpush1.bf16.msra.mxu0 0
      %2862 = vmatprep.subr.bf16.mxu0 0
      %2863 = vmatpush1.bf16.msra.mxu0 0
      %2864 = vmatprep.subr.bf16.mxu0 0
      %2865 = vmatpush1.bf16.msra.mxu0 0
      %2866 = vmatprep.subr.bf16.mxu0 0
      %2867 = vmatpush1.bf16.msra.mxu0 0
      %2868 = vmatprep.subr.bf16.mxu0 0
      %2869 = vmatpush1.bf16.msra.mxu0 0
      %2870 = vmatprep.subr.bf16.mxu0 0
      %2871 = vmatpush1.bf16.msra.mxu0 0
      %2872 = vmatprep.subr.bf16.mxu0 0
      %2873 = vmatpush1.bf16.msra.mxu0 0
      %2874 = vmatprep.subr.bf16.mxu0 0
      %2875 = vmatpush1.bf16.msra.mxu0 0
      %2876 = vmatprep.subr.bf16.mxu0 0
      %2877 = vmatpush1.bf16.msra.mxu0 0
      %2878 = vmatprep.subr.bf16.mxu0 0
      %2879 = vmatpush1.bf16.msra.mxu0 0
      %2880 = vmatprep.subr.bf16.mxu0 0
      %2881 = vmatpush1.bf16.msra.mxu0 0
      %2882 = vmatprep.subr.bf16.mxu0 0
      %2883 = vmatpush1.bf16.msra.mxu0 0
      %2884 = vmatprep.subr.bf16.mxu0 0
      %2885 = vmatpush1.bf16.msra.mxu0 0
      %2886 = vmatprep.subr.bf16.mxu0 0
      %2887 = vmatpush1.bf16.msra.mxu0 0
      %2888 = vmatprep.mubr.bf16.mxu0 0
      %2889 = vmatmul.mubr.bf16.gmra.mrb[0].mxu0 %v2851
      %v2890 = vpop.f32.mrb[0].mxu0
      %v2891 = vadd.f32 0.0, %v2890
      %v2892 = vpop.f32.mrb[0].mxu0
      %v2893 = vpop.f32.mrb[0].mxu0
      %v2894 = vpop.f32.mrb[0].mxu0
      %2895 = vdwg.mxu0
      %v2897 = vsel %vm1689, %v2757, 0
      %v2900 = vsel %vm1741, %v2525, 0
      %2902 = vmatprep.subr.bf16.mxu0 0
      %2903 = vmatpush1.bf16.msra.mxu0 %v2900
      %2904 = vmatprep.subr.bf16.mxu0 0
      %2905 = vmatpush1.bf16.msra.mxu0 0
      %2906 = vmatprep.subr.bf16.mxu0 0
      %2907 = vmatpush1.bf16.msra.mxu0 0
      %2908 = vmatprep.subr.bf16.mxu0 0
      %2909 = vmatpush1.bf16.msra.mxu0 0
      %2910 = vmatprep.subr.bf16.mxu0 0
      %2911 = vmatpush1.bf16.msra.mxu0 0
      %2912 = vmatprep.subr.bf16.mxu0 0
      %2913 = vmatpush1.bf16.msra.mxu0 0
      %2914 = vmatprep.subr.bf16.mxu0 0
      %2915 = vmatpush1.bf16.msra.mxu0 0
      %2916 = vmatprep.subr.bf16.mxu0 0
      %2917 = vmatpush1.bf16.msra.mxu0 0
      %2918 = vmatprep.subr.bf16.mxu0 0
      %2919 = vmatpush1.bf16.msra.mxu0 0
      %2920 = vmatprep.subr.bf16.mxu0 0
      %2921 = vmatpush1.bf16.msra.mxu0 0
      %2922 = vmatprep.subr.bf16.mxu0 0
      %2923 = vmatpush1.bf16.msra.mxu0 0
      %2924 = vmatprep.subr.bf16.mxu0 0
      %2925 = vmatpush1.bf16.msra.mxu0 0
      %2926 = vmatprep.subr.bf16.mxu0 0
      %2927 = vmatpush1.bf16.msra.mxu0 0
      %2928 = vmatprep.subr.bf16.mxu0 0
      %2929 = vmatpush1.bf16.msra.mxu0 0
      %2930 = vmatprep.subr.bf16.mxu0 0
      %2931 = vmatpush1.bf16.msra.mxu0 0
      %2932 = vmatprep.subr.bf16.mxu0 0
      %2933 = vmatpush1.bf16.msra.mxu0 0
      %2934 = vmatprep.mubr.bf16.mxu0 0
      %2935 = vmatmul.mubr.bf16.gmra.mrb[0].mxu0 %v2897
      %v2936 = vpop.f32.mrb[0].mxu0
      %v2937 = vadd.f32 0.0, %v2936
      %v2938 = vpop.f32.mrb[0].mxu0
      %v2939 = vpop.f32.mrb[0].mxu0
      %v2940 = vpop.f32.mrb[0].mxu0
      %2941 = vdwg.mxu0
      %v2942 = vcombine.low %v2799, %v2891
      %v2943 = vcombine.high %v2799, %v2891
      %v2945 = vunpack.c.l.s4 1983009808
      %v2946 = vunpack.c.0.s8 %v2945
      %v2947 = vlaneseq
      %v2948 = vshrl.u32 %v2947, 7
      %v2949 = vsub.s32 %v2946, %v2948
      %v2950 = vrot.slane %v2942, %v2949
      %v2952 = vunpack.c.l.s4 1983009808
      %v2953 = vunpack.c.0.s8 %v2952
      %v2954 = vlaneseq
      %v2955 = vshrl.u32 %v2954, 7
      %v2956 = vsub.s32 %v2953, %v2955
      %v2957 = vrot.slane %v2943, %v2956
      %v2958 = vcombine.low %v2845, %v2937
      %v2959 = vcombine.high %v2845, %v2937
      %v2961 = vunpack.c.l.s4 1983009808
      %v2962 = vunpack.c.0.s8 %v2961
      %v2963 = vlaneseq
      %v2964 = vshrl.u32 %v2963, 7
      %v2965 = vsub.s32 %v2962, %v2964
      %v2966 = vrot.slane %v2958, %v2965
      %v2968 = vunpack.c.l.s4 1983009808
      %v2969 = vunpack.c.0.s8 %v2968
      %v2970 = vlaneseq
      %v2971 = vshrl.u32 %v2970, 7
      %v2972 = vsub.s32 %v2969, %v2971
      %v2973 = vrot.slane %v2959, %v2972
      %v2974 = vcombine.low %v2950, %v2966
      %v2975 = vcombine.high %v2950, %v2966
      %v2977 = vunpack.c.l.s4 1934713408
      %v2978 = vunpack.c.0.s8 %v2977
      %v2979 = vlaneseq
      %v2980 = vshrl.u32 %v2979, 7
      %v2981 = vsub.s32 %v2978, %v2980
      %v2982 = vrot.slane %v2974, %v2981
      %v2984 = vunpack.c.l.s4 1934713408
      %v2985 = vunpack.c.0.s8 %v2984
      %v2986 = vlaneseq
      %v2987 = vshrl.u32 %v2986, 7
      %v2988 = vsub.s32 %v2985, %v2987
      %v2989 = vrot.slane %v2975, %v2988
      %v2990 = vcombine.low %v2957, %v2973
      %v2991 = vcombine.high %v2957, %v2973
      %v2993 = vunpack.c.l.s4 1934713408
      %v2994 = vunpack.c.0.s8 %v2993
      %v2995 = vlaneseq
      %v2996 = vshrl.u32 %v2995, 7
      %v2997 = vsub.s32 %v2994, %v2996
      %v2998 = vrot.slane %v2990, %v2997
      %v3000 = vunpack.c.l.s4 1934713408
      %v3001 = vunpack.c.0.s8 %v3000
      %v3002 = vlaneseq
      %v3003 = vshrl.u32 %v3002, 7
      %v3004 = vsub.s32 %v3001, %v3003
      %v3005 = vrot.slane %v2991, %v3004
      %v3006 = vcombine.high %v2982, 0.0
      %v3007 = vcombine.high %v2989, 0.0
      %v3008 = vcombine.high %v2998, 0.0
      %v3009 = vcombine.high %v3005, 0.0
      %v3010 = vcombine.low %v2982, %v2989
      %v3012 = vunpack.c.l.s4 1983009808
      %v3013 = vunpack.c.0.s8 %v3012
      %v3014 = vlaneseq
      %v3015 = vshrl.u32 %v3014, 7
      %v3016 = vsub.s32 %v3013, %v3015
      %v3017 = vrot.slane %v3010, %v3016
      %v3018 = vcombine.low %v3006, %v3007
      %v3020 = vunpack.c.l.s4 1983009808
      %v3021 = vunpack.c.0.s8 %v3020
      %v3022 = vlaneseq
      %v3023 = vshrl.u32 %v3022, 7
      %v3024 = vsub.s32 %v3021, %v3023
      %v3025 = vrot.slane %v3018, %v3024
      %v3026 = vcombine.low %v2998, %v3005
      %v3028 = vunpack.c.l.s4 1983009808
      %v3029 = vunpack.c.0.s8 %v3028
      %v3030 = vlaneseq
      %v3031 = vshrl.u32 %v3030, 7
      %v3032 = vsub.s32 %v3029, %v3031
      %v3033 = vrot.slane %v3026, %v3032
      %v3034 = vcombine.low %v3008, %v3009
      %v3036 = vunpack.c.l.s4 1983009808
      %v3037 = vunpack.c.0.s8 %v3036
      %v3038 = vlaneseq
      %v3039 = vshrl.u32 %v3038, 7
      %v3040 = vsub.s32 %v3037, %v3039
      %v3041 = vrot.slane %v3034, %v3040
      %v3042 = vcombine.low %v3017, %v3025
      %v3043 = vcombine.high %v3017, %v3025
      %v3045 = vunpack.c.l.s4 1934713408
      %v3046 = vunpack.c.0.s8 %v3045
      %v3047 = vlaneseq
      %v3048 = vshrl.u32 %v3047, 7
      %v3049 = vsub.s32 %v3046, %v3048
      %v3050 = vrot.slane %v3042, %v3049
      %v3052 = vunpack.c.l.s4 1934713408
      %v3053 = vunpack.c.0.s8 %v3052
      %v3054 = vlaneseq
      %v3055 = vshrl.u32 %v3054, 7
      %v3056 = vsub.s32 %v3053, %v3055
      %v3057 = vrot.slane %v3043, %v3056
      %v3058 = vcombine.low %v3033, %v3041
      %v3059 = vcombine.high %v3033, %v3041
      %v3061 = vunpack.c.l.s4 1934713408
      %v3062 = vunpack.c.0.s8 %v3061
      %v3063 = vlaneseq
      %v3064 = vshrl.u32 %v3063, 7
      %v3065 = vsub.s32 %v3062, %v3064
      %v3066 = vrot.slane %v3058, %v3065
      %v3068 = vunpack.c.l.s4 1934713408
      %v3069 = vunpack.c.0.s8 %v3068
      %v3070 = vlaneseq
      %v3071 = vshrl.u32 %v3070, 7
      %v3072 = vsub.s32 %v3069, %v3071
      %v3073 = vrot.slane %v3059, %v3072
      %v3074 = vcombine.low %v3050, %v3066
      %v3075 = vcombine.high %v3050, %v3066
      %v3076 = vcombine.low %v3057, %v3073
      %v3077 = vcombine.high %v3057, %v3073
      %3079 = vrot.lane.b32.xlu0 %v3075, 32
      %v3080 = vpop.permute.xlu0 %3079
      %3083 = vrot.lane.b32.xlu0 %v3076, 64
      %v3084 = vpop.permute.xlu0 %3083
      %3087 = vrot.lane.b32.xlu0 %v3077, 96
      %v3088 = vpop.permute.xlu0 %3087
      %v3090 = vsel %vm1504, %v3074, %v3080
      %v3091 = vsel %vm2072, %v3090, %v3084
      %v3092 = vsel %vm2074, %v3091, %v3088
      %v3093 = vpack.c.bf16 %v3092, %v2075
      %v3094 = vld [vmem:[%s579] sm:$0xf]
      %v3095 = vld [vmem:[%s579 + $0x4] sm:$0xf]
      %v3096 = vld [vmem:[%s579 + $0x8] sm:$0xf]
      %v3097 = vld [vmem:[%s579 + $0xc] sm:$0xf]
      %v3098 = vld [vmem:[%s579 + $0x10] sm:$0xf]
      %v3099 = vld [vmem:[%s579 + $0x14] sm:$0xf]
      %v3100 = vld [vmem:[%s579 + $0x18] sm:$0xf]
      %v3101 = vld [vmem:[%s579 + $0x1c] sm:$0xf]
      %v3102 = vld [vmem:[%s579 + $0x20] sm:$0xf]
      %v3103 = vld [vmem:[%s579 + $0x24] sm:$0xf]
      %v3104 = vld [vmem:[%s579 + $0x28] sm:$0xf]
      %v3105 = vld [vmem:[%s579 + $0x2c] sm:$0xf]
      %v3106 = vld [vmem:[%s579 + $0x30] sm:$0xf]
      %v3107 = vld [vmem:[%s579 + $0x34] sm:$0xf]
      %v3108 = vld [vmem:[%s579 + $0x38] sm:$0xf]
      %v3109 = vld [vmem:[%s579 + $0x3c] sm:$0xf]
      %v3110 = vld [vmem:[%s582] sm:$0x1]
      %v3112 = vlaneseq
      %v3113 = vshrl.u32 %v3112, 7
      %v3114 = vsub.s32 0, %v3113
      %v3115 = vrot.slane %v3110, %v3114
      %v3133 = vunpack.c.l.b16 %v3094
      %v3134 = vunpack.c.l.b16 %v3095
      %v3135 = vunpack.c.l.b16 %v3096
      %v3136 = vunpack.c.l.b16 %v3097
      %v3137 = vunpack.c.l.b16 %v3098
      %v3138 = vunpack.c.l.b16 %v3099
      %v3139 = vunpack.c.l.b16 %v3100
      %v3140 = vunpack.c.l.b16 %v3101
      %v3141 = vunpack.c.l.b16 %v3102
      %v3142 = vunpack.c.l.b16 %v3103
      %v3143 = vunpack.c.l.b16 %v3104
      %v3144 = vunpack.c.l.b16 %v3105
      %v3145 = vunpack.c.l.b16 %v3106
      %v3146 = vunpack.c.l.b16 %v3107
      %v3147 = vunpack.c.l.b16 %v3108
      %v3148 = vunpack.c.l.b16 %v3109
      %v3149 = vpack.c.b16 %v3134, %v3133
      %v3150 = vpack.c.b16 %v3136, %v3135
      %v3151 = vpack.c.b16 %v3138, %v3137
      %v3152 = vpack.c.b16 %v3140, %v3139
      %v3153 = vpack.c.b16 %v3142, %v3141
      %v3154 = vpack.c.b16 %v3144, %v3143
      %v3155 = vpack.c.b16 %v3146, %v3145
      %v3156 = vpack.c.b16 %v3148, %v3147
      %3165 = vmatprep.subr.bf16.mxu0 0
      %3166 = vmatpush1.bf16.msra.mxu0 %v3149
      %3167 = vmatprep.subr.bf16.mxu0 0
      %3168 = vmatpush1.bf16.msra.mxu0 %v3150
      %3169 = vmatprep.subr.bf16.mxu0 0
      %3170 = vmatpush1.bf16.msra.mxu0 %v3151
      %3171 = vmatprep.subr.bf16.mxu0 0
      %3172 = vmatpush1.bf16.msra.mxu0 %v3152
      %3173 = vmatprep.subr.bf16.mxu0 0
      %3174 = vmatpush1.bf16.msra.mxu0 %v3153
      %3175 = vmatprep.subr.bf16.mxu0 0
      %3176 = vmatpush1.bf16.msra.mxu0 %v3154
      %3177 = vmatprep.subr.bf16.mxu0 0
      %3178 = vmatpush1.bf16.msra.mxu0 %v3155
      %3179 = vmatprep.subr.bf16.mxu0 0
      %3180 = vmatpush1.bf16.msra.mxu0 %v3156
      %3181 = vmatprep.subr.bf16.mxu0 0
      %3182 = vmatpush1.bf16.msra.mxu0 0
      %3183 = vmatprep.subr.bf16.mxu0 0
      %3184 = vmatpush1.bf16.msra.mxu0 0
      %3185 = vmatprep.subr.bf16.mxu0 0
      %3186 = vmatpush1.bf16.msra.mxu0 0
      %3187 = vmatprep.subr.bf16.mxu0 0
      %3188 = vmatpush1.bf16.msra.mxu0 0
      %3189 = vmatprep.subr.bf16.mxu0 0
      %3190 = vmatpush1.bf16.msra.mxu0 0
      %3191 = vmatprep.subr.bf16.mxu0 0
      %3192 = vmatpush1.bf16.msra.mxu0 0
      %3193 = vmatprep.subr.bf16.mxu0 0
      %3194 = vmatpush1.bf16.msra.mxu0 0
      %3195 = vmatprep.subr.bf16.mxu0 0
      %3196 = vmatpush1.bf16.msra.mxu0 0
      %3197 = vmatprep.mubr.bf16.mxu0 0
      %3198 = vmatmul.mubr.bf16.gmra.mrb[0].mxu0 %v3093
      %v3199 = vpop.f32.mrb[0].mxu0
      %v3200 = vadd.f32 %v3115, %v3199
      %v3201 = vpop.f32.mrb[0].mxu0
      %v3202 = vpop.f32.mrb[0].mxu0
      %v3203 = vadd.f32 %v3115, %v3202
      %v3204 = vpop.f32.mrb[0].mxu0
      %3205 = vdwg.mxu0
      %v3206 = vmul.f32 %v1005, %v3200
      %v3207 = vmul.f32 %v1009, %v3203
      %v3208 = vadd.f32 %v615, %v3206
      %v3209 = vadd.f32 %v616, %v3207
      %v3210 = vadd.f32 %v3208, %v1046
      %v3211 = vadd.f32 %v3209, %v1049
      %v3212 = vld [vmem:[%s585] sm:$0x1]
      %v3213 = vmul.f32 %v3210, %v3210
      %v3214 = vmul.f32 %v3211, %v3211
      %3215 = vadd.xlane.f32.xlu0 %v3213
      %v3216 = vpop.xlane.xlu0 %3215
      %3217 = vadd.xlane.f32.xlu0 %v3214
      %v3218 = vpop.xlane.xlu0 %3217
      %v3219 = vmul.f32 %v3216, %v624
      %v3220 = vmul.f32 %v3218, %v624
      %v3221 = vadd.f32 %v3219, 1e-06
      %v3222 = vadd.f32 %v3220, 1e-06
      %v3223 = vrsqrt.pop %v3221
      %v3224 = vrsqrt.pop %v3222
      %v3225 = vmul.f32 %v3210, %v3223
      %v3226 = vmul.f32 %v3211, %v3224
      %v3228 = vlaneseq
      %v3229 = vshrl.u32 %v3228, 7
      %v3230 = vsub.s32 0, %v3229
      %v3231 = vrot.slane %v3212, %v3230
      %v3233 = vmul.f32 %v3225, %v3231
      %v3234 = vmul.f32 %v3226, %v3231
      %v3235 = vpack.c.bf16 %v3234, %v3233
      %v3236 = vld [vmem:[%s590] sm:$0xff]
      %v3237 = vld [vmem:[%s590 + $0x8] sm:$0xff]
      %v3238 = vld [vmem:[%s590 + $0x10] sm:$0xff]
      %v3239 = vld [vmem:[%s590 + $0x18] sm:$0xff]
      %v3240 = vld [vmem:[%s590 + $0x20] sm:$0xff]
      %v3241 = vld [vmem:[%s590 + $0x28] sm:$0xff]
      %v3242 = vld [vmem:[%s590 + $0x30] sm:$0xff]
      %v3243 = vld [vmem:[%s590 + $0x38] sm:$0xff]
      %v3244 = vld [vmem:[%s590 + $0x40] sm:$0xff]
      %v3245 = vld [vmem:[%s590 + $0x48] sm:$0xff]
      %v3246 = vld [vmem:[%s590 + $0x50] sm:$0xff]
      %v3247 = vld [vmem:[%s590 + $0x58] sm:$0xff]
      %v3248 = vld [vmem:[%s590 + $0x60] sm:$0xff]
      %v3249 = vld [vmem:[%s590 + $0x68] sm:$0xff]
      %v3250 = vld [vmem:[%s590 + $0x70] sm:$0xff]
      %v3251 = vld [vmem:[%s590 + $0x78] sm:$0xff]
      %v3252 = vld [vmem:[%s590 + $0x80] sm:$0xff]
      %v3253 = vld [vmem:[%s590 + $0x88] sm:$0xff]
      %v3254 = vld [vmem:[%s590 + $0x90] sm:$0xff]
      %v3255 = vld [vmem:[%s590 + $0x98] sm:$0xff]
      %v3256 = vld [vmem:[%s590 + $0xa0] sm:$0xff]
      %v3257 = vld [vmem:[%s590 + $0xa8] sm:$0xff]
      %v3258 = vld [vmem:[%s590 + $0xb0] sm:$0xff]
      %v3259 = vld [vmem:[%s590 + $0xb8] sm:$0xff]
      %v3260 = vld [vmem:[%s590 + $0xc0] sm:$0xff]
      %v3261 = vld [vmem:[%s590 + $0xc8] sm:$0xff]
      %v3262 = vld [vmem:[%s590 + $0xd0] sm:$0xff]
      %v3263 = vld [vmem:[%s590 + $0xd8] sm:$0xff]
      %v3264 = vld [vmem:[%s590 + $0xe0] sm:$0xff]
      %v3265 = vld [vmem:[%s590 + $0xe8] sm:$0xff]
      %v3266 = vld [vmem:[%s590 + $0xf0] sm:$0xff]
      %v3267 = vld [vmem:[%s590 + $0xf8] sm:$0xff]
      %v3268 = vld [vmem:[%s590 + $0x100] sm:$0xff]
      %v3269 = vld [vmem:[%s590 + $0x108] sm:$0xff]
      %v3270 = vld [vmem:[%s590 + $0x110] sm:$0xff]
      %v3271 = vld [vmem:[%s590 + $0x118] sm:$0xff]
      %v3272 = vld [vmem:[%s590 + $0x120] sm:$0xff]
      %v3273 = vld [vmem:[%s590 + $0x128] sm:$0xff]
      %v3274 = vld [vmem:[%s590 + $0x130] sm:$0xff]
      %v3275 = vld [vmem:[%s590 + $0x138] sm:$0xff]
      %v3276 = vld [vmem:[%s590 + $0x140] sm:$0xff]
      %v3277 = vld [vmem:[%s590 + $0x148] sm:$0xff]
      %v3278 = vld [vmem:[%s590 + $0x150] sm:$0xff]
      %v3279 = vld [vmem:[%s590 + $0x158] sm:$0xff]
      %v3280 = vld [vmem:[%s590 + $0x160] sm:$0xff]
      %v3281 = vld [vmem:[%s590 + $0x168] sm:$0xff]
      %v3282 = vld [vmem:[%s590 + $0x170] sm:$0xff]
      %v3283 = vld [vmem:[%s590 + $0x178] sm:$0xff]
      %v3284 = vld [vmem:[%s594] sm:$0x3f]
      %v3286 = vlaneseq
      %v3287 = vshrl.u32 %v3286, 7
      %v3288 = vsub.s32 0, %v3287
      %v3289 = vrot.slane %v3284, %v3288
      %v3290 = vlaneseq
      %v3291 = vshrl.u32 %v3290, 7
      %v3292 = vsub.s32 1, %v3291
      %v3293 = vrot.slane %v3284, %v3292
      %v3294 = vlaneseq
      %v3295 = vshrl.u32 %v3294, 7
      %v3296 = vsub.s32 2, %v3295
      %v3297 = vrot.slane %v3284, %v3296
      %v3298 = vlaneseq
      %v3299 = vshrl.u32 %v3298, 7
      %v3300 = vsub.s32 3, %v3299
      %v3301 = vrot.slane %v3284, %v3300
      %v3302 = vlaneseq
      %v3303 = vshrl.u32 %v3302, 7
      %v3304 = vsub.s32 4, %v3303
      %v3305 = vrot.slane %v3284, %v3304
      %v3306 = vlaneseq
      %v3307 = vshrl.u32 %v3306, 7
      %v3308 = vsub.s32 5, %v3307
      %v3309 = vrot.slane %v3284, %v3308
      %v3364 = vunpack.c.l.b16 %v3236
      %v3365 = vunpack.c.h.b16 %v3236
      %v3366 = vunpack.c.l.b16 %v3237
      %v3367 = vunpack.c.h.b16 %v3237
      %v3368 = vunpack.c.l.b16 %v3238
      %v3369 = vunpack.c.h.b16 %v3238
      %v3370 = vunpack.c.l.b16 %v3239
      %v3371 = vunpack.c.h.b16 %v3239
      %v3372 = vunpack.c.l.b16 %v3240
      %v3373 = vunpack.c.h.b16 %v3240
      %v3374 = vunpack.c.l.b16 %v3241
      %v3375 = vunpack.c.h.b16 %v3241
      %v3376 = vunpack.c.l.b16 %v3242
      %v3377 = vunpack.c.h.b16 %v3242
      %v3378 = vunpack.c.l.b16 %v3243
      %v3379 = vunpack.c.h.b16 %v3243
      %v3380 = vunpack.c.l.b16 %v3244
      %v3381 = vunpack.c.h.b16 %v3244
      %v3382 = vunpack.c.l.b16 %v3245
      %v3383 = vunpack.c.h.b16 %v3245
      %v3384 = vunpack.c.l.b16 %v3246
      %v3385 = vunpack.c.h.b16 %v3246
      %v3386 = vunpack.c.l.b16 %v3247
      %v3387 = vunpack.c.h.b16 %v3247
      %v3388 = vunpack.c.l.b16 %v3248
      %v3389 = vunpack.c.h.b16 %v3248
      %v3390 = vunpack.c.l.b16 %v3249
      %v3391 = vunpack.c.h.b16 %v3249
      %v3392 = vunpack.c.l.b16 %v3250
      %v3393 = vunpack.c.h.b16 %v3250
      %v3394 = vunpack.c.l.b16 %v3251
      %v3395 = vunpack.c.h.b16 %v3251
      %v3396 = vunpack.c.l.b16 %v3252
      %v3397 = vunpack.c.h.b16 %v3252
      %v3398 = vunpack.c.l.b16 %v3253
      %v3399 = vunpack.c.h.b16 %v3253
      %v3400 = vunpack.c.l.b16 %v3254
      %v3401 = vunpack.c.h.b16 %v3254
      %v3402 = vunpack.c.l.b16 %v3255
      %v3403 = vunpack.c.h.b16 %v3255
      %v3404 = vunpack.c.l.b16 %v3256
      %v3405 = vunpack.c.h.b16 %v3256
      %v3406 = vunpack.c.l.b16 %v3257
      %v3407 = vunpack.c.h.b16 %v3257
      %v3408 = vunpack.c.l.b16 %v3258
      %v3409 = vunpack.c.h.b16 %v3258
      %v3410 = vunpack.c.l.b16 %v3259
      %v3411 = vunpack.c.h.b16 %v3259
      %v3412 = vunpack.c.l.b16 %v3260
      %v3413 = vunpack.c.h.b16 %v3260
      %v3414 = vunpack.c.l.b16 %v3261
      %v3415 = vunpack.c.h.b16 %v3261
      %v3416 = vunpack.c.l.b16 %v3262
      %v3417 = vunpack.c.h.b16 %v3262
      %v3418 = vunpack.c.l.b16 %v3263
      %v3419 = vunpack.c.h.b16 %v3263
      %v3420 = vunpack.c.l.b16 %v3264
      %v3421 = vunpack.c.h.b16 %v3264
      %v3422 = vunpack.c.l.b16 %v3265
      %v3423 = vunpack.c.h.b16 %v3265
      %v3424 = vunpack.c.l.b16 %v3266
      %v3425 = vunpack.c.h.b16 %v3266
      %v3426 = vunpack.c.l.b16 %v3267
      %v3427 = vunpack.c.h.b16 %v3267
      %v3428 = vunpack.c.l.b16 %v3268
      %v3429 = vunpack.c.h.b16 %v3268
      %v3430 = vunpack.c.l.b16 %v3269
      %v3431 = vunpack.c.h.b16 %v3269
      %v3432 = vunpack.c.l.b16 %v3270
      %v3433 = vunpack.c.h.b16 %v3270
      %v3434 = vunpack.c.l.b16 %v3271
      %v3435 = vunpack.c.h.b16 %v3271
      %v3436 = vunpack.c.l.b16 %v3272
      %v3437 = vunpack.c.h.b16 %v3272
      %v3438 = vunpack.c.l.b16 %v3273
      %v3439 = vunpack.c.h.b16 %v3273
      %v3440 = vunpack.c.l.b16 %v3274
      %v3441 = vunpack.c.h.b16 %v3274
      %v3442 = vunpack.c.l.b16 %v3275
      %v3443 = vunpack.c.h.b16 %v3275
      %v3444 = vunpack.c.l.b16 %v3276
      %v3445 = vunpack.c.h.b16 %v3276
      %v3446 = vunpack.c.l.b16 %v3277
      %v3447 = vunpack.c.h.b16 %v3277
      %v3448 = vunpack.c.l.b16 %v3278
      %v3449 = vunpack.c.h.b16 %v3278
      %v3450 = vunpack.c.l.b16 %v3279
      %v3451 = vunpack.c.h.b16 %v3279
      %v3452 = vunpack.c.l.b16 %v3280
      %v3453 = vunpack.c.h.b16 %v3280
      %v3454 = vunpack.c.l.b16 %v3281
      %v3455 = vunpack.c.h.b16 %v3281
      %v3456 = vunpack.c.l.b16 %v3282
      %v3457 = vunpack.c.h.b16 %v3282
      %v3458 = vunpack.c.l.b16 %v3283
      %v3459 = vunpack.c.h.b16 %v3283
      %v3460 = vpack.c.b16 %v3370, %v3364
      %v3461 = vpack.c.b16 %v3371, %v3365
      %v3462 = vpack.c.b16 %v3372, %v3366
      %v3463 = vpack.c.b16 %v3373, %v3367
      %v3464 = vpack.c.b16 %v3374, %v3368
      %v3465 = vpack.c.b16 %v3375, %v3369
      %v3466 = vpack.c.b16 %v3382, %v3376
      %v3467 = vpack.c.b16 %v3383, %v3377
      %v3468 = vpack.c.b16 %v3384, %v3378
      %v3469 = vpack.c.b16 %v3385, %v3379
      %v3470 = vpack.c.b16 %v3386, %v3380
      %v3471 = vpack.c.b16 %v3387, %v3381
      %v3472 = vpack.c.b16 %v3394, %v3388
      %v3473 = vpack.c.b16 %v3395, %v3389
      %v3474 = vpack.c.b16 %v3396, %v3390
      %v3475 = vpack.c.b16 %v3397, %v3391
      %v3476 = vpack.c.b16 %v3398, %v3392
      %v3477 = vpack.c.b16 %v3399, %v3393
      %v3478 = vpack.c.b16 %v3406, %v3400
      %v3479 = vpack.c.b16 %v3407, %v3401
      %v3480 = vpack.c.b16 %v3408, %v3402
      %v3481 = vpack.c.b16 %v3409, %v3403
      %v3482 = vpack.c.b16 %v3410, %v3404
      %v3483 = vpack.c.b16 %v3411, %v3405
      %v3484 = vpack.c.b16 %v3418, %v3412
      %v3485 = vpack.c.b16 %v3419, %v3413
      %v3486 = vpack.c.b16 %v3420, %v3414
      %v3487 = vpack.c.b16 %v3421, %v3415
      %v3488 = vpack.c.b16 %v3422, %v3416
      %v3489 = vpack.c.b16 %v3423, %v3417
      %v3490 = vpack.c.b16 %v3430, %v3424
      %v3491 = vpack.c.b16 %v3431, %v3425
      %v3492 = vpack.c.b16 %v3432, %v3426
      %v3493 = vpack.c.b16 %v3433, %v3427
      %v3494 = vpack.c.b16 %v3434, %v3428
      %v3495 = vpack.c.b16 %v3435, %v3429
      %v3496 = vpack.c.b16 %v3442, %v3436
      %v3497 = vpack.c.b16 %v3443, %v3437
      %v3498 = vpack.c.b16 %v3444, %v3438
      %v3499 = vpack.c.b16 %v3445, %v3439
      %v3500 = vpack.c.b16 %v3446, %v3440
      %v3501 = vpack.c.b16 %v3447, %v3441
      %v3502 = vpack.c.b16 %v3454, %v3448
      %v3503 = vpack.c.b16 %v3455, %v3449
      %v3504 = vpack.c.b16 %v3456, %v3450
      %v3505 = vpack.c.b16 %v3457, %v3451
      %v3506 = vpack.c.b16 %v3458, %v3452
      %v3507 = vpack.c.b16 %v3459, %v3453
      %3556 = vmatprep.subr.bf16.mxu0 %v3461
      %3557 = vmatpush1.bf16.msra.mxu0 %v3460
      %3558 = vmatprep.subr.bf16.mxu0 %v3467
      %3559 = vmatpush1.bf16.msra.mxu0 %v3466
      %3560 = vmatprep.subr.bf16.mxu0 %v3473
      %3561 = vmatpush1.bf16.msra.mxu0 %v3472
      %3562 = vmatprep.subr.bf16.mxu0 %v3479
      %3563 = vmatpush1.bf16.msra.mxu0 %v3478
      %3564 = vmatprep.subr.bf16.mxu0 %v3485
      %3565 = vmatpush1.bf16.msra.mxu0 %v3484
      %3566 = vmatprep.subr.bf16.mxu0 %v3491
      %3567 = vmatpush1.bf16.msra.mxu0 %v3490
      %3568 = vmatprep.subr.bf16.mxu0 %v3497
      %3569 = vmatpush1.bf16.msra.mxu0 %v3496
      %3570 = vmatprep.subr.bf16.mxu0 %v3503
      %3571 = vmatpush1.bf16.msra.mxu0 %v3502
      %3572 = vmatprep.subr.bf16.mxu0 0
      %3573 = vmatpush1.bf16.msra.mxu0 0
      %3574 = vmatprep.subr.bf16.mxu0 0
      %3575 = vmatpush1.bf16.msra.mxu0 0
      %3576 = vmatprep.subr.bf16.mxu0 0
      %3577 = vmatpush1.bf16.msra.mxu0 0
      %3578 = vmatprep.subr.bf16.mxu0 0
      %3579 = vmatpush1.bf16.msra.mxu0 0
      %3580 = vmatprep.subr.bf16.mxu0 0
      %3581 = vmatpush1.bf16.msra.mxu0 0
      %3582 = vmatprep.subr.bf16.mxu0 0
      %3583 = vmatpush1.bf16.msra.mxu0 0
      %3584 = vmatprep.subr.bf16.mxu0 0
      %3585 = vmatpush1.bf16.msra.mxu0 0
      %3586 = vmatprep.subr.bf16.mxu0 0
      %3587 = vmatpush1.bf16.msra.mxu0 0
      %3588 = vmatprep.mubr.bf16.mxu0 0
      %3589 = vmatmul.mubr.bf16.gmra.mrb[0].mxu0 %v3235
      %v3590 = vpop.f32.mrb[0].mxu0
      %v3591 = vadd.f32 %v3289, %v3590
      %v3592 = vpop.f32.mrb[0].mxu0
      %v3593 = vadd.f32 %v3293, %v3592
      %v3594 = vpop.f32.mrb[0].mxu0
      %v3595 = vadd.f32 %v3289, %v3594
      %v3596 = vpop.f32.mrb[0].mxu0
      %v3597 = vadd.f32 %v3293, %v3596
      %3598 = vdwg.mxu0
      %3599 = vmatprep.subr.bf16.mxu0 %v3463
      %3600 = vmatpush1.bf16.msra.mxu0 %v3462
      %3601 = vmatprep.subr.bf16.mxu0 %v3469
      %3602 = vmatpush1.bf16.msra.mxu0 %v3468
      %3603 = vmatprep.subr.bf16.mxu0 %v3475
      %3604 = vmatpush1.bf16.msra.mxu0 %v3474
      %3605 = vmatprep.subr.bf16.mxu0 %v3481
      %3606 = vmatpush1.bf16.msra.mxu0 %v3480
      %3607 = vmatprep.subr.bf16.mxu0 %v3487
      %3608 = vmatpush1.bf16.msra.mxu0 %v3486
      %3609 = vmatprep.subr.bf16.mxu0 %v3493
      %3610 = vmatpush1.bf16.msra.mxu0 %v3492
      %3611 = vmatprep.subr.bf16.mxu0 %v3499
      %3612 = vmatpush1.bf16.msra.mxu0 %v3498
      %3613 = vmatprep.subr.bf16.mxu0 %v3505
      %3614 = vmatpush1.bf16.msra.mxu0 %v3504
      %3615 = vmatprep.subr.bf16.mxu0 0
      %3616 = vmatpush1.bf16.msra.mxu0 0
      %3617 = vmatprep.subr.bf16.mxu0 0
      %3618 = vmatpush1.bf16.msra.mxu0 0
      %3619 = vmatprep.subr.bf16.mxu0 0
      %3620 = vmatpush1.bf16.msra.mxu0 0
      %3621 = vmatprep.subr.bf16.mxu0 0
      %3622 = vmatpush1.bf16.msra.mxu0 0
      %3623 = vmatprep.subr.bf16.mxu0 0
      %3624 = vmatpush1.bf16.msra.mxu0 0
      %3625 = vmatprep.subr.bf16.mxu0 0
      %3626 = vmatpush1.bf16.msra.mxu0 0
      %3627 = vmatprep.subr.bf16.mxu0 0
      %3628 = vmatpush1.bf16.msra.mxu0 0
      %3629 = vmatprep.subr.bf16.mxu0 0
      %3630 = vmatpush1.bf16.msra.mxu0 0
      %3631 = vmatprep.mubr.bf16.mxu0 0
      %3632 = vmatmul.mubr.bf16.gmra.mrb[0].mxu0 %v3235
      %v3633 = vpop.f32.mrb[0].mxu0
      %v3634 = vadd.f32 %v3297, %v3633
      %v3635 = vpop.f32.mrb[0].mxu0
      %v3636 = vadd.f32 %v3301, %v3635
      %v3637 = vpop.f32.mrb[0].mxu0
      %v3638 = vadd.f32 %v3297, %v3637
      %v3639 = vpop.f32.mrb[0].mxu0
      %v3640 = vadd.f32 %v3301, %v3639
      %3641 = vdwg.mxu0
      %3642 = vmatprep.subr.bf16.mxu0 %v3465
      %3643 = vmatpush1.bf16.msra.mxu0 %v3464
      %3644 = vmatprep.subr.bf16.mxu0 %v3471
      %3645 = vmatpush1.bf16.msra.mxu0 %v3470
      %3646 = vmatprep.subr.bf16.mxu0 %v3477
      %3647 = vmatpush1.bf16.msra.mxu0 %v3476
      %3648 = vmatprep.subr.bf16.mxu0 %v3483
      %3649 = vmatpush1.bf16.msra.mxu0 %v3482
      %3650 = vmatprep.subr.bf16.mxu0 %v3489
      %3651 = vmatpush1.bf16.msra.mxu0 %v3488
      %3652 = vmatprep.subr.bf16.mxu0 %v3495
      %3653 = vmatpush1.bf16.msra.mxu0 %v3494
      %3654 = vmatprep.subr.bf16.mxu0 %v3501
      %3655 = vmatpush1.bf16.msra.mxu0 %v3500
      %3656 = vmatprep.subr.bf16.mxu0 %v3507
      %3657 = vmatpush1.bf16.msra.mxu0 %v3506
      %3658 = vmatprep.subr.bf16.mxu0 0
      %3659 = vmatpush1.bf16.msra.mxu0 0
      %3660 = vmatprep.subr.bf16.mxu0 0
      %3661 = vmatpush1.bf16.msra.mxu0 0
      %3662 = vmatprep.subr.bf16.mxu0 0
      %3663 = vmatpush1.bf16.msra.mxu0 0
      %3664 = vmatprep.subr.bf16.mxu0 0
      %3665 = vmatpush1.bf16.msra.mxu0 0
      %3666 = vmatprep.subr.bf16.mxu0 0
      %3667 = vmatpush1.bf16.msra.mxu0 0
      %3668 = vmatprep.subr.bf16.mxu0 0
      %3669 = vmatpush1.bf16.msra.mxu0 0
      %3670 = vmatprep.subr.bf16.mxu0 0
      %3671 = vmatpush1.bf16.msra.mxu0 0
      %3672 = vmatprep.subr.bf16.mxu0 0
      %3673 = vmatpush1.bf16.msra.mxu0 0
      %3674 = vmatprep.mubr.bf16.mxu0 0
      %3675 = vmatmul.mubr.bf16.gmra.mrb[0].mxu0 %v3235
      %v3676 = vpop.f32.mrb[0].mxu0
      %v3677 = vadd.f32 %v3305, %v3676
      %v3678 = vpop.f32.mrb[0].mxu0
      %v3679 = vadd.f32 %v3309, %v3678
      %v3680 = vpop.f32.mrb[0].mxu0
      %v3681 = vadd.f32 %v3305, %v3680
      %v3682 = vpop.f32.mrb[0].mxu0
      %v3683 = vadd.f32 %v3309, %v3682
      %3684 = vdwg.mxu0
      %v3685 = vmul.f32 %v3591, 0.5
      %v3686 = vmul.f32 %v3593, 0.5
      %v3687 = vmul.f32 %v3634, 0.5
      %v3688 = vmul.f32 %v3636, 0.5
      %v3689 = vmul.f32 %v3595, 0.5
      %v3690 = vmul.f32 %v3597, 0.5
      %v3691 = vmul.f32 %v3638, 0.5
      %v3692 = vmul.f32 %v3640, 0.5
      %v3693 = vmul.f32 %v3591, 0.70710677
      %v3694 = vmul.f32 %v3593, 0.70710677
      %v3695 = vmul.f32 %v3634, 0.70710677
      %v3696 = vmul.f32 %v3636, 0.70710677
      %v3697 = vmul.f32 %v3595, 0.70710677
      %v3698 = vmul.f32 %v3597, 0.70710677
      %v3699 = vmul.f32 %v3638, 0.70710677
      %v3700 = vmul.f32 %v3640, 0.70710677
      %v3701 = vand.u32 2147483647, %v3693
      %v3702 = vand.u32 2147483647, %v3694
      %v3703 = vand.u32 2147483647, %v3695
      %v3704 = vand.u32 2147483647, %v3696
      %v3705 = vand.u32 2147483647, %v3697
      %v3706 = vand.u32 2147483647, %v3698
      %v3707 = vand.u32 2147483647, %v3699
      %v3708 = vand.u32 2147483647, %v3700
      %v3709 = vmul.f32 %v3701, 0.3275911
      %v3710 = vmul.f32 %v3702, 0.3275911
      %v3711 = vmul.f32 %v3703, 0.3275911
      %v3712 = vmul.f32 %v3704, 0.3275911
      %v3713 = vmul.f32 %v3705, 0.3275911
      %v3714 = vmul.f32 %v3706, 0.3275911
      %v3715 = vmul.f32 %v3707, 0.3275911
      %v3716 = vmul.f32 %v3708, 0.3275911
      %v3717 = vadd.f32 %v3709, 1.0
      %v3718 = vadd.f32 %v3710, 1.0
      %v3719 = vadd.f32 %v3711, 1.0
      %v3720 = vadd.f32 %v3712, 1.0
      %v3721 = vadd.f32 %v3713, 1.0
      %v3722 = vadd.f32 %v3714, 1.0
      %v3723 = vadd.f32 %v3715, 1.0
      %v3724 = vadd.f32 %v3716, 1.0
      %v3725 = vrcp.pop %v3717
      %v3726 = vmul.f32 1.0, %v3725
      %v3727 = vrcp.pop %v3718
      %v3728 = vmul.f32 1.0, %v3727
      %v3729 = vrcp.pop %v3719
      %v3730 = vmul.f32 1.0, %v3729
      %v3731 = vrcp.pop %v3720
      %v3732 = vmul.f32 1.0, %v3731
      %v3733 = vrcp.pop %v3721
      %v3734 = vmul.f32 1.0, %v3733
      %v3735 = vrcp.pop %v3722
      %v3736 = vmul.f32 1.0, %v3735
      %v3737 = vrcp.pop %v3723
      %v3738 = vmul.f32 1.0, %v3737
      %v3739 = vrcp.pop %v3724
      %v3740 = vmul.f32 1.0, %v3739
      %v3741 = vmul.f32 %v3726, 1.0614054
      %v3742 = vmul.f32 %v3728, 1.0614054
      %v3743 = vmul.f32 %v3730, 1.0614054
      %v3744 = vmul.f32 %v3732, 1.0614054
      %v3745 = vmul.f32 %v3734, 1.0614054
      %v3746 = vmul.f32 %v3736, 1.0614054
      %v3747 = vmul.f32 %v3738, 1.0614054
      %v3748 = vmul.f32 %v3740, 1.0614054
      %v3749 = vadd.f32 %v3741, -1.4531521
      %v3750 = vadd.f32 %v3742, -1.4531521
      %v3751 = vadd.f32 %v3743, -1.4531521
      %v3752 = vadd.f32 %v3744, -1.4531521
      %v3753 = vadd.f32 %v3745, -1.4531521
      %v3754 = vadd.f32 %v3746, -1.4531521
      %v3755 = vadd.f32 %v3747, -1.4531521
      %v3756 = vadd.f32 %v3748, -1.4531521
      %v3757 = vmul.f32 %v3749, %v3726
      %v3758 = vmul.f32 %v3750, %v3728
      %v3759 = vmul.f32 %v3751, %v3730
      %v3760 = vmul.f32 %v3752, %v3732
      %v3761 = vmul.f32 %v3753, %v3734
      %v3762 = vmul.f32 %v3754, %v3736
      %v3763 = vmul.f32 %v3755, %v3738
      %v3764 = vmul.f32 %v3756, %v3740
      %v3765 = vadd.f32 %v3757, 1.4214138
      %v3766 = vadd.f32 %v3758, 1.4214138
      %v3767 = vadd.f32 %v3759, 1.4214138
      %v3768 = vadd.f32 %v3760, 1.4214138
      %v3769 = vadd.f32 %v3761, 1.4214138
      %v3770 = vadd.f32 %v3762, 1.4214138
      %v3771 = vadd.f32 %v3763, 1.4214138
      %v3772 = vadd.f32 %v3764, 1.4214138
      %v3773 = vmul.f32 %v3765, %v3726
      %v3774 = vmul.f32 %v3766, %v3728
      %v3775 = vmul.f32 %v3767, %v3730
      %v3776 = vmul.f32 %v3768, %v3732
      %v3777 = vmul.f32 %v3769, %v3734
      %v3778 = vmul.f32 %v3770, %v3736
      %v3779 = vmul.f32 %v3771, %v3738
      %v3780 = vmul.f32 %v3772, %v3740
      %v3781 = vadd.f32 %v3773, -0.28449672
      %v3782 = vadd.f32 %v3774, -0.28449672
      %v3783 = vadd.f32 %v3775, -0.28449672
      %v3784 = vadd.f32 %v3776, -0.28449672
      %v3785 = vadd.f32 %v3777, -0.28449672
      %v3786 = vadd.f32 %v3778, -0.28449672
      %v3787 = vadd.f32 %v3779, -0.28449672
      %v3788 = vadd.f32 %v3780, -0.28449672
      %v3789 = vmul.f32 %v3781, %v3726
      %v3790 = vmul.f32 %v3782, %v3728
      %v3791 = vmul.f32 %v3783, %v3730
      %v3792 = vmul.f32 %v3784, %v3732
      %v3793 = vmul.f32 %v3785, %v3734
      %v3794 = vmul.f32 %v3786, %v3736
      %v3795 = vmul.f32 %v3787, %v3738
      %v3796 = vmul.f32 %v3788, %v3740
      %v3797 = vadd.f32 %v3789, 0.2548296
      %v3798 = vadd.f32 %v3790, 0.2548296
      %v3799 = vadd.f32 %v3791, 0.2548296
      %v3800 = vadd.f32 %v3792, 0.2548296
      %v3801 = vadd.f32 %v3793, 0.2548296
      %v3802 = vadd.f32 %v3794, 0.2548296
      %v3803 = vadd.f32 %v3795, 0.2548296
      %v3804 = vadd.f32 %v3796, 0.2548296
      %v3805 = vmul.f32 %v3797, %v3726
      %v3806 = vmul.f32 %v3798, %v3728
      %v3807 = vmul.f32 %v3799, %v3730
      %v3808 = vmul.f32 %v3800, %v3732
      %v3809 = vmul.f32 %v3801, %v3734
      %v3810 = vmul.f32 %v3802, %v3736
      %v3811 = vmul.f32 %v3803, %v3738
      %v3812 = vmul.f32 %v3804, %v3740
      %v3813 = vsub.f32 0.0, %v3701
      %v3814 = vsub.f32 0.0, %v3702
      %v3815 = vsub.f32 0.0, %v3703
      %v3816 = vsub.f32 0.0, %v3704
      %v3817 = vsub.f32 0.0, %v3705
      %v3818 = vsub.f32 0.0, %v3706
      %v3819 = vsub.f32 0.0, %v3707
      %v3820 = vsub.f32 0.0, %v3708
      %v3821 = vmul.f32 %v3813, %v3701
      %v3822 = vmul.f32 %v3814, %v3702
      %v3823 = vmul.f32 %v3815, %v3703
      %v3824 = vmul.f32 %v3816, %v3704
      %v3825 = vmul.f32 %v3817, %v3705
      %v3826 = vmul.f32 %v3818, %v3706
      %v3827 = vmul.f32 %v3819, %v3707
      %v3828 = vmul.f32 %v3820, %v3708
      %v3829 = vmul.f32 %v3821, 1.442695
      %v3830 = vpow.pop %v3829
      %v3831 = vmul.f32 %v3822, 1.442695
      %v3832 = vpow.pop %v3831
      %v3833 = vmul.f32 %v3823, 1.442695
      %v3834 = vpow.pop %v3833
      %v3835 = vmul.f32 %v3824, 1.442695
      %v3836 = vpow.pop %v3835
      %v3837 = vmul.f32 %v3825, 1.442695
      %v3838 = vpow.pop %v3837
      %v3839 = vmul.f32 %v3826, 1.442695
      %v3840 = vpow.pop %v3839
      %v3841 = vmul.f32 %v3827, 1.442695
      %v3842 = vpow.pop %v3841
      %v3843 = vmul.f32 %v3828, 1.442695
      %v3844 = vpow.pop %v3843
      %v3845 = vmul.f32 %v3805, %v3830
      %v3846 = vmul.f32 %v3806, %v3832
      %v3847 = vmul.f32 %v3807, %v3834
      %v3848 = vmul.f32 %v3808, %v3836
      %v3849 = vmul.f32 %v3809, %v3838
      %v3850 = vmul.f32 %v3810, %v3840
      %v3851 = vmul.f32 %v3811, %v3842
      %v3852 = vmul.f32 %v3812, %v3844
      %v3853 = vsub.f32 1.0, %v3845
      %v3854 = vsub.f32 1.0, %v3846
      %v3855 = vsub.f32 1.0, %v3847
      %v3856 = vsub.f32 1.0, %v3848
      %v3857 = vsub.f32 1.0, %v3849
      %v3858 = vsub.f32 1.0, %v3850
      %v3859 = vsub.f32 1.0, %v3851
      %v3860 = vsub.f32 1.0, %v3852
      %vm3861 = vcmp.lt.f32.partialorder %v3693, 0.0
      %vm3862 = vcmp.lt.f32.partialorder %v3694, 0.0
      %vm3863 = vcmp.lt.f32.partialorder %v3695, 0.0
      %vm3864 = vcmp.lt.f32.partialorder %v3696, 0.0
      %vm3865 = vcmp.lt.f32.partialorder %v3697, 0.0
      %vm3866 = vcmp.lt.f32.partialorder %v3698, 0.0
      %vm3867 = vcmp.lt.f32.partialorder %v3699, 0.0
      %vm3868 = vcmp.lt.f32.partialorder %v3700, 0.0
      %v3869 = vsub.f32 0.0, %v3853
      %v3870 = vsub.f32 0.0, %v3854
      %v3871 = vsub.f32 0.0, %v3855
      %v3872 = vsub.f32 0.0, %v3856
      %v3873 = vsub.f32 0.0, %v3857
      %v3874 = vsub.f32 0.0, %v3858
      %v3875 = vsub.f32 0.0, %v3859
      %v3876 = vsub.f32 0.0, %v3860
      %v3877 = vsel %vm3861, %v3869, %v3853
      %v3878 = vsel %vm3862, %v3870, %v3854
      %v3879 = vsel %vm3863, %v3871, %v3855
      %v3880 = vsel %vm3864, %v3872, %v3856
      %v3881 = vsel %vm3865, %v3873, %v3857
      %v3882 = vsel %vm3866, %v3874, %v3858
      %v3883 = vsel %vm3867, %v3875, %v3859
      %v3884 = vsel %vm3868, %v3876, %v3860
      %v3885 = vadd.f32 %v3877, 1.0
      %v3886 = vadd.f32 %v3878, 1.0
      %v3887 = vadd.f32 %v3879, 1.0
      %v3888 = vadd.f32 %v3880, 1.0
      %v3889 = vadd.f32 %v3881, 1.0
      %v3890 = vadd.f32 %v3882, 1.0
      %v3891 = vadd.f32 %v3883, 1.0
      %v3892 = vadd.f32 %v3884, 1.0
      %v3893 = vmul.f32 %v3685, %v3885
      %v3894 = vmul.f32 %v3686, %v3886
      %v3895 = vmul.f32 %v3687, %v3887
      %v3896 = vmul.f32 %v3688, %v3888
      %v3897 = vmul.f32 %v3689, %v3889
      %v3898 = vmul.f32 %v3690, %v3890
      %v3899 = vmul.f32 %v3691, %v3891
      %v3900 = vmul.f32 %v3692, %v3892
      %v3901 = vpack.c.bf16 %v3897, %v3893
      %v3902 = vpack.c.bf16 %v3898, %v3894
      %v3903 = vpack.c.bf16 %v3899, %v3895
      %v3904 = vpack.c.bf16 %v3900, %v3896
      %v3905 = vld [vmem:[%s599] sm:$0xf]
      %v3906 = vld [vmem:[%s599 + $0x4] sm:$0xf]
      %v3907 = vld [vmem:[%s599 + $0x8] sm:$0xf]
      %v3908 = vld [vmem:[%s599 + $0xc] sm:$0xf]
      %v3909 = vld [vmem:[%s599 + $0x10] sm:$0xf]
      %v3910 = vld [vmem:[%s599 + $0x14] sm:$0xf]
      %v3911 = vld [vmem:[%s599 + $0x18] sm:$0xf]
      %v3912 = vld [vmem:[%s599 + $0x1c] sm:$0xf]
      %v3913 = vld [vmem:[%s599 + $0x20] sm:$0xf]
      %v3914 = vld [vmem:[%s599 + $0x24] sm:$0xf]
      %v3915 = vld [vmem:[%s599 + $0x28] sm:$0xf]
      %v3916 = vld [vmem:[%s599 + $0x2c] sm:$0xf]
      %v3917 = vld [vmem:[%s599 + $0x30] sm:$0xf]
      %v3918 = vld [vmem:[%s599 + $0x34] sm:$0xf]
      %v3919 = vld [vmem:[%s599 + $0x38] sm:$0xf]
      %v3920 = vld [vmem:[%s599 + $0x3c] sm:$0xf]
      %v3921 = vld [vmem:[%s599 + $0x40] sm:$0xf]
      %v3922 = vld [vmem:[%s599 + $0x44] sm:$0xf]
      %v3923 = vld [vmem:[%s599 + $0x48] sm:$0xf]
      %v3924 = vld [vmem:[%s599 + $0x4c] sm:$0xf]
      %v3925 = vld [vmem:[%s599 + $0x50] sm:$0xf]
      %v3926 = vld [vmem:[%s599 + $0x54] sm:$0xf]
      %v3927 = vld [vmem:[%s599 + $0x58] sm:$0xf]
      %v3928 = vld [vmem:[%s599 + $0x5c] sm:$0xf]
      %v3929 = vld [vmem:[%s599 + $0x60] sm:$0xf]
      %v3930 = vld [vmem:[%s599 + $0x64] sm:$0xf]
      %v3931 = vld [vmem:[%s599 + $0x68] sm:$0xf]
      %v3932 = vld [vmem:[%s599 + $0x6c] sm:$0xf]
      %v3933 = vld [vmem:[%s599 + $0x70] sm:$0xf]
      %v3934 = vld [vmem:[%s599 + $0x74] sm:$0xf]
      %v3935 = vld [vmem:[%s599 + $0x78] sm:$0xf]
      %v3936 = vld [vmem:[%s599 + $0x7c] sm:$0xf]
      %v3937 = vld [vmem:[%s599 + $0x80] sm:$0xf]
      %v3938 = vld [vmem:[%s599 + $0x84] sm:$0xf]
      %v3939 = vld [vmem:[%s599 + $0x88] sm:$0xf]
      %v3940 = vld [vmem:[%s599 + $0x8c] sm:$0xf]
      %v3941 = vld [vmem:[%s599 + $0x90] sm:$0xf]
      %v3942 = vld [vmem:[%s599 + $0x94] sm:$0xf]
      %v3943 = vld [vmem:[%s599 + $0x98] sm:$0xf]
      %v3944 = vld [vmem:[%s599 + $0x9c] sm:$0xf]
      %v3945 = vld [vmem:[%s599 + $0xa0] sm:$0xf]
      %v3946 = vld [vmem:[%s599 + $0xa4] sm:$0xf]
      %v3947 = vld [vmem:[%s599 + $0xa8] sm:$0xf]
      %v3948 = vld [vmem:[%s599 + $0xac] sm:$0xf]
      %v3949 = vld [vmem:[%s599 + $0xb0] sm:$0xf]
      %v3950 = vld [vmem:[%s599 + $0xb4] sm:$0xf]
      %v3951 = vld [vmem:[%s599 + $0xb8] sm:$0xf]
      %v3952 = vld [vmem:[%s599 + $0xbc] sm:$0xf]
      %v3953 = vld [vmem:[%s599 + $0xc0] sm:$0xf]
      %v3954 = vld [vmem:[%s599 + $0xc4] sm:$0xf]
      %v3955 = vld [vmem:[%s599 + $0xc8] sm:$0xf]
      %v3956 = vld [vmem:[%s599 + $0xcc] sm:$0xf]
      %v3957 = vld [vmem:[%s599 + $0xd0] sm:$0xf]
      %v3958 = vld [vmem:[%s599 + $0xd4] sm:$0xf]
      %v3959 = vld [vmem:[%s599 + $0xd8] sm:$0xf]
      %v3960 = vld [vmem:[%s599 + $0xdc] sm:$0xf]
      %v3961 = vld [vmem:[%s599 + $0xe0] sm:$0xf]
      %v3962 = vld [vmem:[%s599 + $0xe4] sm:$0xf]
      %v3963 = vld [vmem:[%s599 + $0xe8] sm:$0xf]
      %v3964 = vld [vmem:[%s599 + $0xec] sm:$0xf]
      %v3965 = vld [vmem:[%s599 + $0xf0] sm:$0xf]
      %v3966 = vld [vmem:[%s599 + $0xf4] sm:$0xf]
      %v3967 = vld [vmem:[%s599 + $0xf8] sm:$0xf]
      %v3968 = vld [vmem:[%s599 + $0xfc] sm:$0xf]
      %v3969 = vld [vmem:[%s602] sm:$0x1]
      %v3971 = vlaneseq
      %v3972 = vshrl.u32 %v3971, 7
      %v3973 = vsub.s32 0, %v3972
      %v3974 = vrot.slane %v3969, %v3973
      %v4040 = vunpack.c.l.b16 %v3905
      %v4041 = vunpack.c.l.b16 %v3906
      %v4042 = vunpack.c.l.b16 %v3907
      %v4043 = vunpack.c.l.b16 %v3908
      %v4044 = vunpack.c.l.b16 %v3909
      %v4045 = vunpack.c.l.b16 %v3910
      %v4046 = vunpack.c.l.b16 %v3911
      %v4047 = vunpack.c.l.b16 %v3912
      %v4048 = vunpack.c.l.b16 %v3913
      %v4049 = vunpack.c.l.b16 %v3914
      %v4050 = vunpack.c.l.b16 %v3915
      %v4051 = vunpack.c.l.b16 %v3916
      %v4052 = vunpack.c.l.b16 %v3917
      %v4053 = vunpack.c.l.b16 %v3918
      %v4054 = vunpack.c.l.b16 %v3919
      %v4055 = vunpack.c.l.b16 %v3920
      %v4056 = vunpack.c.l.b16 %v3921
      %v4057 = vunpack.c.l.b16 %v3922
      %v4058 = vunpack.c.l.b16 %v3923
      %v4059 = vunpack.c.l.b16 %v3924
      %v4060 = vunpack.c.l.b16 %v3925
      %v4061 = vunpack.c.l.b16 %v3926
      %v4062 = vunpack.c.l.b16 %v3927
      %v4063 = vunpack.c.l.b16 %v3928
      %v4064 = vunpack.c.l.b16 %v3929
      %v4065 = vunpack.c.l.b16 %v3930
      %v4066 = vunpack.c.l.b16 %v3931
      %v4067 = vunpack.c.l.b16 %v3932
      %v4068 = vunpack.c.l.b16 %v3933
      %v4069 = vunpack.c.l.b16 %v3934
      %v4070 = vunpack.c.l.b16 %v3935
      %v4071 = vunpack.c.l.b16 %v3936
      %v4072 = vunpack.c.l.b16 %v3937
      %v4073 = vunpack.c.l.b16 %v3938
      %v4074 = vunpack.c.l.b16 %v3939
      %v4075 = vunpack.c.l.b16 %v3940
      %v4076 = vunpack.c.l.b16 %v3941
      %v4077 = vunpack.c.l.b16 %v3942
      %v4078 = vunpack.c.l.b16 %v3943
      %v4079 = vunpack.c.l.b16 %v3944
      %v4080 = vunpack.c.l.b16 %v3945
      %v4081 = vunpack.c.l.b16 %v3946
      %v4082 = vunpack.c.l.b16 %v3947
      %v4083 = vunpack.c.l.b16 %v3948
      %v4084 = vunpack.c.l.b16 %v3949
      %v4085 = vunpack.c.l.b16 %v3950
      %v4086 = vunpack.c.l.b16 %v3951
      %v4087 = vunpack.c.l.b16 %v3952
      %v4088 = vunpack.c.l.b16 %v3953
      %v4089 = vunpack.c.l.b16 %v3954
      %v4090 = vunpack.c.l.b16 %v3955
      %v4091 = vunpack.c.l.b16 %v3956
      %v4092 = vunpack.c.l.b16 %v3957
      %v4093 = vunpack.c.l.b16 %v3958
      %v4094 = vunpack.c.l.b16 %v3959
      %v4095 = vunpack.c.l.b16 %v3960
      %v4096 = vunpack.c.l.b16 %v3961
      %v4097 = vunpack.c.l.b16 %v3962
      %v4098 = vunpack.c.l.b16 %v3963
      %v4099 = vunpack.c.l.b16 %v3964
      %v4100 = vunpack.c.l.b16 %v3965
      %v4101 = vunpack.c.l.b16 %v3966
      %v4102 = vunpack.c.l.b16 %v3967
      %v4103 = vunpack.c.l.b16 %v3968
      %v4104 = vpack.c.b16 %v4041, %v4040
      %v4105 = vpack.c.b16 %v4043, %v4042
      %v4106 = vpack.c.b16 %v4045, %v4044
      %v4107 = vpack.c.b16 %v4047, %v4046
      %v4108 = vpack.c.b16 %v4049, %v4048
      %v4109 = vpack.c.b16 %v4051, %v4050
      %v4110 = vpack.c.b16 %v4053, %v4052
      %v4111 = vpack.c.b16 %v4055, %v4054
      %v4112 = vpack.c.b16 %v4057, %v4056
      %v4113 = vpack.c.b16 %v4059, %v4058
      %v4114 = vpack.c.b16 %v4061, %v4060
      %v4115 = vpack.c.b16 %v4063, %v4062
      %v4116 = vpack.c.b16 %v4065, %v4064
      %v4117 = vpack.c.b16 %v4067, %v4066
      %v4118 = vpack.c.b16 %v4069, %v4068
      %v4119 = vpack.c.b16 %v4071, %v4070
      %v4120 = vpack.c.b16 %v4073, %v4072
      %v4121 = vpack.c.b16 %v4075, %v4074
      %v4122 = vpack.c.b16 %v4077, %v4076
      %v4123 = vpack.c.b16 %v4079, %v4078
      %v4124 = vpack.c.b16 %v4081, %v4080
      %v4125 = vpack.c.b16 %v4083, %v4082
      %v4126 = vpack.c.b16 %v4085, %v4084
      %v4127 = vpack.c.b16 %v4087, %v4086
      %v4128 = vpack.c.b16 %v4089, %v4088
      %v4129 = vpack.c.b16 %v4091, %v4090
      %v4130 = vpack.c.b16 %v4093, %v4092
      %v4131 = vpack.c.b16 %v4095, %v4094
      %v4132 = vpack.c.b16 %v4097, %v4096
      %v4133 = vpack.c.b16 %v4099, %v4098
      %v4134 = vpack.c.b16 %v4101, %v4100
      %v4135 = vpack.c.b16 %v4103, %v4102
      %4168 = vmatprep.subr.bf16.mxu0 0
      %4169 = vmatpush1.bf16.msra.mxu0 %v4104
      %4170 = vmatprep.subr.bf16.mxu0 0
      %4171 = vmatpush1.bf16.msra.mxu0 %v4105
      %4172 = vmatprep.subr.bf16.mxu0 0
      %4173 = vmatpush1.bf16.msra.mxu0 %v4106
      %4174 = vmatprep.subr.bf16.mxu0 0
      %4175 = vmatpush1.bf16.msra.mxu0 %v4107
      %4176 = vmatprep.subr.bf16.mxu0 0
      %4177 = vmatpush1.bf16.msra.mxu0 %v4108
      %4178 = vmatprep.subr.bf16.mxu0 0
      %4179 = vmatpush1.bf16.msra.mxu0 %v4109
      %4180 = vmatprep.subr.bf16.mxu0 0
      %4181 = vmatpush1.bf16.msra.mxu0 %v4110
      %4182 = vmatprep.subr.bf16.mxu0 0
      %4183 = vmatpush1.bf16.msra.mxu0 %v4111
      %4184 = vmatprep.subr.bf16.mxu0 0
      %4185 = vmatpush1.bf16.msra.mxu0 %v4112
      %4186 = vmatprep.subr.bf16.mxu0 0
      %4187 = vmatpush1.bf16.msra.mxu0 %v4113
      %4188 = vmatprep.subr.bf16.mxu0 0
      %4189 = vmatpush1.bf16.msra.mxu0 %v4114
      %4190 = vmatprep.subr.bf16.mxu0 0
      %4191 = vmatpush1.bf16.msra.mxu0 %v4115
      %4192 = vmatprep.subr.bf16.mxu0 0
      %4193 = vmatpush1.bf16.msra.mxu0 %v4116
      %4194 = vmatprep.subr.bf16.mxu0 0
      %4195 = vmatpush1.bf16.msra.mxu0 %v4117
      %4196 = vmatprep.subr.bf16.mxu0 0
      %4197 = vmatpush1.bf16.msra.mxu0 %v4118
      %4198 = vmatprep.subr.bf16.mxu0 0
      %4199 = vmatpush1.bf16.msra.mxu0 %v4119
      %4200 = vmatprep.mubr.bf16.mxu0 %v3902
      %4201 = vmatmul.mubr.bf16.gmra.mrb[0].mxu0 %v3901
      %v4202 = vpop.f32.mrb[0].mxu0
      %v4203 = vadd.f32 %v3974, %v4202
      %v4204 = vpop.f32.mrb[0].mxu0
      %v4205 = vpop.f32.mrb[0].mxu0
      %v4206 = vadd.f32 %v3974, %v4205
      %v4207 = vpop.f32.mrb[0].mxu0
      %4208 = vdwg.mxu0
      %4209 = vmatprep.subr.bf16.mxu0 0
      %4210 = vmatpush1.bf16.msra.mxu0 %v4120
      %4211 = vmatprep.subr.bf16.mxu0 0
      %4212 = vmatpush1.bf16.msra.mxu0 %v4121
      %4213 = vmatprep.subr.bf16.mxu0 0
      %4214 = vmatpush1.bf16.msra.mxu0 %v4122
      %4215 = vmatprep.subr.bf16.mxu0 0
      %4216 = vmatpush1.bf16.msra.mxu0 %v4123
      %4217 = vmatprep.subr.bf16.mxu0 0
      %4218 = vmatpush1.bf16.msra.mxu0 %v4124
      %4219 = vmatprep.subr.bf16.mxu0 0
      %4220 = vmatpush1.bf16.msra.mxu0 %v4125
      %4221 = vmatprep.subr.bf16.mxu0 0
      %4222 = vmatpush1.bf16.msra.mxu0 %v4126
      %4223 = vmatprep.subr.bf16.mxu0 0
      %4224 = vmatpush1.bf16.msra.mxu0 %v4127
      %4225 = vmatprep.subr.bf16.mxu0 0
      %4226 = vmatpush1.bf16.msra.mxu0 %v4128
      %4227 = vmatprep.subr.bf16.mxu0 0
      %4228 = vmatpush1.bf16.msra.mxu0 %v4129
      %4229 = vmatprep.subr.bf16.mxu0 0
      %4230 = vmatpush1.bf16.msra.mxu0 %v4130
      %4231 = vmatprep.subr.bf16.mxu0 0
      %4232 = vmatpush1.bf16.msra.mxu0 %v4131
      %4233 = vmatprep.subr.bf16.mxu0 0
      %4234 = vmatpush1.bf16.msra.mxu0 %v4132
      %4235 = vmatprep.subr.bf16.mxu0 0
      %4236 = vmatpush1.bf16.msra.mxu0 %v4133
      %4237 = vmatprep.subr.bf16.mxu0 0
      %4238 = vmatpush1.bf16.msra.mxu0 %v4134
      %4239 = vmatprep.subr.bf16.mxu0 0
      %4240 = vmatpush1.bf16.msra.mxu0 %v4135
      %4241 = vmatprep.mubr.bf16.mxu0 %v3904
      %4242 = vmatmul.mubr.bf16.gmra.mrb[0].mxu0 %v3903
      %v4243 = vpop.f32.mrb[0].mxu0
      %v4244 = vadd.f32 %v4203, %v4243
      %v4245 = vpop.f32.mrb[0].mxu0
      %v4246 = vpop.f32.mrb[0].mxu0
      %v4247 = vadd.f32 %v4206, %v4246
      %v4248 = vpop.f32.mrb[0].mxu0
      %4249 = vdwg.mxu0
      %v4250 = vmul.f32 %v3677, %v4244
      %v4251 = vmul.f32 %v3681, %v4247
      %v4252 = vadd.f32 %v3210, %v4250
      %v4253 = vadd.f32 %v3211, %v4251
      %v4254 = vadd.f32 %v4252, %v3679
      %v4255 = vadd.f32 %v4253, %v3683
      %4256 = vst [vmem:[#allocation2] sm:$0xff] %v4254
      %4257 = vst [vmem:[#allocation2 + $0x8] sm:$0xff] %v4255
      %p4258 = scmp.eq.s32.totalorder %s25, 1
      // Predicated region
      $region81: #{mini_vampnet_forward.1} parent=75 // pred_check
        %p4259 = pneg %p4258
      $region82: #{mini_vampnet_forward.1} parent=75 // pred_check_branch
        %4261 = sbr.rel (%p4259) target = $region84
      $region83: #{mini_vampnet_forward.1} parent=75 // pred_region
        %v4262 = vld [vmem:[%s11] sm:$0x1]
        %v4263 = vmul.f32 %v4254, %v4254
        %v4264 = vmul.f32 %v4255, %v4255
        %4265 = vadd.xlane.f32.xlu0 %v4263
        %v4266 = vpop.xlane.xlu0 %4265
        %4267 = vadd.xlane.f32.xlu0 %v4264
        %v4268 = vpop.xlane.xlu0 %4267
        %v4269 = vmul.f32 %v4266, %v624
        %v4270 = vmul.f32 %v4268, %v624
        %v4271 = vadd.f32 %v4269, 1e-06
        %v4272 = vadd.f32 %v4270, 1e-06
        %v4273 = vrsqrt.pop %v4271
        %v4274 = vrsqrt.pop %v4272
        %v4275 = vmul.f32 %v4254, %v4273
        %v4276 = vmul.f32 %v4255, %v4274
        %v4278 = vlaneseq
        %v4279 = vshrl.u32 %v4278, 7
        %v4280 = vsub.s32 0, %v4279
        %v4281 = vrot.slane %v4262, %v4280
        %v4283 = vmul.f32 %v4275, %v4281
        %v4284 = vmul.f32 %v4276, %v4281
        %v4285 = vpack.c.bf16 %v4284, %v4283
        %v4286 = vld [vmem:[%s12] sm:$0xff]
        %v4287 = vld [vmem:[%s12 + $0x8] sm:$0xff]
        %v4288 = vld [vmem:[%s12 + $0x10] sm:$0xff]
        %v4289 = vld [vmem:[%s12 + $0x18] sm:$0xff]
        %v4290 = vld [vmem:[%s12 + $0x20] sm:$0xff]
        %v4291 = vld [vmem:[%s12 + $0x28] sm:$0xff]
        %v4292 = vld [vmem:[%s12 + $0x30] sm:$0xff]
        %v4293 = vld [vmem:[%s12 + $0x38] sm:$0xff]
        %v4294 = vld [vmem:[%s12 + $0x40] sm:$0xff]
        %v4295 = vld [vmem:[%s12 + $0x48] sm:$0xff]
        %v4296 = vld [vmem:[%s12 + $0x50] sm:$0xff]
        %v4297 = vld [vmem:[%s12 + $0x58] sm:$0xff]
        %v4298 = vld [vmem:[%s12 + $0x60] sm:$0xff]
        %v4299 = vld [vmem:[%s12 + $0x68] sm:$0xff]
        %v4300 = vld [vmem:[%s12 + $0x70] sm:$0xff]
        %v4301 = vld [vmem:[%s12 + $0x78] sm:$0xff]
        %v4302 = vld [vmem:[%s12 + $0x80] sm:$0xff]
        %v4303 = vld [vmem:[%s12 + $0x88] sm:$0xff]
        %v4304 = vld [vmem:[%s12 + $0x90] sm:$0xff]
        %v4305 = vld [vmem:[%s12 + $0x98] sm:$0xff]
        %v4306 = vld [vmem:[%s12 + $0xa0] sm:$0xff]
        %v4307 = vld [vmem:[%s12 + $0xa8] sm:$0xff]
        %v4308 = vld [vmem:[%s12 + $0xb0] sm:$0xff]
        %v4309 = vld [vmem:[%s12 + $0xb8] sm:$0xff]
        %v4310 = vld [vmem:[%s12 + $0xc0] sm:$0xff]
        %v4311 = vld [vmem:[%s12 + $0xc8] sm:$0xff]
        %v4312 = vld [vmem:[%s12 + $0xd0] sm:$0xff]
        %v4313 = vld [vmem:[%s12 + $0xd8] sm:$0xff]
        %v4314 = vld [vmem:[%s12 + $0xe0] sm:$0xff]
        %v4315 = vld [vmem:[%s12 + $0xe8] sm:$0xff]
        %v4316 = vld [vmem:[%s12 + $0xf0] sm:$0xff]
        %v4317 = vld [vmem:[%s12 + $0xf8] sm:$0xff]
        %v4318 = vld [vmem:[%s12 + $0x100] sm:$0xff]
        %v4319 = vld [vmem:[%s12 + $0x108] sm:$0xff]
        %v4320 = vld [vmem:[%s12 + $0x110] sm:$0xff]
        %v4321 = vld [vmem:[%s12 + $0x118] sm:$0xff]
        %v4322 = vld [vmem:[%s12 + $0x120] sm:$0xff]
        %v4323 = vld [vmem:[%s12 + $0x128] sm:$0xff]
        %v4324 = vld [vmem:[%s12 + $0x130] sm:$0xff]
        %v4325 = vld [vmem:[%s12 + $0x138] sm:$0xff]
        %v4326 = vld [vmem:[%s12 + $0x140] sm:$0xff]
        %v4327 = vld [vmem:[%s12 + $0x148] sm:$0xff]
        %v4328 = vld [vmem:[%s12 + $0x150] sm:$0xff]
        %v4329 = vld [vmem:[%s12 + $0x158] sm:$0xff]
        %v4330 = vld [vmem:[%s12 + $0x160] sm:$0xff]
        %v4331 = vld [vmem:[%s12 + $0x168] sm:$0xff]
        %v4332 = vld [vmem:[%s12 + $0x170] sm:$0xff]
        %v4333 = vld [vmem:[%s12 + $0x178] sm:$0xff]
        %v4334 = vld [vmem:[%s12 + $0x180] sm:$0xff]
        %v4335 = vld [vmem:[%s12 + $0x188] sm:$0xff]
        %v4336 = vld [vmem:[%s12 + $0x190] sm:$0xff]
        %v4337 = vld [vmem:[%s12 + $0x198] sm:$0xff]
        %v4338 = vld [vmem:[%s12 + $0x1a0] sm:$0xff]
        %v4339 = vld [vmem:[%s12 + $0x1a8] sm:$0xff]
        %v4340 = vld [vmem:[%s12 + $0x1b0] sm:$0xff]
        %v4341 = vld [vmem:[%s12 + $0x1b8] sm:$0xff]
        %v4342 = vld [vmem:[%s12 + $0x1c0] sm:$0xff]
        %v4343 = vld [vmem:[%s12 + $0x1c8] sm:$0xff]
        %v4344 = vld [vmem:[%s12 + $0x1d0] sm:$0xff]
        %v4345 = vld [vmem:[%s12 + $0x1d8] sm:$0xff]
        %v4346 = vld [vmem:[%s12 + $0x1e0] sm:$0xff]
        %v4347 = vld [vmem:[%s12 + $0x1e8] sm:$0xff]
        %v4348 = vld [vmem:[%s12 + $0x1f0] sm:$0xff]
        %v4349 = vld [vmem:[%s12 + $0x1f8] sm:$0xff]
        %v4350 = vld [vmem:[%s13] sm:$0xff]
        %v4352 = vlaneseq
        %v4353 = vshrl.u32 %v4352, 7
        %v4354 = vsub.s32 0, %v4353
        %v4355 = vrot.slane %v4350, %v4354
        %v4356 = vlaneseq
        %v4357 = vshrl.u32 %v4356, 7
        %v4358 = vsub.s32 1, %v4357
        %v4359 = vrot.slane %v4350, %v4358
        %v4360 = vlaneseq
        %v4361 = vshrl.u32 %v4360, 7
        %v4362 = vsub.s32 2, %v4361
        %v4363 = vrot.slane %v4350, %v4362
        %v4364 = vlaneseq
        %v4365 = vshrl.u32 %v4364, 7
        %v4366 = vsub.s32 3, %v4365
        %v4367 = vrot.slane %v4350, %v4366
        %v4368 = vlaneseq
        %v4369 = vshrl.u32 %v4368, 7
        %v4370 = vsub.s32 4, %v4369
        %v4371 = vrot.slane %v4350, %v4370
        %v4372 = vlaneseq
        %v4373 = vshrl.u32 %v4372, 7
        %v4374 = vsub.s32 5, %v4373
        %v4375 = vrot.slane %v4350, %v4374
        %v4376 = vlaneseq
        %v4377 = vshrl.u32 %v4376, 7
        %v4378 = vsub.s32 6, %v4377
        %v4379 = vrot.slane %v4350, %v4378
        %v4380 = vlaneseq
        %v4381 = vshrl.u32 %v4380, 7
        %v4382 = vsub.s32 7, %v4381
        %v4383 = vrot.slane %v4350, %v4382
        %v4456 = vunpack.c.l.b16 %v4286
        %v4457 = vunpack.c.h.b16 %v4286
        %v4458 = vunpack.c.l.b16 %v4287
        %v4459 = vunpack.c.h.b16 %v4287
        %v4460 = vunpack.c.l.b16 %v4288
        %v4461 = vunpack.c.h.b16 %v4288
        %v4462 = vunpack.c.l.b16 %v4289
        %v4463 = vunpack.c.h.b16 %v4289
        %v4464 = vunpack.c.l.b16 %v4290
        %v4465 = vunpack.c.h.b16 %v4290
        %v4466 = vunpack.c.l.b16 %v4291
        %v4467 = vunpack.c.h.b16 %v4291
        %v4468 = vunpack.c.l.b16 %v4292
        %v4469 = vunpack.c.h.b16 %v4292
        %v4470 = vunpack.c.l.b16 %v4293
        %v4471 = vunpack.c.h.b16 %v4293
        %v4472 = vunpack.c.l.b16 %v4294
        %v4473 = vunpack.c.h.b16 %v4294
        %v4474 = vunpack.c.l.b16 %v4295
        %v4475 = vunpack.c.h.b16 %v4295
        %v4476 = vunpack.c.l.b16 %v4296
        %v4477 = vunpack.c.h.b16 %v4296
        %v4478 = vunpack.c.l.b16 %v4297
        %v4479 = vunpack.c.h.b16 %v4297
        %v4480 = vunpack.c.l.b16 %v4298
        %v4481 = vunpack.c.h.b16 %v4298
        %v4482 = vunpack.c.l.b16 %v4299
        %v4483 = vunpack.c.h.b16 %v4299
        %v4484 = vunpack.c.l.b16 %v4300
        %v4485 = vunpack.c.h.b16 %v4300
        %v4486 = vunpack.c.l.b16 %v4301
        %v4487 = vunpack.c.h.b16 %v4301
        %v4488 = vunpack.c.l.b16 %v4302
        %v4489 = vunpack.c.h.b16 %v4302
        %v4490 = vunpack.c.l.b16 %v4303
        %v4491 = vunpack.c.h.b16 %v4303
        %v4492 = vunpack.c.l.b16 %v4304
        %v4493 = vunpack.c.h.b16 %v4304
        %v4494 = vunpack.c.l.b16 %v4305
        %v4495 = vunpack.c.h.b16 %v4305
        %v4496 = vunpack.c.l.b16 %v4306
        %v4497 = vunpack.c.h.b16 %v4306
        %v4498 = vunpack.c.l.b16 %v4307
        %v4499 = vunpack.c.h.b16 %v4307
        %v4500 = vunpack.c.l.b16 %v4308
        %v4501 = vunpack.c.h.b16 %v4308
        %v4502 = vunpack.c.l.b16 %v4309
        %v4503 = vunpack.c.h.b16 %v4309
        %v4504 = vunpack.c.l.b16 %v4310
        %v4505 = vunpack.c.h.b16 %v4310
        %v4506 = vunpack.c.l.b16 %v4311
        %v4507 = vunpack.c.h.b16 %v4311
        %v4508 = vunpack.c.l.b16 %v4312
        %v4509 = vunpack.c.h.b16 %v4312
        %v4510 = vunpack.c.l.b16 %v4313
        %v4511 = vunpack.c.h.b16 %v4313
        %v4512 = vunpack.c.l.b16 %v4314
        %v4513 = vunpack.c.h.b16 %v4314
        %v4514 = vunpack.c.l.b16 %v4315
        %v4515 = vunpack.c.h.b16 %v4315
        %v4516 = vunpack.c.l.b16 %v4316
        %v4517 = vunpack.c.h.b16 %v4316
        %v4518 = vunpack.c.l.b16 %v4317
        %v4519 = vunpack.c.h.b16 %v4317
        %v4520 = vunpack.c.l.b16 %v4318
        %v4521 = vunpack.c.h.b16 %v4318
        %v4522 = vunpack.c.l.b16 %v4319
        %v4523 = vunpack.c.h.b16 %v4319
        %v4524 = vunpack.c.l.b16 %v4320
        %v4525 = vunpack.c.h.b16 %v4320
        %v4526 = vunpack.c.l.b16 %v4321
        %v4527 = vunpack.c.h.b16 %v4321
        %v4528 = vunpack.c.l.b16 %v4322
        %v4529 = vunpack.c.h.b16 %v4322
        %v4530 = vunpack.c.l.b16 %v4323
        %v4531 = vunpack.c.h.b16 %v4323
        %v4532 = vunpack.c.l.b16 %v4324
        %v4533 = vunpack.c.h.b16 %v4324
        %v4534 = vunpack.c.l.b16 %v4325
        %v4535 = vunpack.c.h.b16 %v4325
        %v4536 = vunpack.c.l.b16 %v4326
        %v4537 = vunpack.c.h.b16 %v4326
        %v4538 = vunpack.c.l.b16 %v4327
        %v4539 = vunpack.c.h.b16 %v4327
        %v4540 = vunpack.c.l.b16 %v4328
        %v4541 = vunpack.c.h.b16 %v4328
        %v4542 = vunpack.c.l.b16 %v4329
        %v4543 = vunpack.c.h.b16 %v4329
        %v4544 = vunpack.c.l.b16 %v4330
        %v4545 = vunpack.c.h.b16 %v4330
        %v4546 = vunpack.c.l.b16 %v4331
        %v4547 = vunpack.c.h.b16 %v4331
        %v4548 = vunpack.c.l.b16 %v4332
        %v4549 = vunpack.c.h.b16 %v4332
        %v4550 = vunpack.c.l.b16 %v4333
        %v4551 = vunpack.c.h.b16 %v4333
        %v4552 = vunpack.c.l.b16 %v4334
        %v4553 = vunpack.c.h.b16 %v4334
        %v4554 = vunpack.c.l.b16 %v4335
        %v4555 = vunpack.c.h.b16 %v4335
        %v4556 = vunpack.c.l.b16 %v4336
        %v4557 = vunpack.c.h.b16 %v4336
        %v4558 = vunpack.c.l.b16 %v4337
        %v4559 = vunpack.c.h.b16 %v4337
        %v4560 = vunpack.c.l.b16 %v4338
        %v4561 = vunpack.c.h.b16 %v4338
        %v4562 = vunpack.c.l.b16 %v4339
        %v4563 = vunpack.c.h.b16 %v4339
        %v4564 = vunpack.c.l.b16 %v4340
        %v4565 = vunpack.c.h.b16 %v4340
        %v4566 = vunpack.c.l.b16 %v4341
        %v4567 = vunpack.c.h.b16 %v4341
        %v4568 = vunpack.c.l.b16 %v4342
        %v4569 = vunpack.c.h.b16 %v4342
        %v4570 = vunpack.c.l.b16 %v4343
        %v4571 = vunpack.c.h.b16 %v4343
        %v4572 = vunpack.c.l.b16 %v4344
        %v4573 = vunpack.c.h.b16 %v4344
        %v4574 = vunpack.c.l.b16 %v4345
        %v4575 = vunpack.c.h.b16 %v4345
        %v4576 = vunpack.c.l.b16 %v4346
        %v4577 = vunpack.c.h.b16 %v4346
        %v4578 = vunpack.c.l.b16 %v4347
        %v4579 = vunpack.c.h.b16 %v4347
        %v4580 = vunpack.c.l.b16 %v4348
        %v4581 = vunpack.c.h.b16 %v4348
        %v4582 = vunpack.c.l.b16 %v4349
        %v4583 = vunpack.c.h.b16 %v4349
        %v4584 = vpack.c.b16 %v4464, %v4456
        %v4585 = vpack.c.b16 %v4465, %v4457
        %v4586 = vpack.c.b16 %v4466, %v4458
        %v4587 = vpack.c.b16 %v4467, %v4459
        %v4588 = vpack.c.b16 %v4468, %v4460
        %v4589 = vpack.c.b16 %v4469, %v4461
        %v4590 = vpack.c.b16 %v4470, %v4462
        %v4591 = vpack.c.b16 %v4471, %v4463
        %v4592 = vpack.c.b16 %v4480, %v4472
        %v4593 = vpack.c.b16 %v4481, %v4473
        %v4594 = vpack.c.b16 %v4482, %v4474
        %v4595 = vpack.c.b16 %v4483, %v4475
        %v4596 = vpack.c.b16 %v4484, %v4476
        %v4597 = vpack.c.b16 %v4485, %v4477
        %v4598 = vpack.c.b16 %v4486, %v4478
        %v4599 = vpack.c.b16 %v4487, %v4479
        %v4600 = vpack.c.b16 %v4496, %v4488
        %v4601 = vpack.c.b16 %v4497, %v4489
        %v4602 = vpack.c.b16 %v4498, %v4490
        %v4603 = vpack.c.b16 %v4499, %v4491
        %v4604 = vpack.c.b16 %v4500, %v4492
        %v4605 = vpack.c.b16 %v4501, %v4493
        %v4606 = vpack.c.b16 %v4502, %v4494
        %v4607 = vpack.c.b16 %v4503, %v4495
        %v4608 = vpack.c.b16 %v4512, %v4504
        %v4609 = vpack.c.b16 %v4513, %v4505
        %v4610 = vpack.c.b16 %v4514, %v4506
        %v4611 = vpack.c.b16 %v4515, %v4507
        %v4612 = vpack.c.b16 %v4516, %v4508
        %v4613 = vpack.c.b16 %v4517, %v4509
        %v4614 = vpack.c.b16 %v4518, %v4510
        %v4615 = vpack.c.b16 %v4519, %v4511
        %v4616 = vpack.c.b16 %v4528, %v4520
        %v4617 = vpack.c.b16 %v4529, %v4521
        %v4618 = vpack.c.b16 %v4530, %v4522
        %v4619 = vpack.c.b16 %v4531, %v4523
        %v4620 = vpack.c.b16 %v4532, %v4524
        %v4621 = vpack.c.b16 %v4533, %v4525
        %v4622 = vpack.c.b16 %v4534, %v4526
        %v4623 = vpack.c.b16 %v4535, %v4527
        %v4624 = vpack.c.b16 %v4544, %v4536
        %v4625 = vpack.c.b16 %v4545, %v4537
        %v4626 = vpack.c.b16 %v4546, %v4538
        %v4627 = vpack.c.b16 %v4547, %v4539
        %v4628 = vpack.c.b16 %v4548, %v4540
        %v4629 = vpack.c.b16 %v4549, %v4541
        %v4630 = vpack.c.b16 %v4550, %v4542
        %v4631 = vpack.c.b16 %v4551, %v4543
        %v4632 = vpack.c.b16 %v4560, %v4552
        %v4633 = vpack.c.b16 %v4561, %v4553
        %v4634 = vpack.c.b16 %v4562, %v4554
        %v4635 = vpack.c.b16 %v4563, %v4555
        %v4636 = vpack.c.b16 %v4564, %v4556
        %v4637 = vpack.c.b16 %v4565, %v4557
        %v4638 = vpack.c.b16 %v4566, %v4558
        %v4639 = vpack.c.b16 %v4567, %v4559
        %v4640 = vpack.c.b16 %v4576, %v4568
        %v4641 = vpack.c.b16 %v4577, %v4569
        %v4642 = vpack.c.b16 %v4578, %v4570
        %v4643 = vpack.c.b16 %v4579, %v4571
        %v4644 = vpack.c.b16 %v4580, %v4572
        %v4645 = vpack.c.b16 %v4581, %v4573
        %v4646 = vpack.c.b16 %v4582, %v4574
        %v4647 = vpack.c.b16 %v4583, %v4575
        %4712 = vmatprep.subr.bf16.mxu0 %v4585
        %4713 = vmatpush1.bf16.msra.mxu0 %v4584
        %4714 = vmatprep.subr.bf16.mxu0 %v4593
        %4715 = vmatpush1.bf16.msra.mxu0 %v4592
        %4716 = vmatprep.subr.bf16.mxu0 %v4601
        %4717 = vmatpush1.bf16.msra.mxu0 %v4600
        %4718 = vmatprep.subr.bf16.mxu0 %v4609
        %4719 = vmatpush1.bf16.msra.mxu0 %v4608
        %4720 = vmatprep.subr.bf16.mxu0 %v4617
        %4721 = vmatpush1.bf16.msra.mxu0 %v4616
        %4722 = vmatprep.subr.bf16.mxu0 %v4625
        %4723 = vmatpush1.bf16.msra.mxu0 %v4624
        %4724 = vmatprep.subr.bf16.mxu0 %v4633
        %4725 = vmatpush1.bf16.msra.mxu0 %v4632
        %4726 = vmatprep.subr.bf16.mxu0 %v4641
        %4727 = vmatpush1.bf16.msra.mxu0 %v4640
        %4728 = vmatprep.subr.bf16.mxu0 0
        %4729 = vmatpush1.bf16.msra.mxu0 0
        %4730 = vmatprep.subr.bf16.mxu0 0
        %4731 = vmatpush1.bf16.msra.mxu0 0
        %4732 = vmatprep.subr.bf16.mxu0 0
        %4733 = vmatpush1.bf16.msra.mxu0 0
        %4734 = vmatprep.subr.bf16.mxu0 0
        %4735 = vmatpush1.bf16.msra.mxu0 0
        %4736 = vmatprep.subr.bf16.mxu0 0
        %4737 = vmatpush1.bf16.msra.mxu0 0
        %4738 = vmatprep.subr.bf16.mxu0 0
        %4739 = vmatpush1.bf16.msra.mxu0 0
        %4740 = vmatprep.subr.bf16.mxu0 0
        %4741 = vmatpush1.bf16.msra.mxu0 0
        %4742 = vmatprep.subr.bf16.mxu0 0
        %4743 = vmatpush1.bf16.msra.mxu0 0
        %4744 = vmatprep.mubr.bf16.mxu0 0
        %4745 = vmatmul.mubr.bf16.gmra.mrb[0].mxu0 %v4285
        %v4746 = vpop.f32.mrb[0].mxu0
        %v4747 = vadd.f32 %v4355, %v4746
        %v4748 = vpop.f32.mrb[0].mxu0
        %v4749 = vadd.f32 %v4359, %v4748
        %v4750 = vpop.f32.mrb[0].mxu0
        %v4751 = vadd.f32 %v4355, %v4750
        %v4752 = vpop.f32.mrb[0].mxu0
        %v4753 = vadd.f32 %v4359, %v4752
        %4754 = vdwg.mxu0
        %4755 = vmatprep.subr.bf16.mxu0 %v4587
        %4756 = vmatpush1.bf16.msra.mxu0 %v4586
        %4757 = vmatprep.subr.bf16.mxu0 %v4595
        %4758 = vmatpush1.bf16.msra.mxu0 %v4594
        %4759 = vmatprep.subr.bf16.mxu0 %v4603
        %4760 = vmatpush1.bf16.msra.mxu0 %v4602
        %4761 = vmatprep.subr.bf16.mxu0 %v4611
        %4762 = vmatpush1.bf16.msra.mxu0 %v4610
        %4763 = vmatprep.subr.bf16.mxu0 %v4619
        %4764 = vmatpush1.bf16.msra.mxu0 %v4618
        %4765 = vmatprep.subr.bf16.mxu0 %v4627
        %4766 = vmatpush1.bf16.msra.mxu0 %v4626
        %4767 = vmatprep.subr.bf16.mxu0 %v4635
        %4768 = vmatpush1.bf16.msra.mxu0 %v4634
        %4769 = vmatprep.subr.bf16.mxu0 %v4643
        %4770 = vmatpush1.bf16.msra.mxu0 %v4642
        %4771 = vmatprep.subr.bf16.mxu0 0
        %4772 = vmatpush1.bf16.msra.mxu0 0
        %4773 = vmatprep.subr.bf16.mxu0 0
        %4774 = vmatpush1.bf16.msra.mxu0 0
        %4775 = vmatprep.subr.bf16.mxu0 0
        %4776 = vmatpush1.bf16.msra.mxu0 0
        %4777 = vmatprep.subr.bf16.mxu0 0
        %4778 = vmatpush1.bf16.msra.mxu0 0
        %4779 = vmatprep.subr.bf16.mxu0 0
        %4780 = vmatpush1.bf16.msra.mxu0 0
        %4781 = vmatprep.subr.bf16.mxu0 0
        %4782 = vmatpush1.bf16.msra.mxu0 0
        %4783 = vmatprep.subr.bf16.mxu0 0
        %4784 = vmatpush1.bf16.msra.mxu0 0
        %4785 = vmatprep.subr.bf16.mxu0 0
        %4786 = vmatpush1.bf16.msra.mxu0 0
        %4787 = vmatprep.mubr.bf16.mxu0 0
        %4788 = vmatmul.mubr.bf16.gmra.mrb[0].mxu0 %v4285
        %v4789 = vpop.f32.mrb[0].mxu0
        %v4790 = vadd.f32 %v4363, %v4789
        %v4791 = vpop.f32.mrb[0].mxu0
        %v4792 = vadd.f32 %v4367, %v4791
        %v4793 = vpop.f32.mrb[0].mxu0
        %v4794 = vadd.f32 %v4363, %v4793
        %v4795 = vpop.f32.mrb[0].mxu0
        %v4796 = vadd.f32 %v4367, %v4795
        %4797 = vdwg.mxu0
        %4798 = vmatprep.subr.bf16.mxu0 %v4589
        %4799 = vmatpush1.bf16.msra.mxu0 %v4588
        %4800 = vmatprep.subr.bf16.mxu0 %v4597
        %4801 = vmatpush1.bf16.msra.mxu0 %v4596
        %4802 = vmatprep.subr.bf16.mxu0 %v4605
        %4803 = vmatpush1.bf16.msra.mxu0 %v4604
        %4804 = vmatprep.subr.bf16.mxu0 %v4613
        %4805 = vmatpush1.bf16.msra.mxu0 %v4612
        %4806 = vmatprep.subr.bf16.mxu0 %v4621
        %4807 = vmatpush1.bf16.msra.mxu0 %v4620
        %4808 = vmatprep.subr.bf16.mxu0 %v4629
        %4809 = vmatpush1.bf16.msra.mxu0 %v4628
        %4810 = vmatprep.subr.bf16.mxu0 %v4637
        %4811 = vmatpush1.bf16.msra.mxu0 %v4636
        %4812 = vmatprep.subr.bf16.mxu0 %v4645
        %4813 = vmatpush1.bf16.msra.mxu0 %v4644
        %4814 = vmatprep.subr.bf16.mxu0 0
        %4815 = vmatpush1.bf16.msra.mxu0 0
        %4816 = vmatprep.subr.bf16.mxu0 0
        %4817 = vmatpush1.bf16.msra.mxu0 0
        %4818 = vmatprep.subr.bf16.mxu0 0
        %4819 = vmatpush1.bf16.msra.mxu0 0
        %4820 = vmatprep.subr.bf16.mxu0 0
        %4821 = vmatpush1.bf16.msra.mxu0 0
        %4822 = vmatprep.subr.bf16.mxu0 0
        %4823 = vmatpush1.bf16.msra.mxu0 0
        %4824 = vmatprep.subr.bf16.mxu0 0
        %4825 = vmatpush1.bf16.msra.mxu0 0
        %4826 = vmatprep.subr.bf16.mxu0 0
        %4827 = vmatpush1.bf16.msra.mxu0 0
        %4828 = vmatprep.subr.bf16.mxu0 0
        %4829 = vmatpush1.bf16.msra.mxu0 0
        %4830 = vmatprep.mubr.bf16.mxu0 0
        %4831 = vmatmul.mubr.bf16.gmra.mrb[0].mxu0 %v4285
        %v4832 = vpop.f32.mrb[0].mxu0
        %v4833 = vadd.f32 %v4371, %v4832
        %v4834 = vpop.f32.mrb[0].mxu0
        %v4835 = vadd.f32 %v4375, %v4834
        %v4836 = vpop.f32.mrb[0].mxu0
        %v4837 = vadd.f32 %v4371, %v4836
        %v4838 = vpop.f32.mrb[0].mxu0
        %v4839 = vadd.f32 %v4375, %v4838
        %4840 = vdwg.mxu0
        %4841 = vmatprep.subr.bf16.mxu0 %v4591
        %4842 = vmatpush1.bf16.msra.mxu0 %v4590
        %4843 = vmatprep.subr.bf16.mxu0 %v4599
        %4844 = vmatpush1.bf16.msra.mxu0 %v4598
        %4845 = vmatprep.subr.bf16.mxu0 %v4607
        %4846 = vmatpush1.bf16.msra.mxu0 %v4606
        %4847 = vmatprep.subr.bf16.mxu0 %v4615
        %4848 = vmatpush1.bf16.msra.mxu0 %v4614
        %4849 = vmatprep.subr.bf16.mxu0 %v4623
        %4850 = vmatpush1.bf16.msra.mxu0 %v4622
        %4851 = vmatprep.subr.bf16.mxu0 %v4631
        %4852 = vmatpush1.bf16.msra.mxu0 %v4630
        %4853 = vmatprep.subr.bf16.mxu0 %v4639
        %4854 = vmatpush1.bf16.msra.mxu0 %v4638
        %4855 = vmatprep.subr.bf16.mxu0 %v4647
        %4856 = vmatpush1.bf16.msra.mxu0 %v4646
        %4857 = vmatprep.subr.bf16.mxu0 0
        %4858 = vmatpush1.bf16.msra.mxu0 0
        %4859 = vmatprep.subr.bf16.mxu0 0
        %4860 = vmatpush1.bf16.msra.mxu0 0
        %4861 = vmatprep.subr.bf16.mxu0 0
        %4862 = vmatpush1.bf16.msra.mxu0 0
        %4863 = vmatprep.subr.bf16.mxu0 0
        %4864 = vmatpush1.bf16.msra.mxu0 0
        %4865 = vmatprep.subr.bf16.mxu0 0
        %4866 = vmatpush1.bf16.msra.mxu0 0
        %4867 = vmatprep.subr.bf16.mxu0 0
        %4868 = vmatpush1.bf16.msra.mxu0 0
        %4869 = vmatprep.subr.bf16.mxu0 0
        %4870 = vmatpush1.bf16.msra.mxu0 0
        %4871 = vmatprep.subr.bf16.mxu0 0
        %4872 = vmatpush1.bf16.msra.mxu0 0
        %4873 = vmatprep.mubr.bf16.mxu0 0
        %4874 = vmatmul.mubr.bf16.gmra.mrb[0].mxu0 %v4285
        %v4875 = vpop.f32.mrb[0].mxu0
        %v4876 = vadd.f32 %v4379, %v4875
        %v4877 = vpop.f32.mrb[0].mxu0
        %v4878 = vadd.f32 %v4383, %v4877
        %v4879 = vpop.f32.mrb[0].mxu0
        %v4880 = vadd.f32 %v4379, %v4879
        %v4881 = vpop.f32.mrb[0].mxu0
        %v4882 = vadd.f32 %v4383, %v4881
        %4883 = vdwg.mxu0
        %v4884 = vmax.f32 %v4747, %v4749
        %4885 = vmax.xlane.f32.xlu0 %v4884
        %v4886 = vpop.xlane.xlu0 %4885
        %v4887 = vmax.f32 %v4751, %v4753
        %4888 = vmax.xlane.f32.xlu0 %v4887
        %v4889 = vpop.xlane.xlu0 %4888
        %v4890 = vlaneseq
        %v4891 = vand.u32 %v4890, 127
        %v4892 = vadd.s32 %v4891, 128
        %vm4893 = vcmp.ge.f32.partialorder %v4747, %v4886
        %vm4894 = vcmp.ge.f32.partialorder %v4749, %v4886
        %vm4895 = vcmp.ge.f32.partialorder %v4751, %v4889
        %vm4896 = vcmp.ge.f32.partialorder %v4753, %v4889
        %v4897 = vsel %vm4893, %v4891, 256
        %v4898 = vsel %vm4894, %v4892, 256
        %v4899 = vsel %vm4895, %v4891, 256
        %v4900 = vsel %vm4896, %v4892, 256
        %vm4901 = vcmp.lt.s32.totalorder %v4897, %v4898
        %v4902 = vsel %vm4901, %v4897, %v4898
        %v4903 = vand.u32 %v4902, 65535
        %v4904 = vshra.s32 %v4902, 16
        %v4905 = vcvt.s32.f32 %v4903
        %v4906 = vcvt.s32.f32 %v4904
        %4907 = vmin.xlane.f32.xlu0 %v4906
        %v4908 = vpop.xlane.xlu0 %4907
        %vm4909 = vcmp.eq.f32.partialorder %v4906, %v4908
        %v4910 = vsel %vm4909, %v4905, inf
        %4911 = vmin.xlane.f32.xlu0 %v4910
        %v4912 = vpop.xlane.xlu0 %4911
        %v4913 = vcvt.f32.s32 %v4912
        %v4914 = vcvt.f32.s32 %v4908
        %v4915 = vshll.u32 %v4914, 16
        %v4916 = vadd.s32 %v4915, %v4913
        %vm4917 = vcmp.lt.s32.totalorder %v4899, %v4900
        %v4918 = vsel %vm4917, %v4899, %v4900
        %v4919 = vand.u32 %v4918, 65535
        %v4920 = vshra.s32 %v4918, 16
        %v4921 = vcvt.s32.f32 %v4919
        %v4922 = vcvt.s32.f32 %v4920
        %4923 = vmin.xlane.f32.xlu0 %v4922
        %v4924 = vpop.xlane.xlu0 %4923
        %vm4925 = vcmp.eq.f32.partialorder %v4922, %v4924
        %v4926 = vsel %vm4925, %v4921, inf
        %4927 = vmin.xlane.f32.xlu0 %v4926
        %v4928 = vpop.xlane.xlu0 %4927
        %v4929 = vcvt.f32.s32 %v4928
        %v4930 = vcvt.f32.s32 %v4924
        %v4931 = vshll.u32 %v4930, 16
        %v4932 = vadd.s32 %v4931, %v4929
        %v4933 = vmax.f32 %v4790, %v4792
        %4934 = vmax.xlane.f32.xlu0 %v4933
        %v4935 = vpop.xlane.xlu0 %4934
        %v4936 = vmax.f32 %v4794, %v4796
        %4937 = vmax.xlane.f32.xlu0 %v4936
        %v4938 = vpop.xlane.xlu0 %4937
        %vm4939 = vcmp.ge.f32.partialorder %v4790, %v4935
        %vm4940 = vcmp.ge.f32.partialorder %v4792, %v4935
        %vm4941 = vcmp.ge.f32.partialorder %v4794, %v4938
        %vm4942 = vcmp.ge.f32.partialorder %v4796, %v4938
        %v4943 = vsel %vm4939, %v4891, 256
        %v4944 = vsel %vm4940, %v4892, 256
        %v4945 = vsel %vm4941, %v4891, 256
        %v4946 = vsel %vm4942, %v4892, 256
        %vm4947 = vcmp.lt.s32.totalorder %v4943, %v4944
        %v4948 = vsel %vm4947, %v4943, %v4944
        %v4949 = vand.u32 %v4948, 65535
        %v4950 = vshra.s32 %v4948, 16
        %v4951 = vcvt.s32.f32 %v4949
        %v4952 = vcvt.s32.f32 %v4950
        %4953 = vmin.xlane.f32.xlu0 %v4952
        %v4954 = vpop.xlane.xlu0 %4953
        %vm4955 = vcmp.eq.f32.partialorder %v4952, %v4954
        %v4956 = vsel %vm4955, %v4951, inf
        %4957 = vmin.xlane.f32.xlu0 %v4956
        %v4958 = vpop.xlane.xlu0 %4957
        %v4959 = vcvt.f32.s32 %v4958
        %v4960 = vcvt.f32.s32 %v4954
        %v4961 = vshll.u32 %v4960, 16
        %v4962 = vadd.s32 %v4961, %v4959
        %vm4963 = vcmp.lt.s32.totalorder %v4945, %v4946
        %v4964 = vsel %vm4963, %v4945, %v4946
        %v4965 = vand.u32 %v4964, 65535
        %v4966 = vshra.s32 %v4964, 16
        %v4967 = vcvt.s32.f32 %v4965
        %v4968 = vcvt.s32.f32 %v4966
        %4969 = vmin.xlane.f32.xlu0 %v4968
        %v4970 = vpop.xlane.xlu0 %4969
        %vm4971 = vcmp.eq.f32.partialorder %v4968, %v4970
        %v4972 = vsel %vm4971, %v4967, inf
        %4973 = vmin.xlane.f32.xlu0 %v4972
        %v4974 = vpop.xlane.xlu0 %4973
        %v4975 = vcvt.f32.s32 %v4974
        %v4976 = vcvt.f32.s32 %v4970
        %v4977 = vshll.u32 %v4976, 16
        %v4978 = vadd.s32 %v4977, %v4975
        %v4979 = vmax.f32 %v4833, %v4835
        %4980 = vmax.xlane.f32.xlu0 %v4979
        %v4981 = vpop.xlane.xlu0 %4980
        %v4982 = vmax.f32 %v4837, %v4839
        %4983 = vmax.xlane.f32.xlu0 %v4982
        %v4984 = vpop.xlane.xlu0 %4983
        %vm4985 = vcmp.ge.f32.partialorder %v4833, %v4981
        %vm4986 = vcmp.ge.f32.partialorder %v4835, %v4981
        %vm4987 = vcmp.ge.f32.partialorder %v4837, %v4984
        %vm4988 = vcmp.ge.f32.partialorder %v4839, %v4984
        %v4989 = vsel %vm4985, %v4891, 256
        %v4990 = vsel %vm4986, %v4892, 256
        %v4991 = vsel %vm4987, %v4891, 256
        %v4992 = vsel %vm4988, %v4892, 256
        %vm4993 = vcmp.lt.s32.totalorder %v4989, %v4990
        %v4994 = vsel %vm4993, %v4989, %v4990
        %v4995 = vand.u32 %v4994, 65535
        %v4996 = vshra.s32 %v4994, 16
        %v4997 = vcvt.s32.f32 %v4995
        %v4998 = vcvt.s32.f32 %v4996
        %4999 = vmin.xlane.f32.xlu0 %v4998
        %v5000 = vpop.xlane.xlu0 %4999
        %vm5001 = vcmp.eq.f32.partialorder %v4998, %v5000
        %v5002 = vsel %vm5001, %v4997, inf
        %5003 = vmin.xlane.f32.xlu0 %v5002
        %v5004 = vpop.xlane.xlu0 %5003
        %v5005 = vcvt.f32.s32 %v5004
        %v5006 = vcvt.f32.s32 %v5000
        %v5007 = vshll.u32 %v5006, 16
        %v5008 = vadd.s32 %v5007, %v5005
        %vm5009 = vcmp.lt.s32.totalorder %v4991, %v4992
        %v5010 = vsel %vm5009, %v4991, %v4992
        %v5011 = vand.u32 %v5010, 65535
        %v5012 = vshra.s32 %v5010, 16
        %v5013 = vcvt.s32.f32 %v5011
        %v5014 = vcvt.s32.f32 %v5012
        %5015 = vmin.xlane.f32.xlu0 %v5014
        %v5016 = vpop.xlane.xlu0 %5015
        %vm5017 = vcmp.eq.f32.partialorder %v5014, %v5016
        %v5018 = vsel %vm5017, %v5013, inf
        %5019 = vmin.xlane.f32.xlu0 %v5018
        %v5020 = vpop.xlane.xlu0 %5019
        %v5021 = vcvt.f32.s32 %v5020
        %v5022 = vcvt.f32.s32 %v5016
        %v5023 = vshll.u32 %v5022, 16
        %v5024 = vadd.s32 %v5023, %v5021
        %v5025 = vmax.f32 %v4876, %v4878
        %5026 = vmax.xlane.f32.xlu0 %v5025
        %v5027 = vpop.xlane.xlu0 %5026
        %v5028 = vmax.f32 %v4880, %v4882
        %5029 = vmax.xlane.f32.xlu0 %v5028
        %v5030 = vpop.xlane.xlu0 %5029
        %vm5031 = vcmp.ge.f32.partialorder %v4876, %v5027
        %vm5032 = vcmp.ge.f32.partialorder %v4878, %v5027
        %vm5033 = vcmp.ge.f32.partialorder %v4880, %v5030
        %vm5034 = vcmp.ge.f32.partialorder %v4882, %v5030
        %v5035 = vsel %vm5031, %v4891, 256
        %v5036 = vsel %vm5032, %v4892, 256
        %v5037 = vsel %vm5033, %v4891, 256
        %v5038 = vsel %vm5034, %v4892, 256
        %vm5039 = vcmp.lt.s32.totalorder %v5035, %v5036
        %v5040 = vsel %vm5039, %v5035, %v5036
        %v5041 = vand.u32 %v5040, 65535
        %v5042 = vshra.s32 %v5040, 16
        %v5043 = vcvt.s32.f32 %v5041
        %v5044 = vcvt.s32.f32 %v5042
        %5045 = vmin.xlane.f32.xlu0 %v5044
        %v5046 = vpop.xlane.xlu0 %5045
        %vm5047 = vcmp.eq.f32.partialorder %v5044, %v5046
        %v5048 = vsel %vm5047, %v5043, inf
        %5049 = vmin.xlane.f32.xlu0 %v5048
        %v5050 = vpop.xlane.xlu0 %5049
        %v5051 = vcvt.f32.s32 %v5050
        %v5052 = vcvt.f32.s32 %v5046
        %v5053 = vshll.u32 %v5052, 16
        %v5054 = vadd.s32 %v5053, %v5051
        %vm5055 = vcmp.lt.s32.totalorder %v5037, %v5038
        %v5056 = vsel %vm5055, %v5037, %v5038
        %v5057 = vand.u32 %v5056, 65535
        %v5058 = vshra.s32 %v5056, 16
        %v5059 = vcvt.s32.f32 %v5057
        %v5060 = vcvt.s32.f32 %v5058
        %5061 = vmin.xlane.f32.xlu0 %v5060
        %v5062 = vpop.xlane.xlu0 %5061
        %vm5063 = vcmp.eq.f32.partialorder %v5060, %v5062
        %v5064 = vsel %vm5063, %v5059, inf
        %5065 = vmin.xlane.f32.xlu0 %v5064
        %v5066 = vpop.xlane.xlu0 %5065
        %v5067 = vcvt.f32.s32 %v5066
        %v5068 = vcvt.f32.s32 %v5062
        %v5069 = vshll.u32 %v5068, 16
        %v5070 = vadd.s32 %v5069, %v5067
        %vm5071 = vcmask 7168
        %v5072 = vsel %vm5071, %v4916, %v4962
        %v5073 = vsel %vm5071, %v4932, %v4978
        %vm5074 = vcmask 15360
        %v5075 = vsel %vm5074, %v5072, %v5008
        %v5076 = vsel %vm5074, %v5073, %v5024
        %vm5077 = vcmask 23552
        %v5078 = vsel %vm5077, %v5075, %v5054
        %v5079 = vsel %vm5077, %v5076, %v5070
        %vm5080 = vcmask 31744
        %5081 = vst.msk [vmem:[%s14] sm:$0xff] %vm5080, %v5078
        %5082 = vst.msk [vmem:[%s14 + $0x8] sm:$0xff] %vm5080, %v5079
      $region84: #{mini_vampnet_forward.1} parent=75 // pred_fallthru
        _
      // Predicated region
      $region85: #{mini_vampnet_forward.1} parent=75 // pred_check
        %p5083 = pneg %p382
      $region86: #{mini_vampnet_forward.1} parent=75 // pred_check_branch
        %5085 = sbr.rel (%p5083) target = $region88
      $region87: #{mini_vampnet_forward.1} parent=75 // pred_region
        _
      $region88: #{mini_vampnet_forward.1} parent=75 // pred_fallthru
        _
      // Predicated region
      $region89: #{mini_vampnet_forward.1} parent=75 // pred_check
        %p5086 = pneg %p382
      $region90: #{mini_vampnet_forward.1} parent=75 // pred_check_branch
        %5088 = sbr.rel (%p5086) target = $region92
      $region91: #{mini_vampnet_forward.1} parent=75 // pred_region
        _
      $region92: #{mini_vampnet_forward.1} parent=75 // pred_fallthru
        _
    $region76: #{mini_vampnet_forward.1} parent=5 // pred_fallthru
      _
    %p5089 = scmp.le.s32.totalorder 2, %s20
    // Predicated region
    $region93: #{mini_vampnet_forward.1} parent=5 // pred_check
      %p5090 = pneg %p5089
    $region94: #{mini_vampnet_forward.1} parent=5 // pred_check_branch
      %5092 = sbr.rel (%p5090) target = $region96
    $region95: #{mini_vampnet_forward.1} parent=5 // pred_region
      %s5093 = ssub.s32 %s20, 2
    $region96: #{mini_vampnet_forward.1} parent=5 // pred_fallthru
      _
  $region6: #{mini_vampnet_forward.1} parent=0 // loop_footer
    %s24 = sadd.s32 1, %s20
  $region7: #{mini_vampnet_forward.1} parent=0 // loop_footer_branch
    %19 = sbr.rel target = $region3
  $region8: #{mini_vampnet_forward.1} parent=0 // loop_exit
    _

</llo_original>
